<compile_context>
chip_gen: v5e
topology: v5e:2x2
jax: 0.10.0
libtpu: 0.0.40
codegen_flags: <defaults>
</compile_context>

<pallas_src>
import functools

import jax
import jax.numpy as jnp
from jax.experimental import pallas as pl
from jax.experimental.pallas import tpu as pltpu

EXPANSION = 4
BN_EPS = 1e-5
LANE = 128                      # channel dims padded to this (lane-dense tiles)
COMPUTE_DTYPE = jnp.bfloat16    # MXU-native operand dtype (f32 accumulation)
VMEM_LIMIT = 48 * 1024 * 1024   # keep headroom on v7x (64 MiB physical VMEM)


# ------------------------------ small helpers ------------------------------ #
def _round_up(n, m):
    return -(-n // m) * m


def _cdiv(a, b):
    return -(-a // b)


def _pick_tile(dim, prefs):
    for p in prefs:
        if dim % p == 0:
            return p
    return dim


def _pad_axis(x, axis, size):
    pad = size - x.shape[axis]
    if pad <= 0:
        return x
    widths = [(0, 0)] * x.ndim
    widths[axis] = (0, pad)
    return jnp.pad(x, widths)


def _pad_last(x, size):
    return _pad_axis(x, x.ndim - 1, size)


def _fold_bn(gamma, beta, mean, var):
    scale = gamma / jnp.sqrt(var + BN_EPS)
    bias = beta - mean * scale
    return scale, bias


# ----------------------------- Pallas kernels ------------------------------ #
def _mm_bias_kernel(x_ref, w_ref, b_ref, o_ref, acc_ref, *, relu):
    """Tiled (M,K)@(K,N) with K-grid accumulation, fused bias (+ ReLU).

    NOTE: o_ref is only written on the last K step, so the K axis MUST stay
    the innermost grid axis and be marked "arbitrary".
    """
    @pl.when(pl.program_id(2) == 0)
    def _():
        acc_ref[...] = jnp.zeros_like(acc_ref)

    acc_ref[...] += jnp.dot(x_ref[...].astype(w_ref.dtype), w_ref[...],
                            preferred_element_type=jnp.float32)

    @pl.when(pl.program_id(2) == pl.num_programs(2) - 1)
    def _():
        y = acc_ref[...] + b_ref[...]
        if relu:
            y = jnp.maximum(y, 0.0)
        o_ref[...] = y.astype(o_ref.dtype)


def _conv3x3_kernel(x_ref, w_ref, b_ref, o_ref, acc_ref,
                    *, stride, th, wqp, wo, nacc):
    """3x3 conv (pad=1, stride in {1,2}) as a 9-tap matmul reduction.

    x_ref : (1, s*s, Hq, Wqp, C)  stride-phase quadrants of the padded input.
    w_ref : (9, C, tn)            BN-folded weights, tap index = kh*3 + kw.
    b_ref : (1, tn) f32.
    o_ref : (1, th, Wo, tn)       output row-block.
    acc_ref: (nacc, th*Wqp, tn)   f32 VMEM accumulators, one per column phase.

    Every tap is a leading-axis slice of x_ref (no sublane-misaligned slicing);
    column shifts are applied once at the end on the f32 accumulators.
    """
    row0 = pl.program_id(1) * th
    c = x_ref.shape[-1]
    tn = o_ref.shape[-1]

    written = [False] * nacc
    for dy in range(3):
        qy, ry = dy % stride, dy // stride
        for dx in range(3):
            qx, rx = dx % stride, dx // stride
            q = qy * stride + qx
            xs = x_ref[0, q, pl.ds(row0 + ry, th), :, :]          # (th, Wqp, C)
            p = jnp.dot(xs.reshape(th * wqp, c), w_ref[dy * 3 + dx],
                        preferred_element_type=jnp.float32)
            if written[rx]:
                acc_ref[rx] += p
            else:
                acc_ref[rx] = p
                written[rx] = True

    # Combine the column phases: out[h, w] = sum_rx acc_rx[h, w + rx].
    y = acc_ref[0].reshape(th, wqp, tn)[:, :wo, :]
    for rx in range(1, nacc):
        y = y + acc_ref[rx].reshape(th, wqp, tn)[:, rx:rx + wo, :]
    y = jnp.maximum(y + b_ref[...], 0.0)
    o_ref[...] = y[None].astype(o_ref.dtype)


def _tail_proj_kernel(a_ref, w3_ref, xs_ref, ws_ref, b_ref, o_ref):
    """conv3 + bias + projection-shortcut matmul + add + ReLU (fused)."""
    acc = jnp.dot(a_ref[...], w3_ref[...], preferred_element_type=jnp.float32)
    acc += jnp.dot(xs_ref[...].astype(ws_ref.dtype), ws_ref[...],
                   preferred_element_type=jnp.float32)
    o_ref[...] = jnp.maximum(acc + b_ref[...], 0.0).astype(o_ref.dtype)


def _tail_identity_kernel(a_ref, w3_ref, r_ref, b_ref, o_ref):
    """conv3 + bias + identity residual add (f32) + ReLU (fused)."""
    acc = jnp.dot(a_ref[...], w3_ref[...], preferred_element_type=jnp.float32)
    acc += r_ref[...].astype(jnp.float32)
    o_ref[...] = jnp.maximum(acc + b_ref[...], 0.0).astype(o_ref.dtype)


# ----------------------------- kernel wrappers ------------------------------ #
def matmul_bias(x, w, bias, *, relu, out_dtype):
    """act(x @ w + bias); x:(M,K) f32/bf16, w:(K,N) bf16, bias:(1,N) f32."""
    m, k = x.shape
    n = w.shape[1]
    if m <= 512:
        tm, gm = m, 1                      # one ragged-free block
    else:
        tm, gm = 512, _cdiv(m, 512)        # ragged last block handled by Pallas
    tn = _pick_tile(n, (256, 128))
    tk = _pick_tile(k, (512, 256, 128))
    grid = (gm, n // tn, k // tk)
    return pl.pallas_call(
        functools.partial(_mm_bias_kernel, relu=relu),
        out_shape=jax.ShapeDtypeStruct((m, n), out_dtype),
        grid_spec=pltpu.PrefetchScalarGridSpec(
            num_scalar_prefetch=0,
            grid=grid,
            in_specs=[
                pl.BlockSpec((tm, tk), lambda i, j, kk: (i, kk)),
                pl.BlockSpec((tk, tn), lambda i, j, kk: (kk, j)),
                pl.BlockSpec((1, tn), lambda i, j, kk: (0, j)),
            ],
            out_specs=pl.BlockSpec((tm, tn), lambda i, j, kk: (i, j)),
            scratch_shapes=[pltpu.VMEM((tm, tn), jnp.float32)],
        ),
        compiler_params=pltpu.CompilerParams(
            dimension_semantics=("parallel", "parallel", "arbitrary"),
            vmem_limit_bytes=VMEM_LIMIT,
        ),
    )(x, w, bias)


def conv3x3_bias_relu(x, w9, bias, *, stride, out_dtype):
    """3x3 conv, padding=1, stride in {1,2}, fused BN-bias + ReLU.

    x   : (N, H, W, C) bf16 activation, C % 128 == 0.
    w9  : (9, C, Cout) bf16 BN-folded weights, tap index = kh*3 + kw.
    bias: (1, Cout) f32.
    """
    n, h, w, c = x.shape
    cout = w9.shape[-1]
    s = stride
    ho = (h - 1) // s + 1
    wo = (w - 1) // s + 1

    # Spatial halo pad (and make the padded dims divisible by the stride).
    hp = _round_up(h + 2, s)
    wp = _round_up(w + 2, s)
    xp = jnp.pad(x, ((0, 0), (1, hp - h - 1), (1, wp - w - 1), (0, 0)))
    hq, wq = hp // s, wp // s
    # Split into s*s stride-phase quadrants so every in-kernel tap is a
    # stride-1, leading-axis slice (single XLA pass; replaces the im2col path).
    xq = xp.reshape(n, hq, s, wq, s, c).transpose(0, 2, 4, 1, 3, 5)
    wqp = _round_up(wq, 8)                 # sublane alignment -> free reshapes
    xq = _pad_axis(xq, 4, wqp).reshape(n, s * s, hq, wqp, c)

    tn = _pick_tile(cout, (256, 128))
    th = _pick_tile(ho, (8, 16, 4, 7, 2, 1))     # output rows per block
    nacc = _cdiv(3, s)                            # distinct column phases
    grid = (n, ho // th, cout // tn)

    kernel = functools.partial(_conv3x3_kernel, stride=s, th=th, wqp=wqp,
                               wo=wo, nacc=nacc)
    return pl.pallas_call(
        kernel,
        out_shape=jax.ShapeDtypeStruct((n, ho, wo, cout), out_dtype),
        grid_spec=pltpu.PrefetchScalarGridSpec(
            num_scalar_prefetch=0,
            grid=grid,
            in_specs=[
                pl.BlockSpec((1, s * s, hq, wqp, c),
                             lambda b, r, j: (b, 0, 0, 0, 0)),
                pl.BlockSpec((9, c, tn), lambda b, r, j: (0, 0, j)),
                pl.BlockSpec((1, tn), lambda b, r, j: (0, j)),
            ],
            out_specs=pl.BlockSpec((1, th, wo, tn),
                                   lambda b, r, j: (b, r, 0, j)),
            scratch_shapes=[pltpu.VMEM((nacc, th * wqp, tn), jnp.float32)],
        ),
        compiler_params=pltpu.CompilerParams(
            dimension_semantics=("parallel", "parallel", "parallel"),
            vmem_limit_bytes=VMEM_LIMIT,
        ),
    )(xq, w9, bias)


def bottleneck_tail(a, w3, residual, ws, bias, *, out_dtype):
    """Fused conv3(1x1)+bias + shortcut(+bias) + residual add + ReLU.

    ws is None  -> identity shortcut: `residual` (M, N) f32 added directly.
    ws not None -> projection shortcut: `residual @ ws` computed in-kernel.
    """
    m, k3 = a.shape
    n = w3.shape[1]
    kr = residual.shape[1]
    tn = _pick_tile(n, (256, 128))
    tm_cap = max(8, (128 * 1024) // (tn * 4))   # keep live f32 acc <= ~128 KB
    if m <= tm_cap:
        tm, gm = m, 1
    else:
        tm, gm = tm_cap, _cdiv(m, tm_cap)
    grid = (gm, n // tn)

    if ws is None:
        kernel = _tail_identity_kernel
        operands = (a, w3, residual, bias)
        in_specs = [
            pl.BlockSpec((tm, k3), lambda i, j: (i, 0)),
            pl.BlockSpec((k3, tn), lambda i, j: (0, j)),
            pl.BlockSpec((tm, tn), lambda i, j: (i, j)),
            pl.BlockSpec((1, tn), lambda i, j: (0, j)),
        ]
    else:
        kernel = _tail_proj_kernel
        operands = (a, w3, residual, ws, bias)
        in_specs = [
            pl.BlockSpec((tm, k3), lambda i, j: (i, 0)),
            pl.BlockSpec((k3, tn), lambda i, j: (0, j)),
            pl.BlockSpec((tm, kr), lambda i, j: (i, 0)),
            pl.BlockSpec((kr, tn), lambda i, j: (0, j)),
            pl.BlockSpec((1, tn), lambda i, j: (0, j)),
        ]

    return pl.pallas_call(
        kernel,
        out_shape=jax.ShapeDtypeStruct((m, n), out_dtype),
        grid_spec=pltpu.PrefetchScalarGridSpec(
            num_scalar_prefetch=0,
            grid=grid,
            in_specs=in_specs,
            out_specs=pl.BlockSpec((tm, tn), lambda i, j: (i, j)),
        ),
        compiler_params=pltpu.CompilerParams(
            dimension_semantics=("parallel", "parallel"),
            vmem_limit_bytes=VMEM_LIMIT,
        ),
    )(*operands)


# ------------------------------- JAX glue ---------------------------------- #
def bottleneck_forward(x_nchw, params, stride):
    """Pallas Bottleneck forward (eval-mode BN).  NCHW in / NCHW out (f32)."""
    n, cin, h, w = x_nchw.shape
    planes = params['w1'].shape[0]
    cout = EXPANSION * planes
    has_proj = 'ws' in params
    if not has_proj:
        # Identity shortcut is only valid when shapes match (as in PyTorch).
        assert stride == 1 and cin == cout, (cin, cout, stride)

    cin_p = _round_up(cin, LANE)
    pln_p = _round_up(planes, LANE)
    co_p = _round_up(cout, LANE)

    s1, b1 = _fold_bn(*params['bn1'])
    s2, b2 = _fold_bn(*params['bn2'])
    s3, b3 = _fold_bn(*params['bn3'])

    # input: NCHW -> NHWC, lane-padded channels, kept in f32 (residual uses it
    # at full precision; conv kernels cast to bf16 on the fly).
    xp = jnp.transpose(x_nchw, (0, 2, 3, 1))
    xp = _pad_last(xp, cin_p)                                 # (N,H,W,cin_p) f32

    # conv1 (1x1) + bn1 + relu : tiled matmul, BN scale folded into weights
    w1 = params['w1'][:, :, 0, 0].T * s1[None, :]             # (cin, planes)
    w1 = _pad_axis(_pad_axis(w1, 0, cin_p), 1, pln_p).astype(COMPUTE_DTYPE)
    b1p = _pad_last(b1, pln_p).reshape(1, pln_p).astype(jnp.float32)
    out1 = matmul_bias(xp.reshape(n * h * w, cin_p), w1, b1p,
                       relu=True, out_dtype=COMPUTE_DTYPE)
    out1 = out1.reshape(n, h, w, pln_p)

    # conv2 (3x3, pad=1, stride) + bn2 + relu : in-kernel 9-tap reduction
    w2 = jnp.transpose(params['w2'], (2, 3, 1, 0)) * s2[None, None, None, :]
    w2 = w2.reshape(9, planes, planes)
    w2 = _pad_axis(_pad_axis(w2, 1, pln_p), 2, pln_p).astype(COMPUTE_DTYPE)
    b2p = _pad_last(b2, pln_p).reshape(1, pln_p).astype(jnp.float32)
    out2 = conv3x3_bias_relu(out1, w2, b2p, stride=stride,
                             out_dtype=COMPUTE_DTYPE)
    ho, wo = out2.shape[1], out2.shape[2]

    # conv3 (1x1) + bn3 + shortcut + residual add + relu : fused tail
    w3 = params['w3'][:, :, 0, 0].T * s3[None, :]             # (planes, cout)
    w3 = _pad_axis(_pad_axis(w3, 0, pln_p), 1, co_p).astype(COMPUTE_DTYPE)
    bias_tail = _pad_last(b3, co_p)

    a = out2.reshape(n * ho * wo, pln_p)
    if has_proj:
        ss, bs = _fold_bn(*params['bns'])
        ws = params['ws'][:, :, 0, 0].T * ss[None, :]         # (cin, cout)
        ws = _pad_axis(_pad_axis(ws, 0, cin_p), 1, co_p).astype(COMPUTE_DTYPE)
        bias_tail = bias_tail + _pad_last(bs, co_p)
        residual = xp[:, ::stride, ::stride, :].reshape(n * ho * wo, cin_p)
    else:
        ws = None
        residual = xp.reshape(n * h * w, cin_p)               # cin_p == co_p

    bias_tail = bias_tail.reshape(1, co_p).astype(jnp.float32)
    out = bottleneck_tail(a, w3, residual, ws, bias_tail, out_dtype=jnp.float32)

    out = out[:, :cout].reshape(n, ho, wo, cout)
    return jnp.transpose(out, (0, 3, 1, 2))                   # back to NCHW


# --------------------------- parameters & reference ------------------------ #
def init_params(key, in_planes, planes, stride=1):
    cout = EXPANSION * planes
    ks = jax.random.split(key, 8)

    def bn_params(k, c):
        k1, k2, k3, k4 = jax.random.split(k, 4)
        gamma = 1.0 + 0.1 * jax.random.normal(k1, (c,), jnp.float32)
        beta = 0.1 * jax.random.normal(k2, (c,), jnp.float32)
        mean = 0.1 * jax.random.normal(k3, (c,), jnp.float32)
        var = 1.0 + jnp.abs(0.1 * jax.random.normal(k4, (c,), jnp.float32))
        return (gamma, beta, mean, var)

    params = {
        'w1': 0.1 * jax.random.normal(ks[0], (planes, in_planes, 1, 1), jnp.float32),
        'w2': 0.1 * jax.random.normal(ks[1], (planes, planes, 3, 3), jnp.float32),
        'w3': 0.1 * jax.random.normal(ks[2], (cout, planes, 1, 1), jnp.float32),
        'bn1': bn_params(ks[4], planes),
        'bn2': bn_params(ks[5], planes),
        'bn3': bn_params(ks[6], cout),
    }
    if stride != 1 or in_planes != cout:
        params['ws'] = 0.1 * jax.random.normal(
            ks[3], (cout, in_planes, 1, 1), jnp.float32)
        params['bns'] = bn_params(ks[7], cout)
    return params


def reference_forward(x_nchw, params, stride):
    """Pure-JAX (lax.conv) reference matching PyTorch eval-mode semantics."""
    def conv(x, w, s=1, p=0):
        return jax.lax.conv_general_dilated(
            x, w, (s, s), [(p, p), (p, p)],
            dimension_numbers=('NCHW', 'OIHW', 'NCHW'))

    def bn(x, g, b, m, v):
        g, b, m, v = (t[None, :, None, None] for t in (g, b, m, v))
        return (x - m) / jnp.sqrt(v + BN_EPS) * g + b

    out = jax.nn.relu(bn(conv(x_nchw, params['w1']), *params['bn1']))
    out = jax.nn.relu(bn(conv(out, params['w2'], s=stride, p=1), *params['bn2']))
    out = bn(conv(out, params['w3']), *params['bn3'])
    if 'ws' in params:
        sc = bn(conv(x_nchw, params['ws'], s=stride), *params['bns'])
    else:
        sc = x_nchw
    return jax.nn.relu(out + sc)


# ---------------------------------- main ------------------------------------ #
if __name__ == "__main__":
    key = jax.random.PRNGKey(0)
    fwd = jax.jit(bottleneck_forward, static_argnums=2)

    configs = [
        (4, 4, 1),    # projection shortcut (in_planes != expansion*planes)
        (16, 4, 1),   # identity shortcut
        (4, 4, 2),    # strided projection (in-kernel stride-2 conv path)
    ]

    for idx, (in_planes, planes, stride) in enumerate(configs):
        k_x, k_p = jax.random.split(jax.random.fold_in(key, idx))
        x = jax.random.normal(k_x, (2, in_planes, 16, 16), jnp.float32)  # NCHW
        params = init_params(k_p, in_planes, planes, stride)

        out = jax.block_until_ready(fwd(x, params, stride))
        ref = jax.block_until_ready(reference_forward(x, params, stride))

        assert out.shape == ref.shape, (out.shape, ref.shape)
        # bf16 operands with f32 accumulation -> relaxed tolerance vs f32 ref.
        max_err = float(jnp.max(jnp.abs(out - ref)))
        assert jnp.allclose(out, ref, atol=3e-2, rtol=3e-2), (idx, max_err)

    print("KERNEL_OK")
</pallas_src>

<mosaic_0001>
module attributes {stable_mosaic.version = 11 : i64} {
  func.func @_mm_bias_kernel(%arg0: i32, %arg1: i32, %arg2: i32, %arg3: memref<512x128xf32, #tpu.memory_space<vmem>>, %arg4: memref<128x128xbf16, #tpu.memory_space<vmem>>, %arg5: memref<1x128xf32, #tpu.memory_space<vmem>>, %arg6: memref<512x128xbf16, #tpu.memory_space<vmem>>, %arg7: memref<512x128xf32, #tpu.memory_space<vmem>>) attributes {dimension_semantics = [#tpu.dimension_semantics<parallel>, #tpu.dimension_semantics<parallel>, #tpu.dimension_semantics<arbitrary>], iteration_bounds = array<i64: 1, 1, 1>, scalar_prefetch = 0 : i64, scratch_operands = 1 : i64, tpu.core_type = #tpu.core_type<tc>, window_params = [{transform_indices = @transform_0, window_bounds = array<i64: 512, 128>}, {transform_indices = @transform_1, window_bounds = array<i64: 128, 128>}, {transform_indices = @transform_2, window_bounds = array<i64: 1, 128>}, {transform_indices = @transform_3, window_bounds = array<i64: 512, 128>}]} {
    %c0_i32 = arith.constant 0 : i32
    %0 = arith.cmpi eq, %arg2, %c0_i32 : i32
    %1 = arith.extui %0 : i1 to i32
    %c0_i32_0 = arith.constant 0 : i32
    %2 = arith.cmpi ne, %1, %c0_i32_0 : i32
    scf.if %2 {
      %cst_10 = arith.constant 0.000000e+00 : f32
      %13 = vector.broadcast %cst_10 : f32 to vector<512x128xf32>
      %c0_11 = arith.constant 0 : index
      %c0_12 = arith.constant 0 : index
      %14 = vector.load %arg7[%c0_11, %c0_12] : memref<512x128xf32, #tpu.memory_space<vmem>>, vector<512x128xf32>
      tpu.vector_store %arg7[%c0_11, %c0_12], %13 {strides = array<i32>} : memref<512x128xf32, #tpu.memory_space<vmem>>, vector<512x128xf32>,
    } else {
    }
    %c0 = arith.constant 0 : index
    %c0_1 = arith.constant 0 : index
    %3 = vector.load %arg7[%c0, %c0_1] : memref<512x128xf32, #tpu.memory_space<vmem>>, vector<512x128xf32>
    %c0_2 = arith.constant 0 : index
    %c0_3 = arith.constant 0 : index
    %4 = vector.load %arg3[%c0_2, %c0_3] : memref<512x128xf32, #tpu.memory_space<vmem>>, vector<512x128xf32>
    %5 = arith.truncf %4 : vector<512x128xf32> to vector<512x128xbf16>
    %c0_4 = arith.constant 0 : index
    %c0_5 = arith.constant 0 : index
    %6 = vector.load %arg4[%c0_4, %c0_5] : memref<128x128xbf16, #tpu.memory_space<vmem>>, vector<128x128xbf16>
    %cst = arith.constant dense<0.000000e+00> : vector<512x128xf32>
    %7 = tpu.matmul %5, %6, %cst {dimension_numbers = #tpu.dot_dimension_numbers<[1], [0], [0], [1], [0, 0, 1, 1], [], []>} : vector<512x128xbf16>, vector<128x128xbf16>, vector<512x128xf32> -> vector<512x128xf32>
    %8 = arith.addf %3, %7 : vector<512x128xf32>
    %c0_6 = arith.constant 0 : index
    %c0_7 = arith.constant 0 : index
    %9 = vector.load %arg7[%c0_6, %c0_7] : memref<512x128xf32, #tpu.memory_space<vmem>>, vector<512x128xf32>
    tpu.vector_store %arg7[%c0_6, %c0_7], %8 {strides = array<i32>} : memref<512x128xf32, #tpu.memory_space<vmem>>, vector<512x128xf32>,
    %c0_i32_8 = arith.constant 0 : i32
    %10 = arith.cmpi eq, %arg2, %c0_i32_8 : i32
    %11 = arith.extui %10 : i1 to i32
    %c0_i32_9 = arith.constant 0 : i32
    %12 = arith.cmpi ne, %11, %c0_i32_9 : i32
    scf.if %12 {
      %c0_10 = arith.constant 0 : index
      %c0_11 = arith.constant 0 : index
      %13 = vector.load %arg7[%c0_10, %c0_11] : memref<512x128xf32, #tpu.memory_space<vmem>>, vector<512x128xf32>
      %c0_12 = arith.constant 0 : index
      %c0_13 = arith.constant 0 : index
      %14 = vector.load %arg5[%c0_12, %c0_13] : memref<1x128xf32, #tpu.memory_space<vmem>>, vector<1x128xf32>
      %15 = vector.broadcast %14 : vector<1x128xf32> to vector<512x128xf32>
      %16 = arith.addf %13, %15 : vector<512x128xf32>
      %cst_14 = arith.constant 0.000000e+00 : f32
      %17 = vector.broadcast %cst_14 : f32 to vector<512x128xf32>
      %18 = arith.maximumf %16, %17 : vector<512x128xf32>
      %19 = arith.truncf %18 : vector<512x128xf32> to vector<512x128xbf16>
      %c0_15 = arith.constant 0 : index
      %c0_16 = arith.constant 0 : index
      %20 = vector.load %arg6[%c0_15, %c0_16] : memref<512x128xbf16, #tpu.memory_space<vmem>>, vector<512x128xbf16>
      tpu.vector_store %arg6[%c0_15, %c0_16], %19 {strides = array<i32>} : memref<512x128xbf16, #tpu.memory_space<vmem>>, vector<512x128xbf16>,
    } else {
    }
    return
  }
  func.func @transform_0(%arg0: i32, %arg1: i32, %arg2: i32) -> (i32, i32) {
    %c0_i32 = arith.constant 0 : i32
    return %arg0, %arg2 : i32, i32
  }
  func.func @transform_1(%arg0: i32, %arg1: i32, %arg2: i32) -> (i32, i32) {
    %c0_i32 = arith.constant 0 : i32
    return %arg2, %arg1 : i32, i32
  }
  func.func @transform_2(%arg0: i32, %arg1: i32, %arg2: i32) -> (i32, i32) {
    %c0_i32 = arith.constant 0 : i32
    %c0_i32_0 = arith.constant 0 : i32
    return %c0_i32, %arg1 : i32, i32
  }
  func.func @transform_3(%arg0: i32, %arg1: i32, %arg2: i32) -> (i32, i32) {
    %c0_i32 = arith.constant 0 : i32
    return %arg0, %arg1 : i32, i32
  }
}

module attributes {stable_mosaic.version = 11 : i64} {
  func.func @_conv3x3_kernel(%arg0: i32, %arg1: i32, %arg2: i32, %arg3: memref<1x1x18x24x128xbf16, #tpu.memory_space<vmem>>, %arg4: memref<9x128x128xbf16, #tpu.memory_space<vmem>>, %arg5: memref<1x128xf32, #tpu.memory_space<vmem>>, %arg6: memref<1x8x16x128xbf16, #tpu.memory_space<vmem>>, %arg7: memref<3x192x128xf32, #tpu.memory_space<vmem>>) attributes {dimension_semantics = [#tpu.dimension_semantics<parallel>, #tpu.dimension_semantics<parallel>, #tpu.dimension_semantics<parallel>], iteration_bounds = array<i64: 2, 2, 1>, scalar_prefetch = 0 : i64, scratch_operands = 1 : i64, tpu.core_type = #tpu.core_type<tc>, window_params = [{transform_indices = @transform_0, window_bounds = array<i64: 1, 1, 18, 24, 128>}, {transform_indices = @transform_1, window_bounds = array<i64: 9, 128, 128>}, {transform_indices = @transform_2, window_bounds = array<i64: 1, 128>}, {transform_indices = @transform_3, window_bounds = array<i64: 1, 8, 16, 128>}]} {
    %c8_i32 = arith.constant 8 : i32
    %0 = arith.muli %arg1, %c8_i32 : i32
    %c0_i32 = arith.constant 0 : i32
    %1 = arith.addi %0, %c0_i32 : i32
    %c0 = arith.constant 0 : index
    %c0_0 = arith.constant 0 : index
    %2 = arith.index_cast %1 : i32 to index
    %c0_1 = arith.constant 0 : index
    %c0_2 = arith.constant 0 : index
    %3 = vector.load %arg3[%c0, %c0_0, %2, %c0_1, %c0_2] : memref<1x1x18x24x128xbf16, #tpu.memory_space<vmem>>, vector<1x1x8x24x128xbf16>
    %4 = vector.shape_cast %3 : vector<1x1x8x24x128xbf16> to vector<8x24x128xbf16>
    %5 = vector.shape_cast %4 : vector<8x24x128xbf16> to vector<192x128xbf16>
    %c0_3 = arith.constant 0 : index
    %c0_4 = arith.constant 0 : index
    %c0_5 = arith.constant 0 : index
    %6 = vector.load %arg4[%c0_3, %c0_4, %c0_5] : memref<9x128x128xbf16, #tpu.memory_space<vmem>>, vector<1x128x128xbf16>
    %7 = vector.shape_cast %6 : vector<1x128x128xbf16> to vector<128x128xbf16>
    %cst = arith.constant dense<0.000000e+00> : vector<192x128xf32>
    %8 = tpu.matmul %5, %7, %cst {dimension_numbers = #tpu.dot_dimension_numbers<[1], [0], [0], [1], [0, 0, 1, 1], [], []>} : vector<192x128xbf16>, vector<128x128xbf16>, vector<192x128xf32> -> vector<192x128xf32>
    %c0_6 = arith.constant 0 : index
    %c0_7 = arith.constant 0 : index
    %c0_8 = arith.constant 0 : index
    %9 = vector.load %arg7[%c0_6, %c0_7, %c0_8] : memref<3x192x128xf32, #tpu.memory_space<vmem>>, vector<1x192x128xf32>
    %10 = vector.shape_cast %9 : vector<1x192x128xf32> to vector<192x128xf32>
    %11 = vector.shape_cast %8 : vector<192x128xf32> to vector<1x192x128xf32>
    tpu.vector_store %arg7[%c0_6, %c0_7, %c0_8], %11 {strides = array<i32>} : memref<3x192x128xf32, #tpu.memory_space<vmem>>, vector<1x192x128xf32>,
    %c0_i32_9 = arith.constant 0 : i32
    %12 = arith.addi %0, %c0_i32_9 : i32
    %c0_10 = arith.constant 0 : index
    %c0_11 = arith.constant 0 : index
    %13 = arith.index_cast %12 : i32 to index
    %c0_12 = arith.constant 0 : index
    %c0_13 = arith.constant 0 : index
    %14 = vector.load %arg3[%c0_10, %c0_11, %13, %c0_12, %c0_13] : memref<1x1x18x24x128xbf16, #tpu.memory_space<vmem>>, vector<1x1x8x24x128xbf16>
    %15 = vector.shape_cast %14 : vector<1x1x8x24x128xbf16> to vector<8x24x128xbf16>
    %16 = vector.shape_cast %15 : vector<8x24x128xbf16> to vector<192x128xbf16>
    %c1 = arith.constant 1 : index
    %c0_14 = arith.constant 0 : index
    %c0_15 = arith.constant 0 : index
    %17 = vector.load %arg4[%c1, %c0_14, %c0_15] : memref<9x128x128xbf16, #tpu.memory_space<vmem>>, vector<1x128x128xbf16>
    %18 = vector.shape_cast %17 : vector<1x128x128xbf16> to vector<128x128xbf16>
    %cst_16 = arith.constant dense<0.000000e+00> : vector<192x128xf32>
    %19 = tpu.matmul %16, %18, %cst_16 {dimension_numbers = #tpu.dot_dimension_numbers<[1], [0], [0], [1], [0, 0, 1, 1], [], []>} : vector<192x128xbf16>, vector<128x128xbf16>, vector<192x128xf32> -> vector<192x128xf32>
    %c1_17 = arith.constant 1 : index
    %c0_18 = arith.constant 0 : index
    %c0_19 = arith.constant 0 : index
    %20 = vector.load %arg7[%c1_17, %c0_18, %c0_19] : memref<3x192x128xf32, #tpu.memory_space<vmem>>, vector<1x192x128xf32>
    %21 = vector.shape_cast %20 : vector<1x192x128xf32> to vector<192x128xf32>
    %22 = vector.shape_cast %19 : vector<192x128xf32> to vector<1x192x128xf32>
    tpu.vector_store %arg7[%c1_17, %c0_18, %c0_19], %22 {strides = array<i32>} : memref<3x192x128xf32, #tpu.memory_space<vmem>>, vector<1x192x128xf32>,
    %c0_i32_20 = arith.constant 0 : i32
    %23 = arith.addi %0, %c0_i32_20 : i32
    %c0_21 = arith.constant 0 : index
    %c0_22 = arith.constant 0 : index
    %24 = arith.index_cast %23 : i32 to index
    %c0_23 = arith.constant 0 : index
    %c0_24 = arith.constant 0 : index
    %25 = vector.load %arg3[%c0_21, %c0_22, %24, %c0_23, %c0_24] : memref<1x1x18x24x128xbf16, #tpu.memory_space<vmem>>, vector<1x1x8x24x128xbf16>
    %26 = vector.shape_cast %25 : vector<1x1x8x24x128xbf16> to vector<8x24x128xbf16>
    %27 = vector.shape_cast %26 : vector<8x24x128xbf16> to vector<192x128xbf16>
    %c2 = arith.constant 2 : index
    %c0_25 = arith.constant 0 : index
    %c0_26 = arith.constant 0 : index
    %28 = vector.load %arg4[%c2, %c0_25, %c0_26] : memref<9x128x128xbf16, #tpu.memory_space<vmem>>, vector<1x128x128xbf16>
    %29 = vector.shape_cast %28 : vector<1x128x128xbf16> to vector<128x128xbf16>
    %cst_27 = arith.constant dense<0.000000e+00> : vector<192x128xf32>
    %30 = tpu.matmul %27, %29, %cst_27 {dimension_numbers = #tpu.dot_dimension_numbers<[1], [0], [0], [1], [0, 0, 1, 1], [], []>} : vector<192x128xbf16>, vector<128x128xbf16>, vector<192x128xf32> -> vector<192x128xf32>
    %c2_28 = arith.constant 2 : index
    %c0_29 = arith.constant 0 : index
    %c0_30 = arith.constant 0 : index
    %31 = vector.load %arg7[%c2_28, %c0_29, %c0_30] : memref<3x192x128xf32, #tpu.memory_space<vmem>>, vector<1x192x128xf32>
    %32 = vector.shape_cast %31 : vector<1x192x128xf32> to vector<192x128xf32>
    %33 = vector.shape_cast %30 : vector<192x128xf32> to vector<1x192x128xf32>
    tpu.vector_store %arg7[%c2_28, %c0_29, %c0_30], %33 {strides = array<i32>} : memref<3x192x128xf32, #tpu.memory_space<vmem>>, vector<1x192x128xf32>,
    %c1_i32 = arith.constant 1 : i32
    %34 = arith.addi %0, %c1_i32 : i32
    %c0_31 = arith.constant 0 : index
    %c0_32 = arith.constant 0 : index
    %35 = arith.index_cast %34 : i32 to index
    %c0_33 = arith.constant 0 : index
    %c0_34 = arith.constant 0 : index
    %36 = vector.load %arg3[%c0_31, %c0_32, %35, %c0_33, %c0_34] : memref<1x1x18x24x128xbf16, #tpu.memory_space<vmem>>, vector<1x1x8x24x128xbf16>
    %37 = vector.shape_cast %36 : vector<1x1x8x24x128xbf16> to vector<8x24x128xbf16>
    %38 = vector.shape_cast %37 : vector<8x24x128xbf16> to vector<192x128xbf16>
    %c3 = arith.constant 3 : index
    %c0_35 = arith.constant 0 : index
    %c0_36 = arith.constant 0 : index
    %39 = vector.load %arg4[%c3, %c0_35, %c0_36] : memref<9x128x128xbf16, #tpu.memory_space<vmem>>, vector<1x128x128xbf16>
    %40 = vector.shape_cast %39 : vector<1x128x128xbf16> to vector<128x128xbf16>
    %cst_37 = arith.constant dense<0.000000e+00> : vector<192x128xf32>
    %41 = tpu.matmul %38, %40, %cst_37 {dimension_numbers = #tpu.dot_dimension_numbers<[1], [0], [0], [1], [0, 0, 1, 1], [], []>} : vector<192x128xbf16>, vector<128x128xbf16>, vector<192x128xf32> -> vector<192x128xf32>
    %c0_38 = arith.constant 0 : index
    %c0_39 = arith.constant 0 : index
    %c0_40 = arith.constant 0 : index
    %42 = vector.load %arg7[%c0_38, %c0_39, %c0_40] : memref<3x192x128xf32, #tpu.memory_space<vmem>>, vector<1x192x128xf32>
    %43 = vector.shape_cast %42 : vector<1x192x128xf32> to vector<192x128xf32>
    %44 = arith.addf %43, %41 : vector<192x128xf32>
    %c0_41 = arith.constant 0 : index
    %c0_42 = arith.constant 0 : index
    %c0_43 = arith.constant 0 : index
    %45 = vector.load %arg7[%c0_41, %c0_42, %c0_43] : memref<3x192x128xf32, #tpu.memory_space<vmem>>, vector<1x192x128xf32>
    %46 = vector.shape_cast %45 : vector<1x192x128xf32> to vector<192x128xf32>
    %47 = vector.shape_cast %44 : vector<192x128xf32> to vector<1x192x128xf32>
    tpu.vector_store %arg7[%c0_41, %c0_42, %c0_43], %47 {strides = array<i32>} : memref<3x192x128xf32, #tpu.memory_space<vmem>>, vector<1x192x128xf32>,
    %c1_i32_44 = arith.constant 1 : i32
    %48 = arith.addi %0, %c1_i32_44 : i32
    %c0_45 = arith.constant 0 : index
    %c0_46 = arith.constant 0 : index
    %49 = arith.index_cast %48 : i32 to index
    %c0_47 = arith.constant 0 : index
    %c0_48 = arith.constant 0 : index
    %50 = vector.load %arg3[%c0_45, %c0_46, %49, %c0_47, %c0_48] : memref<1x1x18x24x128xbf16, #tpu.memory_space<vmem>>, vector<1x1x8x24x128xbf16>
    %51 = vector.shape_cast %50 : vector<1x1x8x24x128xbf16> to vector<8x24x128xbf16>
    %52 = vector.shape_cast %51 : vector<8x24x128xbf16> to vector<192x128xbf16>
    %c4 = arith.constant 4 : index
    %c0_49 = arith.constant 0 : index
    %c0_50 = arith.constant 0 : index
    %53 = vector.load %arg4[%c4, %c0_49, %c0_50] : memref<9x128x128xbf16, #tpu.memory_space<vmem>>, vector<1x128x128xbf16>
    %54 = vector.shape_cast %53 : vector<1x128x128xbf16> to vector<128x128xbf16>
    %cst_51 = arith.constant dense<0.000000e+00> : vector<192x128xf32>
    %55 = tpu.matmul %52, %54, %cst_51 {dimension_numbers = #tpu.dot_dimension_numbers<[1], [0], [0], [1], [0, 0, 1, 1], [], []>} : vector<192x128xbf16>, vector<128x128xbf16>, vector<192x128xf32> -> vector<192x128xf32>
    %c1_52 = arith.constant 1 : index
    %c0_53 = arith.constant 0 : index
    %c0_54 = arith.constant 0 : index
    %56 = vector.load %arg7[%c1_52, %c0_53, %c0_54] : memref<3x192x128xf32, #tpu.memory_space<vmem>>, vector<1x192x128xf32>
    %57 = vector.shape_cast %56 : vector<1x192x128xf32> to vector<192x128xf32>
    %58 = arith.addf %57, %55 : vector<192x128xf32>
    %c1_55 = arith.constant 1 : index
    %c0_56 = arith.constant 0 : index
    %c0_57 = arith.constant 0 : index
    %59 = vector.load %arg7[%c1_55, %c0_56, %c0_57] : memref<3x192x128xf32, #tpu.memory_space<vmem>>, vector<1x192x128xf32>
    %60 = vector.shape_cast %59 : vector<1x192x128xf32> to vector<192x128xf32>
    %61 = vector.shape_cast %58 : vector<192x128xf32> to vector<1x192x128xf32>
    tpu.vector_store %arg7[%c1_55, %c0_56, %c0_57], %61 {strides = array<i32>} : memref<3x192x128xf32, #tpu.memory_space<vmem>>, vector<1x192x128xf32>,
    %c1_i32_58 = arith.constant 1 : i32
    %62 = arith.addi %0, %c1_i32_58 : i32
    %c0_59 = arith.constant 0 : index
    %c0_60 = arith.constant 0 : index
    %63 = arith.index_cast %62 : i32 to index
    %c0_61 = arith.constant 0 : index
    %c0_62 = arith.constant 0 : index
    %64 = vector.load %arg3[%c0_59, %c0_60, %63, %c0_61, %c0_62] : memref<1x1x18x24x128xbf16, #tpu.memory_space<vmem>>, vector<1x1x8x24x128xbf16>
    %65 = vector.shape_cast %64 : vector<1x1x8x24x128xbf16> to vector<8x24x128xbf16>
    %66 = vector.shape_cast %65 : vector<8x24x128xbf16> to vector<192x128xbf16>
    %c5 = arith.constant 5 : index
    %c0_63 = arith.constant 0 : index
    %c0_64 = arith.constant 0 : index
    %67 = vector.load %arg4[%c5, %c0_63, %c0_64] : memref<9x128x128xbf16, #tpu.memory_space<vmem>>, vector<1x128x128xbf16>
    %68 = vector.shape_cast %67 : vector<1x128x128xbf16> to vector<128x128xbf16>
    %cst_65 = arith.constant dense<0.000000e+00> : vector<192x128xf32>
    %69 = tpu.matmul %66, %68, %cst_65 {dimension_numbers = #tpu.dot_dimension_numbers<[1], [0], [0], [1], [0, 0, 1, 1], [], []>} : vector<192x128xbf16>, vector<128x128xbf16>, vector<192x128xf32> -> vector<192x128xf32>
    %c2_66 = arith.constant 2 : index
    %c0_67 = arith.constant 0 : index
    %c0_68 = arith.constant 0 : index
    %70 = vector.load %arg7[%c2_66, %c0_67, %c0_68] : memref<3x192x128xf32, #tpu.memory_space<vmem>>, vector<1x192x128xf32>
    %71 = vector.shape_cast %70 : vector<1x192x128xf32> to vector<192x128xf32>
    %72 = arith.addf %71, %69 : vector<192x128xf32>
    %c2_69 = arith.constant 2 : index
    %c0_70 = arith.constant 0 : index
    %c0_71 = arith.constant 0 : index
    %73 = vector.load %arg7[%c2_69, %c0_70, %c0_71] : memref<3x192x128xf32, #tpu.memory_space<vmem>>, vector<1x192x128xf32>
    %74 = vector.shape_cast %73 : vector<1x192x128xf32> to vector<192x128xf32>
    %75 = vector.shape_cast %72 : vector<192x128xf32> to vector<1x192x128xf32>
    tpu.vector_store %arg7[%c2_69, %c0_70, %c0_71], %75 {strides = array<i32>} : memref<3x192x128xf32, #tpu.memory_space<vmem>>, vector<1x192x128xf32>,
    %c2_i32 = arith.constant 2 : i32
    %76 = arith.addi %0, %c2_i32 : i32
    %c0_72 = arith.constant 0 : index
    %c0_73 = arith.constant 0 : index
    %77 = arith.index_cast %76 : i32 to index
    %c0_74 = arith.constant 0 : index
    %c0_75 = arith.constant 0 : index
    %78 = vector.load %arg3[%c0_72, %c0_73, %77, %c0_74, %c0_75] : memref<1x1x18x24x128xbf16, #tpu.memory_space<vmem>>, vector<1x1x8x24x128xbf16>
    %79 = vector.shape_cast %78 : vector<1x1x8x24x128xbf16> to vector<8x24x128xbf16>
    %80 = vector.shape_cast %79 : vector<8x24x128xbf16> to vector<192x128xbf16>
    %c6 = arith.constant 6 : index
    %c0_76 = arith.constant 0 : index
    %c0_77 = arith.constant 0 : index
    %81 = vector.load %arg4[%c6, %c0_76, %c0_77] : memref<9x128x128xbf16, #tpu.memory_space<vmem>>, vector<1x128x128xbf16>
    %82 = vector.shape_cast %81 : vector<1x128x128xbf16> to vector<128x128xbf16>
    %cst_78 = arith.constant dense<0.000000e+00> : vector<192x128xf32>
    %83 = tpu.matmul %80, %82, %cst_78 {dimension_numbers = #tpu.dot_dimension_numbers<[1], [0], [0], [1], [0, 0, 1, 1], [], []>} : vector<192x128xbf16>, vector<128x128xbf16>, vector<192x128xf32> -> vector<192x128xf32>
    %c0_79 = arith.constant 0 : index
    %c0_80 = arith.constant 0 : index
    %c0_81 = arith.constant 0 : index
    %84 = vector.load %arg7[%c0_79, %c0_80, %c0_81] : memref<3x192x128xf32, #tpu.memory_space<vmem>>, vector<1x192x128xf32>
    %85 = vector.shape_cast %84 : vector<1x192x128xf32> to vector<192x128xf32>
    %86 = arith.addf %85, %83 : vector<192x128xf32>
    %c0_82 = arith.constant 0 : index
    %c0_83 = arith.constant 0 : index
    %c0_84 = arith.constant 0 : index
    %87 = vector.load %arg7[%c0_82, %c0_83, %c0_84] : memref<3x192x128xf32, #tpu.memory_space<vmem>>, vector<1x192x128xf32>
    %88 = vector.shape_cast %87 : vector<1x192x128xf32> to vector<192x128xf32>
    %89 = vector.shape_cast %86 : vector<192x128xf32> to vector<1x192x128xf32>
    tpu.vector_store %arg7[%c0_82, %c0_83, %c0_84], %89 {strides = array<i32>} : memref<3x192x128xf32, #tpu.memory_space<vmem>>, vector<1x192x128xf32>,
    %c2_i32_85 = arith.constant 2 : i32
    %90 = arith.addi %0, %c2_i32_85 : i32
    %c0_86 = arith.constant 0 : index
    %c0_87 = arith.constant 0 : index
    %91 = arith.index_cast %90 : i32 to index
    %c0_88 = arith.constant 0 : index
    %c0_89 = arith.constant 0 : index
    %92 = vector.load %arg3[%c0_86, %c0_87, %91, %c0_88, %c0_89] : memref<1x1x18x24x128xbf16, #tpu.memory_space<vmem>>, vector<1x1x8x24x128xbf16>
    %93 = vector.shape_cast %92 : vector<1x1x8x24x128xbf16> to vector<8x24x128xbf16>
    %94 = vector.shape_cast %93 : vector<8x24x128xbf16> to vector<192x128xbf16>
    %c7 = arith.constant 7 : index
    %c0_90 = arith.constant 0 : index
    %c0_91 = arith.constant 0 : index
    %95 = vector.load %arg4[%c7, %c0_90, %c0_91] : memref<9x128x128xbf16, #tpu.memory_space<vmem>>, vector<1x128x128xbf16>
    %96 = vector.shape_cast %95 : vector<1x128x128xbf16> to vector<128x128xbf16>
    %cst_92 = arith.constant dense<0.000000e+00> : vector<192x128xf32>
    %97 = tpu.matmul %94, %96, %cst_92 {dimension_numbers = #tpu.dot_dimension_numbers<[1], [0], [0], [1], [0, 0, 1, 1], [], []>} : vector<192x128xbf16>, vector<128x128xbf16>, vector<192x128xf32> -> vector<192x128xf32>
    %c1_93 = arith.constant 1 : index
    %c0_94 = arith.constant 0 : index
    %c0_95 = arith.constant 0 : index
    %98 = vector.load %arg7[%c1_93, %c0_94, %c0_95] : memref<3x192x128xf32, #tpu.memory_space<vmem>>, vector<1x192x128xf32>
    %99 = vector.shape_cast %98 : vector<1x192x128xf32> to vector<192x128xf32>
    %100 = arith.addf %99, %97 : vector<192x128xf32>
    %c1_96 = arith.constant 1 : index
    %c0_97 = arith.constant 0 : index
    %c0_98 = arith.constant 0 : index
    %101 = vector.load %arg7[%c1_96, %c0_97, %c0_98] : memref<3x192x128xf32, #tpu.memory_space<vmem>>, vector<1x192x128xf32>
    %102 = vector.shape_cast %101 : vector<1x192x128xf32> to vector<192x128xf32>
    %103 = vector.shape_cast %100 : vector<192x128xf32> to vector<1x192x128xf32>
    tpu.vector_store %arg7[%c1_96, %c0_97, %c0_98], %103 {strides = array<i32>} : memref<3x192x128xf32, #tpu.memory_space<vmem>>, vector<1x192x128xf32>,
    %c2_i32_99 = arith.constant 2 : i32
    %104 = arith.addi %0, %c2_i32_99 : i32
    %c0_100 = arith.constant 0 : index
    %c0_101 = arith.constant 0 : index
    %105 = arith.index_cast %104 : i32 to index
    %c0_102 = arith.constant 0 : index
    %c0_103 = arith.constant 0 : index
    %106 = vector.load %arg3[%c0_100, %c0_101, %105, %c0_102, %c0_103] : memref<1x1x18x24x128xbf16, #tpu.memory_space<vmem>>, vector<1x1x8x24x128xbf16>
    %107 = vector.shape_cast %106 : vector<1x1x8x24x128xbf16> to vector<8x24x128xbf16>
    %108 = vector.shape_cast %107 : vector<8x24x128xbf16> to vector<192x128xbf16>
    %c8 = arith.constant 8 : index
    %c0_104 = arith.constant 0 : index
    %c0_105 = arith.constant 0 : index
    %109 = vector.load %arg4[%c8, %c0_104, %c0_105] : memref<9x128x128xbf16, #tpu.memory_space<vmem>>, vector<1x128x128xbf16>
    %110 = vector.shape_cast %109 : vector<1x128x128xbf16> to vector<128x128xbf16>
    %cst_106 = arith.constant dense<0.000000e+00> : vector<192x128xf32>
    %111 = tpu.matmul %108, %110, %cst_106 {dimension_numbers = #tpu.dot_dimension_numbers<[1], [0], [0], [1], [0, 0, 1, 1], [], []>} : vector<192x128xbf16>, vector<128x128xbf16>, vector<192x128xf32> -> vector<192x128xf32>
    %c2_107 = arith.constant 2 : index
    %c0_108 = arith.constant 0 : index
    %c0_109 = arith.constant 0 : index
    %112 = vector.load %arg7[%c2_107, %c0_108, %c0_109] : memref<3x192x128xf32, #tpu.memory_space<vmem>>, vector<1x192x128xf32>
    %113 = vector.shape_cast %112 : vector<1x192x128xf32> to vector<192x128xf32>
    %114 = arith.addf %113, %111 : vector<192x128xf32>
    %c2_110 = arith.constant 2 : index
    %c0_111 = arith.constant 0 : index
    %c0_112 = arith.constant 0 : index
    %115 = vector.load %arg7[%c2_110, %c0_111, %c0_112] : memref<3x192x128xf32, #tpu.memory_space<vmem>>, vector<1x192x128xf32>
    %116 = vector.shape_cast %115 : vector<1x192x128xf32> to vector<192x128xf32>
    %117 = vector.shape_cast %114 : vector<192x128xf32> to vector<1x192x128xf32>
    tpu.vector_store %arg7[%c2_110, %c0_111, %c0_112], %117 {strides = array<i32>} : memref<3x192x128xf32, #tpu.memory_space<vmem>>, vector<1x192x128xf32>,
    %c0_113 = arith.constant 0 : index
    %c0_114 = arith.constant 0 : index
    %c0_115 = arith.constant 0 : index
    %118 = vector.load %arg7[%c0_113, %c0_114, %c0_115] : memref<3x192x128xf32, #tpu.memory_space<vmem>>, vector<1x192x128xf32>
    %119 = vector.shape_cast %118 : vector<1x192x128xf32> to vector<192x128xf32>
    %120 = vector.shape_cast %119 : vector<192x128xf32> to vector<8x24x128xf32>
    %121 = vector.extract_strided_slice %120 {offsets = [0, 0, 0], sizes = [8, 16, 128], strides = [1, 1, 1]} : vector<8x24x128xf32> to vector<8x16x128xf32>
    %c1_116 = arith.constant 1 : index
    %c0_117 = arith.constant 0 : index
    %c0_118 = arith.constant 0 : index
    %122 = vector.load %arg7[%c1_116, %c0_117, %c0_118] : memref<3x192x128xf32, #tpu.memory_space<vmem>>, vector<1x192x128xf32>
    %123 = vector.shape_cast %122 : vector<1x192x128xf32> to vector<192x128xf32>
    %124 = vector.shape_cast %123 : vector<192x128xf32> to vector<8x24x128xf32>
    %125 = vector.extract_strided_slice %124 {offsets = [0, 1, 0], sizes = [8, 16, 128], strides = [1, 1, 1]} : vector<8x24x128xf32> to vector<8x16x128xf32>
    %126 = arith.addf %121, %125 : vector<8x16x128xf32>
    %c2_119 = arith.constant 2 : index
    %c0_120 = arith.constant 0 : index
    %c0_121 = arith.constant 0 : index
    %127 = vector.load %arg7[%c2_119, %c0_120, %c0_121] : memref<3x192x128xf32, #tpu.memory_space<vmem>>, vector<1x192x128xf32>
    %128 = vector.shape_cast %127 : vector<1x192x128xf32> to vector<192x128xf32>
    %129 = vector.shape_cast %128 : vector<192x128xf32> to vector<8x24x128xf32>
    %130 = vector.extract_strided_slice %129 {offsets = [0, 2, 0], sizes = [8, 16, 128], strides = [1, 1, 1]} : vector<8x24x128xf32> to vector<8x16x128xf32>
    %131 = arith.addf %126, %130 : vector<8x16x128xf32>
    %c0_122 = arith.constant 0 : index
    %c0_123 = arith.constant 0 : index
    %132 = vector.load %arg5[%c0_122, %c0_123] : memref<1x128xf32, #tpu.memory_space<vmem>>, vector<1x128xf32>
    %133 = vector.shape_cast %132 : vector<1x128xf32> to vector<1x1x128xf32>
    %134 = vector.broadcast %133 : vector<1x1x128xf32> to vector<8x16x128xf32>
    %135 = arith.addf %131, %134 : vector<8x16x128xf32>
    %cst_124 = arith.constant 0.000000e+00 : f32
    %136 = vector.broadcast %cst_124 : f32 to vector<8x16x128xf32>
    %137 = arith.maximumf %135, %136 : vector<8x16x128xf32>
    %138 = vector.shape_cast %137 : vector<8x16x128xf32> to vector<1x8x16x128xf32>
    %139 = arith.truncf %138 : vector<1x8x16x128xf32> to vector<1x8x16x128xbf16>
    %c0_125 = arith.constant 0 : index
    %c0_126 = arith.constant 0 : index
    %c0_127 = arith.constant 0 : index
    %c0_128 = arith.constant 0 : index
    %140 = vector.load %arg6[%c0_125, %c0_126, %c0_127, %c0_128] : memref<1x8x16x128xbf16, #tpu.memory_space<vmem>>, vector<1x8x16x128xbf16>
    tpu.vector_store %arg6[%c0_125, %c0_126, %c0_127, %c0_128], %139 {strides = array<i32>} : memref<1x8x16x128xbf16, #tpu.memory_space<vmem>>, vector<1x8x16x128xbf16>,
    return
  }
  func.func @transform_0(%arg0: i32, %arg1: i32, %arg2: i32) -> (i32, i32, i32, i32, i32) {
    %c0_i32 = arith.constant 0 : i32
    %c0_i32_0 = arith.constant 0 : i32
    %c0_i32_1 = arith.constant 0 : i32
    %c0_i32_2 = arith.constant 0 : i32
    %c0_i32_3 = arith.constant 0 : i32
    return %arg0, %c0_i32, %c0_i32_0, %c0_i32_1, %c0_i32_2 : i32, i32, i32, i32, i32
  }
  func.func @transform_1(%arg0: i32, %arg1: i32, %arg2: i32) -> (i32, i32, i32) {
    %c0_i32 = arith.constant 0 : i32
    %c0_i32_0 = arith.constant 0 : i32
    %c0_i32_1 = arith.constant 0 : i32
    return %c0_i32, %c0_i32_0, %arg2 : i32, i32, i32
  }
  func.func @transform_2(%arg0: i32, %arg1: i32, %arg2: i32) -> (i32, i32) {
    %c0_i32 = arith.constant 0 : i32
    %c0_i32_0 = arith.constant 0 : i32
    return %c0_i32, %arg2 : i32, i32
  }
  func.func @transform_3(%arg0: i32, %arg1: i32, %arg2: i32) -> (i32, i32, i32, i32) {
    %c0_i32 = arith.constant 0 : i32
    %c0_i32_0 = arith.constant 0 : i32
    return %arg0, %arg1, %c0_i32, %arg2 : i32, i32, i32, i32
  }
}

module attributes {stable_mosaic.version = 11 : i64} {
  func.func @_tail_proj_kernel(%arg0: i32, %arg1: i32, %arg2: memref<256x128xbf16, #tpu.memory_space<vmem>>, %arg3: memref<128x128xbf16, #tpu.memory_space<vmem>>, %arg4: memref<256x128xf32, #tpu.memory_space<vmem>>, %arg5: memref<128x128xbf16, #tpu.memory_space<vmem>>, %arg6: memref<1x128xf32, #tpu.memory_space<vmem>>, %arg7: memref<256x128xf32, #tpu.memory_space<vmem>>) attributes {dimension_semantics = [#tpu.dimension_semantics<parallel>, #tpu.dimension_semantics<parallel>], iteration_bounds = array<i64: 2, 1>, scalar_prefetch = 0 : i64, scratch_operands = 0 : i64, tpu.core_type = #tpu.core_type<tc>, window_params = [{transform_indices = @transform_0, window_bounds = array<i64: 256, 128>}, {transform_indices = @transform_1, window_bounds = array<i64: 128, 128>}, {transform_indices = @transform_2, window_bounds = array<i64: 256, 128>}, {transform_indices = @transform_3, window_bounds = array<i64: 128, 128>}, {transform_indices = @transform_4, window_bounds = array<i64: 1, 128>}, {transform_indices = @transform_5, window_bounds = array<i64: 256, 128>}]} {
    %c0 = arith.constant 0 : index
    %c0_0 = arith.constant 0 : index
    %0 = vector.load %arg2[%c0, %c0_0] : memref<256x128xbf16, #tpu.memory_space<vmem>>, vector<256x128xbf16>
    %c0_1 = arith.constant 0 : index
    %c0_2 = arith.constant 0 : index
    %1 = vector.load %arg3[%c0_1, %c0_2] : memref<128x128xbf16, #tpu.memory_space<vmem>>, vector<128x128xbf16>
    %cst = arith.constant dense<0.000000e+00> : vector<256x128xf32>
    %2 = tpu.matmul %0, %1, %cst {dimension_numbers = #tpu.dot_dimension_numbers<[1], [0], [0], [1], [0, 0, 1, 1], [], []>} : vector<256x128xbf16>, vector<128x128xbf16>, vector<256x128xf32> -> vector<256x128xf32>
    %c0_3 = arith.constant 0 : index
    %c0_4 = arith.constant 0 : index
    %3 = vector.load %arg4[%c0_3, %c0_4] : memref<256x128xf32, #tpu.memory_space<vmem>>, vector<256x128xf32>
    %4 = arith.truncf %3 : vector<256x128xf32> to vector<256x128xbf16>
    %c0_5 = arith.constant 0 : index
    %c0_6 = arith.constant 0 : index
    %5 = vector.load %arg5[%c0_5, %c0_6] : memref<128x128xbf16, #tpu.memory_space<vmem>>, vector<128x128xbf16>
    %cst_7 = arith.constant dense<0.000000e+00> : vector<256x128xf32>
    %6 = tpu.matmul %4, %5, %cst_7 {dimension_numbers = #tpu.dot_dimension_numbers<[1], [0], [0], [1], [0, 0, 1, 1], [], []>} : vector<256x128xbf16>, vector<128x128xbf16>, vector<256x128xf32> -> vector<256x128xf32>
    %7 = arith.addf %2, %6 : vector<256x128xf32>
    %c0_8 = arith.constant 0 : index
    %c0_9 = arith.constant 0 : index
    %8 = vector.load %arg6[%c0_8, %c0_9] : memref<1x128xf32, #tpu.memory_space<vmem>>, vector<1x128xf32>
    %9 = vector.broadcast %8 : vector<1x128xf32> to vector<256x128xf32>
    %10 = arith.addf %7, %9 : vector<256x128xf32>
    %cst_10 = arith.constant 0.000000e+00 : f32
    %11 = vector.broadcast %cst_10 : f32 to vector<256x128xf32>
    %12 = arith.maximumf %10, %11 : vector<256x128xf32>
    %c0_11 = arith.constant 0 : index
    %c0_12 = arith.constant 0 : index
    %13 = vector.load %arg7[%c0_11, %c0_12] : memref<256x128xf32, #tpu.memory_space<vmem>>, vector<256x128xf32>
    tpu.vector_store %arg7[%c0_11, %c0_12], %12 {strides = array<i32>} : memref<256x128xf32, #tpu.memory_space<vmem>>, vector<256x128xf32>,
    return
  }
  func.func @transform_0(%arg0: i32, %arg1: i32) -> (i32, i32) {
    %c0_i32 = arith.constant 0 : i32
    %c0_i32_0 = arith.constant 0 : i32
    return %arg0, %c0_i32 : i32, i32
  }
  func.func @transform_1(%arg0: i32, %arg1: i32) -> (i32, i32) {
    %c0_i32 = arith.constant 0 : i32
    %c0_i32_0 = arith.constant 0 : i32
    return %c0_i32, %arg1 : i32, i32
  }
  func.func @transform_2(%arg0: i32, %arg1: i32) -> (i32, i32) {
    %c0_i32 = arith.constant 0 : i32
    %c0_i32_0 = arith.constant 0 : i32
    return %arg0, %c0_i32 : i32, i32
  }
  func.func @transform_3(%arg0: i32, %arg1: i32) -> (i32, i32) {
    %c0_i32 = arith.constant 0 : i32
    %c0_i32_0 = arith.constant 0 : i32
    return %c0_i32, %arg1 : i32, i32
  }
  func.func @transform_4(%arg0: i32, %arg1: i32) -> (i32, i32) {
    %c0_i32 = arith.constant 0 : i32
    %c0_i32_0 = arith.constant 0 : i32
    return %c0_i32, %arg1 : i32, i32
  }
  func.func @transform_5(%arg0: i32, %arg1: i32) -> (i32, i32) {
    %c0_i32 = arith.constant 0 : i32
    return %arg0, %arg1 : i32, i32
  }
}

</mosaic_0001>

<llo_original>
// kernel: bottleneck_forward.3
$region0: #{bottleneck_forward.3}
  #allocation0 [shape = 'u32[]', space=smem, size = 0x4, offset = 0x4, fixed_abs, tag = 'smem constant byte address 0x4 - core index']
  #allocation1 [shape = 'u32[72,128]{1,0:T(1,128)}', space=vmem, size = 0x9000, scoped, tag = 'internal scratch']
  #allocation2 [shape = 'f32[512,128]{1,0:T(8,128)}', space=vmem, size = 0x40000, scoped, tag = 'scratch operand']
  %s0 = inlined_call_operand.vmem [shape: f32[512,128], index: 0, kind: input, shape index: {}]
  %s1 = inlined_call_operand.vmem [shape: bf16[128,128], index: 1, kind: input, shape index: {}]
  %s2 = inlined_call_operand.vmem [shape: f32[1,128], index: 2, kind: input, shape index: {}]
  %s3 = inlined_call_operand.vmem [shape: bf16[512,128], index: 3, kind: output, shape index: {}]
  %s4 = sld [smem:[#allocation0]]
  $region30: #{bottleneck_forward.3} parent=0
    _
  %s6 = ssub.s32 1, %s4
  %s7 = scalar_select 0, %s6, %s4
  // Predicated region
  $region2: #{bottleneck_forward.3} parent=0 // pred_check
    _
  $region3: #{bottleneck_forward.3} parent=0 // pred_check_branch
    %9 = sbr.rel (0) target = $region5
  $region4: #{bottleneck_forward.3} parent=0 // pred_region
    _
  $region5: #{bottleneck_forward.3} parent=0 // pred_fallthru
    _
  // Predicated region
  $region6: #{bottleneck_forward.3} parent=0 // pred_check
    _
  $region7: #{bottleneck_forward.3} parent=0 // pred_check_branch
    %11 = sbr.rel (0) target = $region9
  $region8: #{bottleneck_forward.3} parent=0 // pred_region
    _
  $region9: #{bottleneck_forward.3} parent=0 // pred_fallthru
    _
  // Predicated region
  $region10: #{bottleneck_forward.3} parent=0 // pred_check
    _
  $region11: #{bottleneck_forward.3} parent=0 // pred_check_branch
    %13 = sbr.rel (0) target = $region13
  $region12: #{bottleneck_forward.3} parent=0 // pred_region
    _
  $region13: #{bottleneck_forward.3} parent=0 // pred_fallthru
    _
  %p14 = scmp.eq.s32.totalorder 0, 0
  // Predicated region
  $region14: #{bottleneck_forward.3} parent=0 // pred_check
    %p15 = pneg %p14
  $region15: #{bottleneck_forward.3} parent=0 // pred_check_branch
    %17 = sbr.rel (%p15) target = $region17
  $region16: #{bottleneck_forward.3} parent=0 // pred_region
    %18 = vst [vmem:[#allocation2] sm:$0xff] 0.0
    %19 = vst [vmem:[#allocation2 + $0x8] sm:$0xff] 0.0
    %20 = vst [vmem:[#allocation2 + $0x10] sm:$0xff] 0.0
    %21 = vst [vmem:[#allocation2 + $0x18] sm:$0xff] 0.0
    %22 = vst [vmem:[#allocation2 + $0x20] sm:$0xff] 0.0
    %23 = vst [vmem:[#allocation2 + $0x28] sm:$0xff] 0.0
    %24 = vst [vmem:[#allocation2 + $0x30] sm:$0xff] 0.0
    %25 = vst [vmem:[#allocation2 + $0x38] sm:$0xff] 0.0
    %26 = vst [vmem:[#allocation2 + $0x40] sm:$0xff] 0.0
    %27 = vst [vmem:[#allocation2 + $0x48] sm:$0xff] 0.0
    %28 = vst [vmem:[#allocation2 + $0x50] sm:$0xff] 0.0
    %29 = vst [vmem:[#allocation2 + $0x58] sm:$0xff] 0.0
    %30 = vst [vmem:[#allocation2 + $0x60] sm:$0xff] 0.0
    %31 = vst [vmem:[#allocation2 + $0x68] sm:$0xff] 0.0
    %32 = vst [vmem:[#allocation2 + $0x70] sm:$0xff] 0.0
    %33 = vst [vmem:[#allocation2 + $0x78] sm:$0xff] 0.0
    %34 = vst [vmem:[#allocation2 + $0x80] sm:$0xff] 0.0
    %35 = vst [vmem:[#allocation2 + $0x88] sm:$0xff] 0.0
    %36 = vst [vmem:[#allocation2 + $0x90] sm:$0xff] 0.0
    %37 = vst [vmem:[#allocation2 + $0x98] sm:$0xff] 0.0
    %38 = vst [vmem:[#allocation2 + $0xa0] sm:$0xff] 0.0
    %39 = vst [vmem:[#allocation2 + $0xa8] sm:$0xff] 0.0
    %40 = vst [vmem:[#allocation2 + $0xb0] sm:$0xff] 0.0
    %41 = vst [vmem:[#allocation2 + $0xb8] sm:$0xff] 0.0
    %42 = vst [vmem:[#allocation2 + $0xc0] sm:$0xff] 0.0
    %43 = vst [vmem:[#allocation2 + $0xc8] sm:$0xff] 0.0
    %44 = vst [vmem:[#allocation2 + $0xd0] sm:$0xff] 0.0
    %45 = vst [vmem:[#allocation2 + $0xd8] sm:$0xff] 0.0
    %46 = vst [vmem:[#allocation2 + $0xe0] sm:$0xff] 0.0
    %47 = vst [vmem:[#allocation2 + $0xe8] sm:$0xff] 0.0
    %48 = vst [vmem:[#allocation2 + $0xf0] sm:$0xff] 0.0
    %49 = vst [vmem:[#allocation2 + $0xf8] sm:$0xff] 0.0
    %50 = vst [vmem:[#allocation2 + $0x100] sm:$0xff] 0.0
    %51 = vst [vmem:[#allocation2 + $0x108] sm:$0xff] 0.0
    %52 = vst [vmem:[#allocation2 + $0x110] sm:$0xff] 0.0
    %53 = vst [vmem:[#allocation2 + $0x118] sm:$0xff] 0.0
    %54 = vst [vmem:[#allocation2 + $0x120] sm:$0xff] 0.0
    %55 = vst [vmem:[#allocation2 + $0x128] sm:$0xff] 0.0
    %56 = vst [vmem:[#allocation2 + $0x130] sm:$0xff] 0.0
    %57 = vst [vmem:[#allocation2 + $0x138] sm:$0xff] 0.0
    %58 = vst [vmem:[#allocation2 + $0x140] sm:$0xff] 0.0
    %59 = vst [vmem:[#allocation2 + $0x148] sm:$0xff] 0.0
    %60 = vst [vmem:[#allocation2 + $0x150] sm:$0xff] 0.0
    %61 = vst [vmem:[#allocation2 + $0x158] sm:$0xff] 0.0
    %62 = vst [vmem:[#allocation2 + $0x160] sm:$0xff] 0.0
    %63 = vst [vmem:[#allocation2 + $0x168] sm:$0xff] 0.0
    %64 = vst [vmem:[#allocation2 + $0x170] sm:$0xff] 0.0
    %65 = vst [vmem:[#allocation2 + $0x178] sm:$0xff] 0.0
    %66 = vst [vmem:[#allocation2 + $0x180] sm:$0xff] 0.0
    %67 = vst [vmem:[#allocation2 + $0x188] sm:$0xff] 0.0
    %68 = vst [vmem:[#allocation2 + $0x190] sm:$0xff] 0.0
    %69 = vst [vmem:[#allocation2 + $0x198] sm:$0xff] 0.0
    %70 = vst [vmem:[#allocation2 + $0x1a0] sm:$0xff] 0.0
    %71 = vst [vmem:[#allocation2 + $0x1a8] sm:$0xff] 0.0
    %72 = vst [vmem:[#allocation2 + $0x1b0] sm:$0xff] 0.0
    %73 = vst [vmem:[#allocation2 + $0x1b8] sm:$0xff] 0.0
    %74 = vst [vmem:[#allocation2 + $0x1c0] sm:$0xff] 0.0
    %75 = vst [vmem:[#allocation2 + $0x1c8] sm:$0xff] 0.0
    %76 = vst [vmem:[#allocation2 + $0x1d0] sm:$0xff] 0.0
    %77 = vst [vmem:[#allocation2 + $0x1d8] sm:$0xff] 0.0
    %78 = vst [vmem:[#allocation2 + $0x1e0] sm:$0xff] 0.0
    %79 = vst [vmem:[#allocation2 + $0x1e8] sm:$0xff] 0.0
    %80 = vst [vmem:[#allocation2 + $0x1f0] sm:$0xff] 0.0
    %81 = vst [vmem:[#allocation2 + $0x1f8] sm:$0xff] 0.0
  $region17: #{bottleneck_forward.3} parent=0 // pred_fallthru
    _
  %v82 = vld [vmem:[#allocation2] sm:$0xff]
  %v83 = vld [vmem:[#allocation2 + $0x8] sm:$0xff]
  %v84 = vld [vmem:[#allocation2 + $0x10] sm:$0xff]
  %v85 = vld [vmem:[#allocation2 + $0x18] sm:$0xff]
  %v86 = vld [vmem:[#allocation2 + $0x20] sm:$0xff]
  %v87 = vld [vmem:[#allocation2 + $0x28] sm:$0xff]
  %v88 = vld [vmem:[#allocation2 + $0x30] sm:$0xff]
  %v89 = vld [vmem:[#allocation2 + $0x38] sm:$0xff]
  %v90 = vld [vmem:[#allocation2 + $0x40] sm:$0xff]
  %v91 = vld [vmem:[#allocation2 + $0x48] sm:$0xff]
  %v92 = vld [vmem:[#allocation2 + $0x50] sm:$0xff]
  %v93 = vld [vmem:[#allocation2 + $0x58] sm:$0xff]
  %v94 = vld [vmem:[#allocation2 + $0x60] sm:$0xff]
  %v95 = vld [vmem:[#allocation2 + $0x68] sm:$0xff]
  %v96 = vld [vmem:[#allocation2 + $0x70] sm:$0xff]
  %v97 = vld [vmem:[#allocation2 + $0x78] sm:$0xff]
  %v98 = vld [vmem:[#allocation2 + $0x80] sm:$0xff]
  %v99 = vld [vmem:[#allocation2 + $0x88] sm:$0xff]
  %v100 = vld [vmem:[#allocation2 + $0x90] sm:$0xff]
  %v101 = vld [vmem:[#allocation2 + $0x98] sm:$0xff]
  %v102 = vld [vmem:[#allocation2 + $0xa0] sm:$0xff]
  %v103 = vld [vmem:[#allocation2 + $0xa8] sm:$0xff]
  %v104 = vld [vmem:[#allocation2 + $0xb0] sm:$0xff]
  %v105 = vld [vmem:[#allocation2 + $0xb8] sm:$0xff]
  %v106 = vld [vmem:[#allocation2 + $0xc0] sm:$0xff]
  %v107 = vld [vmem:[#allocation2 + $0xc8] sm:$0xff]
  %v108 = vld [vmem:[#allocation2 + $0xd0] sm:$0xff]
  %v109 = vld [vmem:[#allocation2 + $0xd8] sm:$0xff]
  %v110 = vld [vmem:[#allocation2 + $0xe0] sm:$0xff]
  %v111 = vld [vmem:[#allocation2 + $0xe8] sm:$0xff]
  %v112 = vld [vmem:[#allocation2 + $0xf0] sm:$0xff]
  %v113 = vld [vmem:[#allocation2 + $0xf8] sm:$0xff]
  %v114 = vld [vmem:[#allocation2 + $0x100] sm:$0xff]
  %v115 = vld [vmem:[#allocation2 + $0x108] sm:$0xff]
  %v116 = vld [vmem:[#allocation2 + $0x110] sm:$0xff]
  %v117 = vld [vmem:[#allocation2 + $0x118] sm:$0xff]
  %v118 = vld [vmem:[#allocation2 + $0x120] sm:$0xff]
  %v119 = vld [vmem:[#allocation2 + $0x128] sm:$0xff]
  %v120 = vld [vmem:[#allocation2 + $0x130] sm:$0xff]
  %v121 = vld [vmem:[#allocation2 + $0x138] sm:$0xff]
  %v122 = vld [vmem:[#allocation2 + $0x140] sm:$0xff]
  %v123 = vld [vmem:[#allocation2 + $0x148] sm:$0xff]
  %v124 = vld [vmem:[#allocation2 + $0x150] sm:$0xff]
  %v125 = vld [vmem:[#allocation2 + $0x158] sm:$0xff]
  %v126 = vld [vmem:[#allocation2 + $0x160] sm:$0xff]
  %v127 = vld [vmem:[#allocation2 + $0x168] sm:$0xff]
  %v128 = vld [vmem:[#allocation2 + $0x170] sm:$0xff]
  %v129 = vld [vmem:[#allocation2 + $0x178] sm:$0xff]
  %v130 = vld [vmem:[#allocation2 + $0x180] sm:$0xff]
  %v131 = vld [vmem:[#allocation2 + $0x188] sm:$0xff]
  %v132 = vld [vmem:[#allocation2 + $0x190] sm:$0xff]
  %v133 = vld [vmem:[#allocation2 + $0x198] sm:$0xff]
  %v134 = vld [vmem:[#allocation2 + $0x1a0] sm:$0xff]
  %v135 = vld [vmem:[#allocation2 + $0x1a8] sm:$0xff]
  %v136 = vld [vmem:[#allocation2 + $0x1b0] sm:$0xff]
  %v137 = vld [vmem:[#allocation2 + $0x1b8] sm:$0xff]
  %v138 = vld [vmem:[#allocation2 + $0x1c0] sm:$0xff]
  %v139 = vld [vmem:[#allocation2 + $0x1c8] sm:$0xff]
  %v140 = vld [vmem:[#allocation2 + $0x1d0] sm:$0xff]
  %v141 = vld [vmem:[#allocation2 + $0x1d8] sm:$0xff]
  %v142 = vld [vmem:[#allocation2 + $0x1e0] sm:$0xff]
  %v143 = vld [vmem:[#allocation2 + $0x1e8] sm:$0xff]
  %v144 = vld [vmem:[#allocation2 + $0x1f0] sm:$0xff]
  %v145 = vld [vmem:[#allocation2 + $0x1f8] sm:$0xff]
  %v146 = vld [vmem:[%s0] sm:$0xff]
  %v147 = vld [vmem:[%s0 + $0x8] sm:$0xff]
  %v148 = vld [vmem:[%s0 + $0x10] sm:$0xff]
  %v149 = vld [vmem:[%s0 + $0x18] sm:$0xff]
  %v150 = vld [vmem:[%s0 + $0x20] sm:$0xff]
  %v151 = vld [vmem:[%s0 + $0x28] sm:$0xff]
  %v152 = vld [vmem:[%s0 + $0x30] sm:$0xff]
  %v153 = vld [vmem:[%s0 + $0x38] sm:$0xff]
  %v154 = vld [vmem:[%s0 + $0x40] sm:$0xff]
  %v155 = vld [vmem:[%s0 + $0x48] sm:$0xff]
  %v156 = vld [vmem:[%s0 + $0x50] sm:$0xff]
  %v157 = vld [vmem:[%s0 + $0x58] sm:$0xff]
  %v158 = vld [vmem:[%s0 + $0x60] sm:$0xff]
  %v159 = vld [vmem:[%s0 + $0x68] sm:$0xff]
  %v160 = vld [vmem:[%s0 + $0x70] sm:$0xff]
  %v161 = vld [vmem:[%s0 + $0x78] sm:$0xff]
  %v162 = vld [vmem:[%s0 + $0x80] sm:$0xff]
  %v163 = vld [vmem:[%s0 + $0x88] sm:$0xff]
  %v164 = vld [vmem:[%s0 + $0x90] sm:$0xff]
  %v165 = vld [vmem:[%s0 + $0x98] sm:$0xff]
  %v166 = vld [vmem:[%s0 + $0xa0] sm:$0xff]
  %v167 = vld [vmem:[%s0 + $0xa8] sm:$0xff]
  %v168 = vld [vmem:[%s0 + $0xb0] sm:$0xff]
  %v169 = vld [vmem:[%s0 + $0xb8] sm:$0xff]
  %v170 = vld [vmem:[%s0 + $0xc0] sm:$0xff]
  %v171 = vld [vmem:[%s0 + $0xc8] sm:$0xff]
  %v172 = vld [vmem:[%s0 + $0xd0] sm:$0xff]
  %v173 = vld [vmem:[%s0 + $0xd8] sm:$0xff]
  %v174 = vld [vmem:[%s0 + $0xe0] sm:$0xff]
  %v175 = vld [vmem:[%s0 + $0xe8] sm:$0xff]
  %v176 = vld [vmem:[%s0 + $0xf0] sm:$0xff]
  %v177 = vld [vmem:[%s0 + $0xf8] sm:$0xff]
  %v178 = vld [vmem:[%s0 + $0x100] sm:$0xff]
  %v179 = vld [vmem:[%s0 + $0x108] sm:$0xff]
  %v180 = vld [vmem:[%s0 + $0x110] sm:$0xff]
  %v181 = vld [vmem:[%s0 + $0x118] sm:$0xff]
  %v182 = vld [vmem:[%s0 + $0x120] sm:$0xff]
  %v183 = vld [vmem:[%s0 + $0x128] sm:$0xff]
  %v184 = vld [vmem:[%s0 + $0x130] sm:$0xff]
  %v185 = vld [vmem:[%s0 + $0x138] sm:$0xff]
  %v186 = vld [vmem:[%s0 + $0x140] sm:$0xff]
  %v187 = vld [vmem:[%s0 + $0x148] sm:$0xff]
  %v188 = vld [vmem:[%s0 + $0x150] sm:$0xff]
  %v189 = vld [vmem:[%s0 + $0x158] sm:$0xff]
  %v190 = vld [vmem:[%s0 + $0x160] sm:$0xff]
  %v191 = vld [vmem:[%s0 + $0x168] sm:$0xff]
  %v192 = vld [vmem:[%s0 + $0x170] sm:$0xff]
  %v193 = vld [vmem:[%s0 + $0x178] sm:$0xff]
  %v194 = vld [vmem:[%s0 + $0x180] sm:$0xff]
  %v195 = vld [vmem:[%s0 + $0x188] sm:$0xff]
  %v196 = vld [vmem:[%s0 + $0x190] sm:$0xff]
  %v197 = vld [vmem:[%s0 + $0x198] sm:$0xff]
  %v198 = vld [vmem:[%s0 + $0x1a0] sm:$0xff]
  %v199 = vld [vmem:[%s0 + $0x1a8] sm:$0xff]
  %v200 = vld [vmem:[%s0 + $0x1b0] sm:$0xff]
  %v201 = vld [vmem:[%s0 + $0x1b8] sm:$0xff]
  %v202 = vld [vmem:[%s0 + $0x1c0] sm:$0xff]
  %v203 = vld [vmem:[%s0 + $0x1c8] sm:$0xff]
  %v204 = vld [vmem:[%s0 + $0x1d0] sm:$0xff]
  %v205 = vld [vmem:[%s0 + $0x1d8] sm:$0xff]
  %v206 = vld [vmem:[%s0 + $0x1e0] sm:$0xff]
  %v207 = vld [vmem:[%s0 + $0x1e8] sm:$0xff]
  %v208 = vld [vmem:[%s0 + $0x1f0] sm:$0xff]
  %v209 = vld [vmem:[%s0 + $0x1f8] sm:$0xff]
  %v210 = vpack.c.bf16 %v147, %v146
  %v211 = vpack.c.bf16 %v149, %v148
  %v212 = vpack.c.bf16 %v151, %v150
  %v213 = vpack.c.bf16 %v153, %v152
  %v214 = vpack.c.bf16 %v155, %v154
  %v215 = vpack.c.bf16 %v157, %v156
  %v216 = vpack.c.bf16 %v159, %v158
  %v217 = vpack.c.bf16 %v161, %v160
  %v218 = vpack.c.bf16 %v163, %v162
  %v219 = vpack.c.bf16 %v165, %v164
  %v220 = vpack.c.bf16 %v167, %v166
  %v221 = vpack.c.bf16 %v169, %v168
  %v222 = vpack.c.bf16 %v171, %v170
  %v223 = vpack.c.bf16 %v173, %v172
  %v224 = vpack.c.bf16 %v175, %v174
  %v225 = vpack.c.bf16 %v177, %v176
  %v226 = vpack.c.bf16 %v179, %v178
  %v227 = vpack.c.bf16 %v181, %v180
  %v228 = vpack.c.bf16 %v183, %v182
  %v229 = vpack.c.bf16 %v185, %v184
  %v230 = vpack.c.bf16 %v187, %v186
  %v231 = vpack.c.bf16 %v189, %v188
  %v232 = vpack.c.bf16 %v191, %v190
  %v233 = vpack.c.bf16 %v193, %v192
  %v234 = vpack.c.bf16 %v195, %v194
  %v235 = vpack.c.bf16 %v197, %v196
  %v236 = vpack.c.bf16 %v199, %v198
  %v237 = vpack.c.bf16 %v201, %v200
  %v238 = vpack.c.bf16 %v203, %v202
  %v239 = vpack.c.bf16 %v205, %v204
  %v240 = vpack.c.bf16 %v207, %v206
  %v241 = vpack.c.bf16 %v209, %v208
  %v242 = vld [vmem:[%s1] sm:$0xf]
  %v243 = vld [vmem:[%s1 + $0x4] sm:$0xf]
  %v244 = vld [vmem:[%s1 + $0x8] sm:$0xf]
  %v245 = vld [vmem:[%s1 + $0xc] sm:$0xf]
  %v246 = vld [vmem:[%s1 + $0x10] sm:$0xf]
  %v247 = vld [vmem:[%s1 + $0x14] sm:$0xf]
  %v248 = vld [vmem:[%s1 + $0x18] sm:$0xf]
  %v249 = vld [vmem:[%s1 + $0x1c] sm:$0xf]
  %v250 = vld [vmem:[%s1 + $0x20] sm:$0xf]
  %v251 = vld [vmem:[%s1 + $0x24] sm:$0xf]
  %v252 = vld [vmem:[%s1 + $0x28] sm:$0xf]
  %v253 = vld [vmem:[%s1 + $0x2c] sm:$0xf]
  %v254 = vld [vmem:[%s1 + $0x30] sm:$0xf]
  %v255 = vld [vmem:[%s1 + $0x34] sm:$0xf]
  %v256 = vld [vmem:[%s1 + $0x38] sm:$0xf]
  %v257 = vld [vmem:[%s1 + $0x3c] sm:$0xf]
  %v274 = vunpack.c.l.b16 %v242
  %v275 = vunpack.c.l.b16 %v243
  %v276 = vunpack.c.l.b16 %v244
  %v277 = vunpack.c.l.b16 %v245
  %v278 = vunpack.c.l.b16 %v246
  %v279 = vunpack.c.l.b16 %v247
  %v280 = vunpack.c.l.b16 %v248
  %v281 = vunpack.c.l.b16 %v249
  %v282 = vunpack.c.l.b16 %v250
  %v283 = vunpack.c.l.b16 %v251
  %v284 = vunpack.c.l.b16 %v252
  %v285 = vunpack.c.l.b16 %v253
  %v286 = vunpack.c.l.b16 %v254
  %v287 = vunpack.c.l.b16 %v255
  %v288 = vunpack.c.l.b16 %v256
  %v289 = vunpack.c.l.b16 %v257
  %v290 = vpack.c.b16 %v275, %v274
  %v291 = vpack.c.b16 %v277, %v276
  %v292 = vpack.c.b16 %v279, %v278
  %v293 = vpack.c.b16 %v281, %v280
  %v294 = vpack.c.b16 %v283, %v282
  %v295 = vpack.c.b16 %v285, %v284
  %v296 = vpack.c.b16 %v287, %v286
  %v297 = vpack.c.b16 %v289, %v288
  %306 = vmatpush.bf16.msra.mxu0 %v297
  %307 = vmatpush.bf16.msra.mxu0 %v296
  %308 = vmatpush.bf16.msra.mxu0 %v295
  %309 = vmatpush.bf16.msra.mxu0 %v294
  %310 = vmatpush.bf16.msra.mxu0 %v293
  %311 = vmatpush.bf16.msra.mxu0 %v292
  %312 = vmatpush.bf16.msra.mxu0 %v291
  %313 = vmatpush.bf16.msra.mxu0 %v290
  %314 = vmatmul.bf16.gmra.mxu0 %v210
  %v315 = vpop.f32.mrf.mxu0
  %v316 = vadd.f32 0.0, %v315
  %v317 = vpop.f32.mrf.mxu0
  %v318 = vadd.f32 0.0, %v317
  %319 = vmatmul.bf16.gmra.mxu0 %v211
  %v320 = vpop.f32.mrf.mxu0
  %v321 = vadd.f32 0.0, %v320
  %v322 = vpop.f32.mrf.mxu0
  %v323 = vadd.f32 0.0, %v322
  %324 = vmatmul.bf16.gmra.mxu0 %v212
  %v325 = vpop.f32.mrf.mxu0
  %v326 = vadd.f32 0.0, %v325
  %v327 = vpop.f32.mrf.mxu0
  %v328 = vadd.f32 0.0, %v327
  %329 = vmatmul.bf16.gmra.mxu0 %v213
  %v330 = vpop.f32.mrf.mxu0
  %v331 = vadd.f32 0.0, %v330
  %v332 = vpop.f32.mrf.mxu0
  %v333 = vadd.f32 0.0, %v332
  %334 = vmatmul.bf16.gmra.mxu0 %v214
  %v335 = vpop.f32.mrf.mxu0
  %v336 = vadd.f32 0.0, %v335
  %v337 = vpop.f32.mrf.mxu0
  %v338 = vadd.f32 0.0, %v337
  %339 = vmatmul.bf16.gmra.mxu0 %v215
  %v340 = vpop.f32.mrf.mxu0
  %v341 = vadd.f32 0.0, %v340
  %v342 = vpop.f32.mrf.mxu0
  %v343 = vadd.f32 0.0, %v342
  %344 = vmatmul.bf16.gmra.mxu0 %v216
  %v345 = vpop.f32.mrf.mxu0
  %v346 = vadd.f32 0.0, %v345
  %v347 = vpop.f32.mrf.mxu0
  %v348 = vadd.f32 0.0, %v347
  %349 = vmatmul.bf16.gmra.mxu0 %v217
  %v350 = vpop.f32.mrf.mxu0
  %v351 = vadd.f32 0.0, %v350
  %v352 = vpop.f32.mrf.mxu0
  %v353 = vadd.f32 0.0, %v352
  %354 = vmatmul.bf16.gmra.mxu0 %v218
  %v355 = vpop.f32.mrf.mxu0
  %v356 = vadd.f32 0.0, %v355
  %v357 = vpop.f32.mrf.mxu0
  %v358 = vadd.f32 0.0, %v357
  %359 = vmatmul.bf16.gmra.mxu0 %v219
  %v360 = vpop.f32.mrf.mxu0
  %v361 = vadd.f32 0.0, %v360
  %v362 = vpop.f32.mrf.mxu0
  %v363 = vadd.f32 0.0, %v362
  %364 = vmatmul.bf16.gmra.mxu0 %v220
  %v365 = vpop.f32.mrf.mxu0
  %v366 = vadd.f32 0.0, %v365
  %v367 = vpop.f32.mrf.mxu0
  %v368 = vadd.f32 0.0, %v367
  %369 = vmatmul.bf16.gmra.mxu0 %v221
  %v370 = vpop.f32.mrf.mxu0
  %v371 = vadd.f32 0.0, %v370
  %v372 = vpop.f32.mrf.mxu0
  %v373 = vadd.f32 0.0, %v372
  %374 = vmatmul.bf16.gmra.mxu0 %v222
  %v375 = vpop.f32.mrf.mxu0
  %v376 = vadd.f32 0.0, %v375
  %v377 = vpop.f32.mrf.mxu0
  %v378 = vadd.f32 0.0, %v377
  %379 = vmatmul.bf16.gmra.mxu0 %v223
  %v380 = vpop.f32.mrf.mxu0
  %v381 = vadd.f32 0.0, %v380
  %v382 = vpop.f32.mrf.mxu0
  %v383 = vadd.f32 0.0, %v382
  %384 = vmatmul.bf16.gmra.mxu0 %v224
  %v385 = vpop.f32.mrf.mxu0
  %v386 = vadd.f32 0.0, %v385
  %v387 = vpop.f32.mrf.mxu0
  %v388 = vadd.f32 0.0, %v387
  %389 = vmatmul.bf16.gmra.mxu0 %v225
  %v390 = vpop.f32.mrf.mxu0
  %v391 = vadd.f32 0.0, %v390
  %v392 = vpop.f32.mrf.mxu0
  %v393 = vadd.f32 0.0, %v392
  %394 = vmatmul.bf16.gmra.mxu0 %v226
  %v395 = vpop.f32.mrf.mxu0
  %v396 = vadd.f32 0.0, %v395
  %v397 = vpop.f32.mrf.mxu0
  %v398 = vadd.f32 0.0, %v397
  %399 = vmatmul.bf16.gmra.mxu0 %v227
  %v400 = vpop.f32.mrf.mxu0
  %v401 = vadd.f32 0.0, %v400
  %v402 = vpop.f32.mrf.mxu0
  %v403 = vadd.f32 0.0, %v402
  %404 = vmatmul.bf16.gmra.mxu0 %v228
  %v405 = vpop.f32.mrf.mxu0
  %v406 = vadd.f32 0.0, %v405
  %v407 = vpop.f32.mrf.mxu0
  %v408 = vadd.f32 0.0, %v407
  %409 = vmatmul.bf16.gmra.mxu0 %v229
  %v410 = vpop.f32.mrf.mxu0
  %v411 = vadd.f32 0.0, %v410
  %v412 = vpop.f32.mrf.mxu0
  %v413 = vadd.f32 0.0, %v412
  %414 = vmatmul.bf16.gmra.mxu0 %v230
  %v415 = vpop.f32.mrf.mxu0
  %v416 = vadd.f32 0.0, %v415
  %v417 = vpop.f32.mrf.mxu0
  %v418 = vadd.f32 0.0, %v417
  %419 = vmatmul.bf16.gmra.mxu0 %v231
  %v420 = vpop.f32.mrf.mxu0
  %v421 = vadd.f32 0.0, %v420
  %v422 = vpop.f32.mrf.mxu0
  %v423 = vadd.f32 0.0, %v422
  %424 = vmatmul.bf16.gmra.mxu0 %v232
  %v425 = vpop.f32.mrf.mxu0
  %v426 = vadd.f32 0.0, %v425
  %v427 = vpop.f32.mrf.mxu0
  %v428 = vadd.f32 0.0, %v427
  %429 = vmatmul.bf16.gmra.mxu0 %v233
  %v430 = vpop.f32.mrf.mxu0
  %v431 = vadd.f32 0.0, %v430
  %v432 = vpop.f32.mrf.mxu0
  %v433 = vadd.f32 0.0, %v432
  %434 = vmatmul.bf16.gmra.mxu0 %v234
  %v435 = vpop.f32.mrf.mxu0
  %v436 = vadd.f32 0.0, %v435
  %v437 = vpop.f32.mrf.mxu0
  %v438 = vadd.f32 0.0, %v437
  %439 = vmatmul.bf16.gmra.mxu0 %v235
  %v440 = vpop.f32.mrf.mxu0
  %v441 = vadd.f32 0.0, %v440
  %v442 = vpop.f32.mrf.mxu0
  %v443 = vadd.f32 0.0, %v442
  %444 = vmatmul.bf16.gmra.mxu0 %v236
  %v445 = vpop.f32.mrf.mxu0
  %v446 = vadd.f32 0.0, %v445
  %v447 = vpop.f32.mrf.mxu0
  %v448 = vadd.f32 0.0, %v447
  %449 = vmatmul.bf16.gmra.mxu0 %v237
  %v450 = vpop.f32.mrf.mxu0
  %v451 = vadd.f32 0.0, %v450
  %v452 = vpop.f32.mrf.mxu0
  %v453 = vadd.f32 0.0, %v452
  %454 = vmatmul.bf16.gmra.mxu0 %v238
  %v455 = vpop.f32.mrf.mxu0
  %v456 = vadd.f32 0.0, %v455
  %v457 = vpop.f32.mrf.mxu0
  %v458 = vadd.f32 0.0, %v457
  %459 = vmatmul.bf16.gmra.mxu0 %v239
  %v460 = vpop.f32.mrf.mxu0
  %v461 = vadd.f32 0.0, %v460
  %v462 = vpop.f32.mrf.mxu0
  %v463 = vadd.f32 0.0, %v462
  %464 = vmatmul.bf16.gmra.mxu0 %v240
  %v465 = vpop.f32.mrf.mxu0
  %v466 = vadd.f32 0.0, %v465
  %v467 = vpop.f32.mrf.mxu0
  %v468 = vadd.f32 0.0, %v467
  %469 = vmatmul.bf16.gmra.mxu0 %v241
  %v470 = vpop.f32.mrf.mxu0
  %v471 = vadd.f32 0.0, %v470
  %v472 = vpop.f32.mrf.mxu0
  %v473 = vadd.f32 0.0, %v472
  %474 = vdwg.mxu0
  %v475 = vadd.f32 %v82, %v316
  %v476 = vadd.f32 %v83, %v318
  %v477 = vadd.f32 %v84, %v321
  %v478 = vadd.f32 %v85, %v323
  %v479 = vadd.f32 %v86, %v326
  %v480 = vadd.f32 %v87, %v328
  %v481 = vadd.f32 %v88, %v331
  %v482 = vadd.f32 %v89, %v333
  %v483 = vadd.f32 %v90, %v336
  %v484 = vadd.f32 %v91, %v338
  %v485 = vadd.f32 %v92, %v341
  %v486 = vadd.f32 %v93, %v343
  %v487 = vadd.f32 %v94, %v346
  %v488 = vadd.f32 %v95, %v348
  %v489 = vadd.f32 %v96, %v351
  %v490 = vadd.f32 %v97, %v353
  %v491 = vadd.f32 %v98, %v356
  %v492 = vadd.f32 %v99, %v358
  %v493 = vadd.f32 %v100, %v361
  %v494 = vadd.f32 %v101, %v363
  %v495 = vadd.f32 %v102, %v366
  %v496 = vadd.f32 %v103, %v368
  %v497 = vadd.f32 %v104, %v371
  %v498 = vadd.f32 %v105, %v373
  %v499 = vadd.f32 %v106, %v376
  %v500 = vadd.f32 %v107, %v378
  %v501 = vadd.f32 %v108, %v381
  %v502 = vadd.f32 %v109, %v383
  %v503 = vadd.f32 %v110, %v386
  %v504 = vadd.f32 %v111, %v388
  %v505 = vadd.f32 %v112, %v391
  %v506 = vadd.f32 %v113, %v393
  %v507 = vadd.f32 %v114, %v396
  %v508 = vadd.f32 %v115, %v398
  %v509 = vadd.f32 %v116, %v401
  %v510 = vadd.f32 %v117, %v403
  %v511 = vadd.f32 %v118, %v406
  %v512 = vadd.f32 %v119, %v408
  %v513 = vadd.f32 %v120, %v411
  %v514 = vadd.f32 %v121, %v413
  %v515 = vadd.f32 %v122, %v416
  %v516 = vadd.f32 %v123, %v418
  %v517 = vadd.f32 %v124, %v421
  %v518 = vadd.f32 %v125, %v423
  %v519 = vadd.f32 %v126, %v426
  %v520 = vadd.f32 %v127, %v428
  %v521 = vadd.f32 %v128, %v431
  %v522 = vadd.f32 %v129, %v433
  %v523 = vadd.f32 %v130, %v436
  %v524 = vadd.f32 %v131, %v438
  %v525 = vadd.f32 %v132, %v441
  %v526 = vadd.f32 %v133, %v443
  %v527 = vadd.f32 %v134, %v446
  %v528 = vadd.f32 %v135, %v448
  %v529 = vadd.f32 %v136, %v451
  %v530 = vadd.f32 %v137, %v453
  %v531 = vadd.f32 %v138, %v456
  %v532 = vadd.f32 %v139, %v458
  %v533 = vadd.f32 %v140, %v461
  %v534 = vadd.f32 %v141, %v463
  %v535 = vadd.f32 %v142, %v466
  %v536 = vadd.f32 %v143, %v468
  %v537 = vadd.f32 %v144, %v471
  %v538 = vadd.f32 %v145, %v473
  %539 = vst [vmem:[#allocation2] sm:$0xff] %v475
  %540 = vst [vmem:[#allocation2 + $0x8] sm:$0xff] %v476
  %541 = vst [vmem:[#allocation2 + $0x10] sm:$0xff] %v477
  %542 = vst [vmem:[#allocation2 + $0x18] sm:$0xff] %v478
  %543 = vst [vmem:[#allocation2 + $0x20] sm:$0xff] %v479
  %544 = vst [vmem:[#allocation2 + $0x28] sm:$0xff] %v480
  %545 = vst [vmem:[#allocation2 + $0x30] sm:$0xff] %v481
  %546 = vst [vmem:[#allocation2 + $0x38] sm:$0xff] %v482
  %547 = vst [vmem:[#allocation2 + $0x40] sm:$0xff] %v483
  %548 = vst [vmem:[#allocation2 + $0x48] sm:$0xff] %v484
  %549 = vst [vmem:[#allocation2 + $0x50] sm:$0xff] %v485
  %550 = vst [vmem:[#allocation2 + $0x58] sm:$0xff] %v486
  %551 = vst [vmem:[#allocation2 + $0x60] sm:$0xff] %v487
  %552 = vst [vmem:[#allocation2 + $0x68] sm:$0xff] %v488
  %553 = vst [vmem:[#allocation2 + $0x70] sm:$0xff] %v489
  %554 = vst [vmem:[#allocation2 + $0x78] sm:$0xff] %v490
  %555 = vst [vmem:[#allocation2 + $0x80] sm:$0xff] %v491
  %556 = vst [vmem:[#allocation2 + $0x88] sm:$0xff] %v492
  %557 = vst [vmem:[#allocation2 + $0x90] sm:$0xff] %v493
  %558 = vst [vmem:[#allocation2 + $0x98] sm:$0xff] %v494
  %559 = vst [vmem:[#allocation2 + $0xa0] sm:$0xff] %v495
  %560 = vst [vmem:[#allocation2 + $0xa8] sm:$0xff] %v496
  %561 = vst [vmem:[#allocation2 + $0xb0] sm:$0xff] %v497
  %562 = vst [vmem:[#allocation2 + $0xb8] sm:$0xff] %v498
  %563 = vst [vmem:[#allocation2 + $0xc0] sm:$0xff] %v499
  %564 = vst [vmem:[#allocation2 + $0xc8] sm:$0xff] %v500
  %565 = vst [vmem:[#allocation2 + $0xd0] sm:$0xff] %v501
  %566 = vst [vmem:[#allocation2 + $0xd8] sm:$0xff] %v502
  %567 = vst [vmem:[#allocation2 + $0xe0] sm:$0xff] %v503
  %568 = vst [vmem:[#allocation2 + $0xe8] sm:$0xff] %v504
  %569 = vst [vmem:[#allocation2 + $0xf0] sm:$0xff] %v505
  %570 = vst [vmem:[#allocation2 + $0xf8] sm:$0xff] %v506
  %571 = vst [vmem:[#allocation2 + $0x100] sm:$0xff] %v507
  %572 = vst [vmem:[#allocation2 + $0x108] sm:$0xff] %v508
  %573 = vst [vmem:[#allocation2 + $0x110] sm:$0xff] %v509
  %574 = vst [vmem:[#allocation2 + $0x118] sm:$0xff] %v510
  %575 = vst [vmem:[#allocation2 + $0x120] sm:$0xff] %v511
  %576 = vst [vmem:[#allocation2 + $0x128] sm:$0xff] %v512
  %577 = vst [vmem:[#allocation2 + $0x130] sm:$0xff] %v513
  %578 = vst [vmem:[#allocation2 + $0x138] sm:$0xff] %v514
  %579 = vst [vmem:[#allocation2 + $0x140] sm:$0xff] %v515
  %580 = vst [vmem:[#allocation2 + $0x148] sm:$0xff] %v516
  %581 = vst [vmem:[#allocation2 + $0x150] sm:$0xff] %v517
  %582 = vst [vmem:[#allocation2 + $0x158] sm:$0xff] %v518
  %583 = vst [vmem:[#allocation2 + $0x160] sm:$0xff] %v519
  %584 = vst [vmem:[#allocation2 + $0x168] sm:$0xff] %v520
  %585 = vst [vmem:[#allocation2 + $0x170] sm:$0xff] %v521
  %586 = vst [vmem:[#allocation2 + $0x178] sm:$0xff] %v522
  %587 = vst [vmem:[#allocation2 + $0x180] sm:$0xff] %v523
  %588 = vst [vmem:[#allocation2 + $0x188] sm:$0xff] %v524
  %589 = vst [vmem:[#allocation2 + $0x190] sm:$0xff] %v525
  %590 = vst [vmem:[#allocation2 + $0x198] sm:$0xff] %v526
  %591 = vst [vmem:[#allocation2 + $0x1a0] sm:$0xff] %v527
  %592 = vst [vmem:[#allocation2 + $0x1a8] sm:$0xff] %v528
  %593 = vst [vmem:[#allocation2 + $0x1b0] sm:$0xff] %v529
  %594 = vst [vmem:[#allocation2 + $0x1b8] sm:$0xff] %v530
  %595 = vst [vmem:[#allocation2 + $0x1c0] sm:$0xff] %v531
  %596 = vst [vmem:[#allocation2 + $0x1c8] sm:$0xff] %v532
  %597 = vst [vmem:[#allocation2 + $0x1d0] sm:$0xff] %v533
  %598 = vst [vmem:[#allocation2 + $0x1d8] sm:$0xff] %v534
  %599 = vst [vmem:[#allocation2 + $0x1e0] sm:$0xff] %v535
  %600 = vst [vmem:[#allocation2 + $0x1e8] sm:$0xff] %v536
  %601 = vst [vmem:[#allocation2 + $0x1f0] sm:$0xff] %v537
  %602 = vst [vmem:[#allocation2 + $0x1f8] sm:$0xff] %v538
  // Predicated region
  $region18: #{bottleneck_forward.3} parent=0 // pred_check
    %p603 = pneg %p14
  $region19: #{bottleneck_forward.3} parent=0 // pred_check_branch
    %605 = sbr.rel (%p603) target = $region21
  $region20: #{bottleneck_forward.3} parent=0 // pred_region
    %v606 = vld [vmem:[#allocation2] sm:$0xff]
    %v607 = vld [vmem:[#allocation2 + $0x8] sm:$0xff]
    %v608 = vld [vmem:[#allocation2 + $0x10] sm:$0xff]
    %v609 = vld [vmem:[#allocation2 + $0x18] sm:$0xff]
    %v610 = vld [vmem:[#allocation2 + $0x20] sm:$0xff]
    %v611 = vld [vmem:[#allocation2 + $0x28] sm:$0xff]
    %v612 = vld [vmem:[#allocation2 + $0x30] sm:$0xff]
    %v613 = vld [vmem:[#allocation2 + $0x38] sm:$0xff]
    %v614 = vld [vmem:[#allocation2 + $0x40] sm:$0xff]
    %v615 = vld [vmem:[#allocation2 + $0x48] sm:$0xff]
    %v616 = vld [vmem:[#allocation2 + $0x50] sm:$0xff]
    %v617 = vld [vmem:[#allocation2 + $0x58] sm:$0xff]
    %v618 = vld [vmem:[#allocation2 + $0x60] sm:$0xff]
    %v619 = vld [vmem:[#allocation2 + $0x68] sm:$0xff]
    %v620 = vld [vmem:[#allocation2 + $0x70] sm:$0xff]
    %v621 = vld [vmem:[#allocation2 + $0x78] sm:$0xff]
    %v622 = vld [vmem:[#allocation2 + $0x80] sm:$0xff]
    %v623 = vld [vmem:[#allocation2 + $0x88] sm:$0xff]
    %v624 = vld [vmem:[#allocation2 + $0x90] sm:$0xff]
    %v625 = vld [vmem:[#allocation2 + $0x98] sm:$0xff]
    %v626 = vld [vmem:[#allocation2 + $0xa0] sm:$0xff]
    %v627 = vld [vmem:[#allocation2 + $0xa8] sm:$0xff]
    %v628 = vld [vmem:[#allocation2 + $0xb0] sm:$0xff]
    %v629 = vld [vmem:[#allocation2 + $0xb8] sm:$0xff]
    %v630 = vld [vmem:[#allocation2 + $0xc0] sm:$0xff]
    %v631 = vld [vmem:[#allocation2 + $0xc8] sm:$0xff]
    %v632 = vld [vmem:[#allocation2 + $0xd0] sm:$0xff]
    %v633 = vld [vmem:[#allocation2 + $0xd8] sm:$0xff]
    %v634 = vld [vmem:[#allocation2 + $0xe0] sm:$0xff]
    %v635 = vld [vmem:[#allocation2 + $0xe8] sm:$0xff]
    %v636 = vld [vmem:[#allocation2 + $0xf0] sm:$0xff]
    %v637 = vld [vmem:[#allocation2 + $0xf8] sm:$0xff]
    %v638 = vld [vmem:[#allocation2 + $0x100] sm:$0xff]
    %v639 = vld [vmem:[#allocation2 + $0x108] sm:$0xff]
    %v640 = vld [vmem:[#allocation2 + $0x110] sm:$0xff]
    %v641 = vld [vmem:[#allocation2 + $0x118] sm:$0xff]
    %v642 = vld [vmem:[#allocation2 + $0x120] sm:$0xff]
    %v643 = vld [vmem:[#allocation2 + $0x128] sm:$0xff]
    %v644 = vld [vmem:[#allocation2 + $0x130] sm:$0xff]
    %v645 = vld [vmem:[#allocation2 + $0x138] sm:$0xff]
    %v646 = vld [vmem:[#allocation2 + $0x140] sm:$0xff]
    %v647 = vld [vmem:[#allocation2 + $0x148] sm:$0xff]
    %v648 = vld [vmem:[#allocation2 + $0x150] sm:$0xff]
    %v649 = vld [vmem:[#allocation2 + $0x158] sm:$0xff]
    %v650 = vld [vmem:[#allocation2 + $0x160] sm:$0xff]
    %v651 = vld [vmem:[#allocation2 + $0x168] sm:$0xff]
    %v652 = vld [vmem:[#allocation2 + $0x170] sm:$0xff]
    %v653 = vld [vmem:[#allocation2 + $0x178] sm:$0xff]
    %v654 = vld [vmem:[#allocation2 + $0x180] sm:$0xff]
    %v655 = vld [vmem:[#allocation2 + $0x188] sm:$0xff]
    %v656 = vld [vmem:[#allocation2 + $0x190] sm:$0xff]
    %v657 = vld [vmem:[#allocation2 + $0x198] sm:$0xff]
    %v658 = vld [vmem:[#allocation2 + $0x1a0] sm:$0xff]
    %v659 = vld [vmem:[#allocation2 + $0x1a8] sm:$0xff]
    %v660 = vld [vmem:[#allocation2 + $0x1b0] sm:$0xff]
    %v661 = vld [vmem:[#allocation2 + $0x1b8] sm:$0xff]
    %v662 = vld [vmem:[#allocation2 + $0x1c0] sm:$0xff]
    %v663 = vld [vmem:[#allocation2 + $0x1c8] sm:$0xff]
    %v664 = vld [vmem:[#allocation2 + $0x1d0] sm:$0xff]
    %v665 = vld [vmem:[#allocation2 + $0x1d8] sm:$0xff]
    %v666 = vld [vmem:[#allocation2 + $0x1e0] sm:$0xff]
    %v667 = vld [vmem:[#allocation2 + $0x1e8] sm:$0xff]
    %v668 = vld [vmem:[#allocation2 + $0x1f0] sm:$0xff]
    %v669 = vld [vmem:[#allocation2 + $0x1f8] sm:$0xff]
    %v670 = vld [vmem:[%s2] sm:$0x1]
    %v672 = vperm.slane %v670, 0
    %v674 = vadd.f32 %v606, %v672
    %v675 = vadd.f32 %v607, %v672
    %v676 = vadd.f32 %v608, %v672
    %v677 = vadd.f32 %v609, %v672
    %v678 = vadd.f32 %v610, %v672
    %v679 = vadd.f32 %v611, %v672
    %v680 = vadd.f32 %v612, %v672
    %v681 = vadd.f32 %v613, %v672
    %v682 = vadd.f32 %v614, %v672
    %v683 = vadd.f32 %v615, %v672
    %v684 = vadd.f32 %v616, %v672
    %v685 = vadd.f32 %v617, %v672
    %v686 = vadd.f32 %v618, %v672
    %v687 = vadd.f32 %v619, %v672
    %v688 = vadd.f32 %v620, %v672
    %v689 = vadd.f32 %v621, %v672
    %v690 = vadd.f32 %v622, %v672
    %v691 = vadd.f32 %v623, %v672
    %v692 = vadd.f32 %v624, %v672
    %v693 = vadd.f32 %v625, %v672
    %v694 = vadd.f32 %v626, %v672
    %v695 = vadd.f32 %v627, %v672
    %v696 = vadd.f32 %v628, %v672
    %v697 = vadd.f32 %v629, %v672
    %v698 = vadd.f32 %v630, %v672
    %v699 = vadd.f32 %v631, %v672
    %v700 = vadd.f32 %v632, %v672
    %v701 = vadd.f32 %v633, %v672
    %v702 = vadd.f32 %v634, %v672
    %v703 = vadd.f32 %v635, %v672
    %v704 = vadd.f32 %v636, %v672
    %v705 = vadd.f32 %v637, %v672
    %v706 = vadd.f32 %v638, %v672
    %v707 = vadd.f32 %v639, %v672
    %v708 = vadd.f32 %v640, %v672
    %v709 = vadd.f32 %v641, %v672
    %v710 = vadd.f32 %v642, %v672
    %v711 = vadd.f32 %v643, %v672
    %v712 = vadd.f32 %v644, %v672
    %v713 = vadd.f32 %v645, %v672
    %v714 = vadd.f32 %v646, %v672
    %v715 = vadd.f32 %v647, %v672
    %v716 = vadd.f32 %v648, %v672
    %v717 = vadd.f32 %v649, %v672
    %v718 = vadd.f32 %v650, %v672
    %v719 = vadd.f32 %v651, %v672
    %v720 = vadd.f32 %v652, %v672
    %v721 = vadd.f32 %v653, %v672
    %v722 = vadd.f32 %v654, %v672
    %v723 = vadd.f32 %v655, %v672
    %v724 = vadd.f32 %v656, %v672
    %v725 = vadd.f32 %v657, %v672
    %v726 = vadd.f32 %v658, %v672
    %v727 = vadd.f32 %v659, %v672
    %v728 = vadd.f32 %v660, %v672
    %v729 = vadd.f32 %v661, %v672
    %v730 = vadd.f32 %v662, %v672
    %v731 = vadd.f32 %v663, %v672
    %v732 = vadd.f32 %v664, %v672
    %v733 = vadd.f32 %v665, %v672
    %v734 = vadd.f32 %v666, %v672
    %v735 = vadd.f32 %v667, %v672
    %v736 = vadd.f32 %v668, %v672
    %v737 = vadd.f32 %v669, %v672
    %v738 = vmax.f32 %v674, 0.0
    %v739 = vmax.f32 %v675, 0.0
    %v740 = vmax.f32 %v676, 0.0
    %v741 = vmax.f32 %v677, 0.0
    %v742 = vmax.f32 %v678, 0.0
    %v743 = vmax.f32 %v679, 0.0
    %v744 = vmax.f32 %v680, 0.0
    %v745 = vmax.f32 %v681, 0.0
    %v746 = vmax.f32 %v682, 0.0
    %v747 = vmax.f32 %v683, 0.0
    %v748 = vmax.f32 %v684, 0.0
    %v749 = vmax.f32 %v685, 0.0
    %v750 = vmax.f32 %v686, 0.0
    %v751 = vmax.f32 %v687, 0.0
    %v752 = vmax.f32 %v688, 0.0
    %v753 = vmax.f32 %v689, 0.0
    %v754 = vmax.f32 %v690, 0.0
    %v755 = vmax.f32 %v691, 0.0
    %v756 = vmax.f32 %v692, 0.0
    %v757 = vmax.f32 %v693, 0.0
    %v758 = vmax.f32 %v694, 0.0
    %v759 = vmax.f32 %v695, 0.0
    %v760 = vmax.f32 %v696, 0.0
    %v761 = vmax.f32 %v697, 0.0
    %v762 = vmax.f32 %v698, 0.0
    %v763 = vmax.f32 %v699, 0.0
    %v764 = vmax.f32 %v700, 0.0
    %v765 = vmax.f32 %v701, 0.0
    %v766 = vmax.f32 %v702, 0.0
    %v767 = vmax.f32 %v703, 0.0
    %v768 = vmax.f32 %v704, 0.0
    %v769 = vmax.f32 %v705, 0.0
    %v770 = vmax.f32 %v706, 0.0
    %v771 = vmax.f32 %v707, 0.0
    %v772 = vmax.f32 %v708, 0.0
    %v773 = vmax.f32 %v709, 0.0
    %v774 = vmax.f32 %v710, 0.0
    %v775 = vmax.f32 %v711, 0.0
    %v776 = vmax.f32 %v712, 0.0
    %v777 = vmax.f32 %v713, 0.0
    %v778 = vmax.f32 %v714, 0.0
    %v779 = vmax.f32 %v715, 0.0
    %v780 = vmax.f32 %v716, 0.0
    %v781 = vmax.f32 %v717, 0.0
    %v782 = vmax.f32 %v718, 0.0
    %v783 = vmax.f32 %v719, 0.0
    %v784 = vmax.f32 %v720, 0.0
    %v785 = vmax.f32 %v721, 0.0
    %v786 = vmax.f32 %v722, 0.0
    %v787 = vmax.f32 %v723, 0.0
    %v788 = vmax.f32 %v724, 0.0
    %v789 = vmax.f32 %v725, 0.0
    %v790 = vmax.f32 %v726, 0.0
    %v791 = vmax.f32 %v727, 0.0
    %v792 = vmax.f32 %v728, 0.0
    %v793 = vmax.f32 %v729, 0.0
    %v794 = vmax.f32 %v730, 0.0
    %v795 = vmax.f32 %v731, 0.0
    %v796 = vmax.f32 %v732, 0.0
    %v797 = vmax.f32 %v733, 0.0
    %v798 = vmax.f32 %v734, 0.0
    %v799 = vmax.f32 %v735, 0.0
    %v800 = vmax.f32 %v736, 0.0
    %v801 = vmax.f32 %v737, 0.0
    %v802 = vpack.c.bf16 %v738, %v738
    %v803 = vpack.c.bf16 %v739, %v739
    %v804 = vpack.c.bf16 %v740, %v740
    %v805 = vpack.c.bf16 %v741, %v741
    %v806 = vpack.c.bf16 %v742, %v742
    %v807 = vpack.c.bf16 %v743, %v743
    %v808 = vpack.c.bf16 %v744, %v744
    %v809 = vpack.c.bf16 %v745, %v745
    %v810 = vpack.c.bf16 %v746, %v746
    %v811 = vpack.c.bf16 %v747, %v747
    %v812 = vpack.c.bf16 %v748, %v748
    %v813 = vpack.c.bf16 %v749, %v749
    %v814 = vpack.c.bf16 %v750, %v750
    %v815 = vpack.c.bf16 %v751, %v751
    %v816 = vpack.c.bf16 %v752, %v752
    %v817 = vpack.c.bf16 %v753, %v753
    %v818 = vpack.c.bf16 %v754, %v754
    %v819 = vpack.c.bf16 %v755, %v755
    %v820 = vpack.c.bf16 %v756, %v756
    %v821 = vpack.c.bf16 %v757, %v757
    %v822 = vpack.c.bf16 %v758, %v758
    %v823 = vpack.c.bf16 %v759, %v759
    %v824 = vpack.c.bf16 %v760, %v760
    %v825 = vpack.c.bf16 %v761, %v761
    %v826 = vpack.c.bf16 %v762, %v762
    %v827 = vpack.c.bf16 %v763, %v763
    %v828 = vpack.c.bf16 %v764, %v764
    %v829 = vpack.c.bf16 %v765, %v765
    %v830 = vpack.c.bf16 %v766, %v766
    %v831 = vpack.c.bf16 %v767, %v767
    %v832 = vpack.c.bf16 %v768, %v768
    %v833 = vpack.c.bf16 %v769, %v769
    %v834 = vpack.c.bf16 %v770, %v770
    %v835 = vpack.c.bf16 %v771, %v771
    %v836 = vpack.c.bf16 %v772, %v772
    %v837 = vpack.c.bf16 %v773, %v773
    %v838 = vpack.c.bf16 %v774, %v774
    %v839 = vpack.c.bf16 %v775, %v775
    %v840 = vpack.c.bf16 %v776, %v776
    %v841 = vpack.c.bf16 %v777, %v777
    %v842 = vpack.c.bf16 %v778, %v778
    %v843 = vpack.c.bf16 %v779, %v779
    %v844 = vpack.c.bf16 %v780, %v780
    %v845 = vpack.c.bf16 %v781, %v781
    %v846 = vpack.c.bf16 %v782, %v782
    %v847 = vpack.c.bf16 %v783, %v783
    %v848 = vpack.c.bf16 %v784, %v784
    %v849 = vpack.c.bf16 %v785, %v785
    %v850 = vpack.c.bf16 %v786, %v786
    %v851 = vpack.c.bf16 %v787, %v787
    %v852 = vpack.c.bf16 %v788, %v788
    %v853 = vpack.c.bf16 %v789, %v789
    %v854 = vpack.c.bf16 %v790, %v790
    %v855 = vpack.c.bf16 %v791, %v791
    %v856 = vpack.c.bf16 %v792, %v792
    %v857 = vpack.c.bf16 %v793, %v793
    %v858 = vpack.c.bf16 %v794, %v794
    %v859 = vpack.c.bf16 %v795, %v795
    %v860 = vpack.c.bf16 %v796, %v796
    %v861 = vpack.c.bf16 %v797, %v797
    %v862 = vpack.c.bf16 %v798, %v798
    %v863 = vpack.c.bf16 %v799, %v799
    %v864 = vpack.c.bf16 %v800, %v800
    %v865 = vpack.c.bf16 %v801, %v801
    %866 = vst [vmem:[%s3] sm:$0xf] %v802
    %867 = vst [vmem:[%s3 + $0x4] sm:$0xf] %v803
    %868 = vst [vmem:[%s3 + $0x8] sm:$0xf] %v804
    %869 = vst [vmem:[%s3 + $0xc] sm:$0xf] %v805
    %870 = vst [vmem:[%s3 + $0x10] sm:$0xf] %v806
    %871 = vst [vmem:[%s3 + $0x14] sm:$0xf] %v807
    %872 = vst [vmem:[%s3 + $0x18] sm:$0xf] %v808
    %873 = vst [vmem:[%s3 + $0x1c] sm:$0xf] %v809
    %874 = vst [vmem:[%s3 + $0x20] sm:$0xf] %v810
    %875 = vst [vmem:[%s3 + $0x24] sm:$0xf] %v811
    %876 = vst [vmem:[%s3 + $0x28] sm:$0xf] %v812
    %877 = vst [vmem:[%s3 + $0x2c] sm:$0xf] %v813
    %878 = vst [vmem:[%s3 + $0x30] sm:$0xf] %v814
    %879 = vst [vmem:[%s3 + $0x34] sm:$0xf] %v815
    %880 = vst [vmem:[%s3 + $0x38] sm:$0xf] %v816
    %881 = vst [vmem:[%s3 + $0x3c] sm:$0xf] %v817
    %882 = vst [vmem:[%s3 + $0x40] sm:$0xf] %v818
    %883 = vst [vmem:[%s3 + $0x44] sm:$0xf] %v819
    %884 = vst [vmem:[%s3 + $0x48] sm:$0xf] %v820
    %885 = vst [vmem:[%s3 + $0x4c] sm:$0xf] %v821
    %886 = vst [vmem:[%s3 + $0x50] sm:$0xf] %v822
    %887 = vst [vmem:[%s3 + $0x54] sm:$0xf] %v823
    %888 = vst [vmem:[%s3 + $0x58] sm:$0xf] %v824
    %889 = vst [vmem:[%s3 + $0x5c] sm:$0xf] %v825
    %890 = vst [vmem:[%s3 + $0x60] sm:$0xf] %v826
    %891 = vst [vmem:[%s3 + $0x64] sm:$0xf] %v827
    %892 = vst [vmem:[%s3 + $0x68] sm:$0xf] %v828
    %893 = vst [vmem:[%s3 + $0x6c] sm:$0xf] %v829
    %894 = vst [vmem:[%s3 + $0x70] sm:$0xf] %v830
    %895 = vst [vmem:[%s3 + $0x74] sm:$0xf] %v831
    %896 = vst [vmem:[%s3 + $0x78] sm:$0xf] %v832
    %897 = vst [vmem:[%s3 + $0x7c] sm:$0xf] %v833
    %898 = vst [vmem:[%s3 + $0x80] sm:$0xf] %v834
    %899 = vst [vmem:[%s3 + $0x84] sm:$0xf] %v835
    %900 = vst [vmem:[%s3 + $0x88] sm:$0xf] %v836
    %901 = vst [vmem:[%s3 + $0x8c] sm:$0xf] %v837
    %902 = vst [vmem:[%s3 + $0x90] sm:$0xf] %v838
    %903 = vst [vmem:[%s3 + $0x94] sm:$0xf] %v839
    %904 = vst [vmem:[%s3 + $0x98] sm:$0xf] %v840
    %905 = vst [vmem:[%s3 + $0x9c] sm:$0xf] %v841
    %906 = vst [vmem:[%s3 + $0xa0] sm:$0xf] %v842
    %907 = vst [vmem:[%s3 + $0xa4] sm:$0xf] %v843
    %908 = vst [vmem:[%s3 + $0xa8] sm:$0xf] %v844
    %909 = vst [vmem:[%s3 + $0xac] sm:$0xf] %v845
    %910 = vst [vmem:[%s3 + $0xb0] sm:$0xf] %v846
    %911 = vst [vmem:[%s3 + $0xb4] sm:$0xf] %v847
    %912 = vst [vmem:[%s3 + $0xb8] sm:$0xf] %v848
    %913 = vst [vmem:[%s3 + $0xbc] sm:$0xf] %v849
    %914 = vst [vmem:[%s3 + $0xc0] sm:$0xf] %v850
    %915 = vst [vmem:[%s3 + $0xc4] sm:$0xf] %v851
    %916 = vst [vmem:[%s3 + $0xc8] sm:$0xf] %v852
    %917 = vst [vmem:[%s3 + $0xcc] sm:$0xf] %v853
    %918 = vst [vmem:[%s3 + $0xd0] sm:$0xf] %v854
    %919 = vst [vmem:[%s3 + $0xd4] sm:$0xf] %v855
    %920 = vst [vmem:[%s3 + $0xd8] sm:$0xf] %v856
    %921 = vst [vmem:[%s3 + $0xdc] sm:$0xf] %v857
    %922 = vst [vmem:[%s3 + $0xe0] sm:$0xf] %v858
    %923 = vst [vmem:[%s3 + $0xe4] sm:$0xf] %v859
    %924 = vst [vmem:[%s3 + $0xe8] sm:$0xf] %v860
    %925 = vst [vmem:[%s3 + $0xec] sm:$0xf] %v861
    %926 = vst [vmem:[%s3 + $0xf0] sm:$0xf] %v862
    %927 = vst [vmem:[%s3 + $0xf4] sm:$0xf] %v863
    %928 = vst [vmem:[%s3 + $0xf8] sm:$0xf] %v864
    %929 = vst [vmem:[%s3 + $0xfc] sm:$0xf] %v865
  $region21: #{bottleneck_forward.3} parent=0 // pred_fallthru
    _
  // Predicated region
  $region22: #{bottleneck_forward.3} parent=0 // pred_check
    _
  $region23: #{bottleneck_forward.3} parent=0 // pred_check_branch
    %931 = sbr.rel (0) target = $region25
  $region24: #{bottleneck_forward.3} parent=0 // pred_region
    _
  $region25: #{bottleneck_forward.3} parent=0 // pred_fallthru
    _
  // Predicated region
  $region26: #{bottleneck_forward.3} parent=0 // pred_check
    _
  $region27: #{bottleneck_forward.3} parent=0 // pred_check_branch
    %933 = sbr.rel (0) target = $region29
  $region28: #{bottleneck_forward.3} parent=0 // pred_region
    _
  $region29: #{bottleneck_forward.3} parent=0 // pred_fallthru
    _

// kernel: bottleneck_forward.5
$region0: #{bottleneck_forward.5}
  #allocation0 [shape = 'u32[]', space=smem, size = 0x4, offset = 0x4, fixed_abs, tag = 'smem constant byte address 0x4 - core index']
  #allocation1 [shape = 'u32[72,128]{1,0:T(1,128)}', space=vmem, size = 0x9000, scoped, tag = 'internal scratch']
  %s0 = inlined_call_operand.vmem [shape: bf16[512,128], index: 0, kind: input, shape index: {}]
  %s1 = inlined_call_operand.vmem [shape: bf16[128,128], index: 1, kind: input, shape index: {}]
  %s2 = inlined_call_operand.vmem [shape: f32[512,128], index: 2, kind: input, shape index: {}]
  %s3 = inlined_call_operand.vmem [shape: bf16[128,128], index: 3, kind: input, shape index: {}]
  %s4 = inlined_call_operand.vmem [shape: f32[1,128], index: 4, kind: input, shape index: {}]
  %s5 = inlined_call_operand.vmem [shape: f32[512,128], index: 5, kind: output, shape index: {}]
  %s6 = sld [smem:[#allocation0]]
  $region53: #{bottleneck_forward.5} parent=0
    _
  %s8 = ssub.s32 1, %s6
  %s9 = scalar_select 0, %s8, %s6
  loop: start=0, step=1, limit=4
  $region2: #{bottleneck_forward.5} parent=0 // loop_pre_header
    _
  $region3: #{bottleneck_forward.5} parent=0 // loop_header
    %s11 = sphi 0, %s15
    %p12 = scmp.ge.s32.totalorder %s11, 4
    %s18 = sphi 0, %s30
    %s19 = sphi 0, %s26
    %s20 = sphi 0, %s18
    %s21 = sphi 0, %s19
    %s22 = sphi 0, %s20
    %s23 = sphi 0, %s21
    %s33 = sphi 0, %s35
    %s36 = sphi 0, %s33
    %s37 = sphi 0, %s36
    %s53 = sphi 0, %s37
    %s59 = sphi 0, %s61
    %s62 = sphi 0, %s59
    %s63 = sphi 0, %s62
    %s79 = sphi 0, %s63
    %s85 = sphi 0, %s87
    %s88 = sphi 0, %s85
    %s89 = sphi 0, %s88
    %s105 = sphi 0, %s89
    %s111 = sphi 0, %s113
    %s114 = sphi 0, %s111
    %s115 = sphi 0, %s114
    %s131 = sphi 0, %s115
    %s137 = sphi 0, %s139
    %s140 = sphi 0, %s137
    %s141 = sphi 0, %s140
    %s157 = sphi 0, %s141
    %s165 = sphi 0, %s167
    %s168 = sphi 0, %s165
    %s169 = sphi 0, %s168
    %s185 = sphi 0, %s169
  $region4: #{bottleneck_forward.5} parent=0 // loop_header_branch
    %14 = sbr.rel (%p12) target = $region8
  $region5: #{bottleneck_forward.5} parent=0 // loop_body
    %s16 = ssub.s32 %s11, 1
    %s17 = ssub.s32 %s11, 2
    %s24 = sadd.s32 1, %s19
    %p25 = scmp.ge.s32.totalorder %s24, 1
    %s26 = scalar_select %p25, 0, %s24
    %s27 = sadd.s32 1, %s18
    %s28 = scalar_select %p25, %s27, %s18
    %p29 = scmp.ge.s32.totalorder %s28, 2
    %s30 = scalar_select %p29, 0, %s28
    %s31 = ssub.s32 %s18, %s30
    %p32 = scmp.eq.s32.totalorder %s31, 0
    %s34 = sadd.s32 %s33, 1
    %s35 = scalar_select %p32, %s33, %s34
    %p38 = pneg %p32
    %p39 = scmp.eq.s32.totalorder %s11, 1
    %p40 = por %p38, %p39
    %p41 = scmp.ne.s32.totalorder %s33, %s36
    %p42 = scmp.eq.s32.totalorder %s11, 0
    %p43 = por %p41, %p42
    %p44 = scmp.ne.s32.totalorder %s33, %s36
    %p45 = scmp.eq.s32.totalorder %s16, 1
    %p46 = por %p44, %p45
    %p47 = scmp.ne.s32.totalorder %s36, %s37
    %p48 = scmp.eq.s32.totalorder %s16, 0
    %p49 = por %p47, %p48
    %p50 = scmp.ne.s32.totalorder %s36, %s37
    %p51 = scmp.eq.s32.totalorder %s17, 1
    %p52 = por %p50, %p51
    %p54 = scmp.ne.s32.totalorder %s37, %s53
    %p55 = scmp.eq.s32.totalorder %s17, 0
    %p56 = por %p54, %p55
    %s57 = ssub.s32 %s19, %s26
    %p58 = scmp.eq.s32.totalorder %s57, 0
    %s60 = sadd.s32 %s59, 1
    %s61 = scalar_select %p58, %s59, %s60
    %p64 = pneg %p58
    %p65 = scmp.eq.s32.totalorder %s11, 1
    %p66 = por %p64, %p65
    %p67 = scmp.ne.s32.totalorder %s59, %s62
    %p68 = scmp.eq.s32.totalorder %s11, 0
    %p69 = por %p67, %p68
    %p70 = scmp.ne.s32.totalorder %s59, %s62
    %p71 = scmp.eq.s32.totalorder %s16, 1
    %p72 = por %p70, %p71
    %p73 = scmp.ne.s32.totalorder %s62, %s63
    %p74 = scmp.eq.s32.totalorder %s16, 0
    %p75 = por %p73, %p74
    %p76 = scmp.ne.s32.totalorder %s62, %s63
    %p77 = scmp.eq.s32.totalorder %s17, 1
    %p78 = por %p76, %p77
    %p80 = scmp.ne.s32.totalorder %s63, %s79
    %p81 = scmp.eq.s32.totalorder %s17, 0
    %p82 = por %p80, %p81
    %s83 = ssub.s32 %s18, %s30
    %p84 = scmp.eq.s32.totalorder %s83, 0
    %s86 = sadd.s32 %s85, 1
    %s87 = scalar_select %p84, %s85, %s86
    %p90 = pneg %p84
    %p91 = scmp.eq.s32.totalorder %s11, 1
    %p92 = por %p90, %p91
    %p93 = scmp.ne.s32.totalorder %s85, %s88
    %p94 = scmp.eq.s32.totalorder %s11, 0
    %p95 = por %p93, %p94
    %p96 = scmp.ne.s32.totalorder %s85, %s88
    %p97 = scmp.eq.s32.totalorder %s16, 1
    %p98 = por %p96, %p97
    %p99 = scmp.ne.s32.totalorder %s88, %s89
    %p100 = scmp.eq.s32.totalorder %s16, 0
    %p101 = por %p99, %p100
    %p102 = scmp.ne.s32.totalorder %s88, %s89
    %p103 = scmp.eq.s32.totalorder %s17, 1
    %p104 = por %p102, %p103
    %p106 = scmp.ne.s32.totalorder %s89, %s105
    %p107 = scmp.eq.s32.totalorder %s17, 0
    %p108 = por %p106, %p107
    %s109 = ssub.s32 %s19, %s26
    %p110 = scmp.eq.s32.totalorder %s109, 0
    %s112 = sadd.s32 %s111, 1
    %s113 = scalar_select %p110, %s111, %s112
    %p116 = pneg %p110
    %p117 = scmp.eq.s32.totalorder %s11, 1
    %p118 = por %p116, %p117
    %p119 = scmp.ne.s32.totalorder %s111, %s114
    %p120 = scmp.eq.s32.totalorder %s11, 0
    %p121 = por %p119, %p120
    %p122 = scmp.ne.s32.totalorder %s111, %s114
    %p123 = scmp.eq.s32.totalorder %s16, 1
    %p124 = por %p122, %p123
    %p125 = scmp.ne.s32.totalorder %s114, %s115
    %p126 = scmp.eq.s32.totalorder %s16, 0
    %p127 = por %p125, %p126
    %p128 = scmp.ne.s32.totalorder %s114, %s115
    %p129 = scmp.eq.s32.totalorder %s17, 1
    %p130 = por %p128, %p129
    %p132 = scmp.ne.s32.totalorder %s115, %s131
    %p133 = scmp.eq.s32.totalorder %s17, 0
    %p134 = por %p132, %p133
    %s135 = ssub.s32 %s19, %s26
    %p136 = scmp.eq.s32.totalorder %s135, 0
    %s138 = sadd.s32 %s137, 1
    %s139 = scalar_select %p136, %s137, %s138
    %p142 = pneg %p136
    %p143 = scmp.eq.s32.totalorder %s11, 1
    %p144 = por %p142, %p143
    %p145 = scmp.ne.s32.totalorder %s137, %s140
    %p146 = scmp.eq.s32.totalorder %s11, 0
    %p147 = por %p145, %p146
    %p148 = scmp.ne.s32.totalorder %s137, %s140
    %p149 = scmp.eq.s32.totalorder %s16, 1
    %p150 = por %p148, %p149
    %p151 = scmp.ne.s32.totalorder %s140, %s141
    %p152 = scmp.eq.s32.totalorder %s16, 0
    %p153 = por %p151, %p152
    %p154 = scmp.ne.s32.totalorder %s140, %s141
    %p155 = scmp.eq.s32.totalorder %s17, 1
    %p156 = por %p154, %p155
    %p158 = scmp.ne.s32.totalorder %s141, %s157
    %p159 = scmp.eq.s32.totalorder %s17, 0
    %p160 = por %p158, %p159
    %s161 = ssub.s32 %s18, %s30
    %s162 = ssub.s32 %s19, %s26
    %s163 = sor.u32 %s161, %s162
    %p164 = scmp.eq.s32.totalorder %s163, 0
    %s166 = sadd.s32 %s165, 1
    %s167 = scalar_select %p164, %s165, %s166
    %p170 = pneg %p164
    %p171 = scmp.eq.s32.totalorder %s11, 1
    %p172 = por %p170, %p171
    %p173 = scmp.ne.s32.totalorder %s165, %s168
    %p174 = scmp.eq.s32.totalorder %s11, 0
    %p175 = por %p173, %p174
    %p176 = scmp.ne.s32.totalorder %s165, %s168
    %p177 = scmp.eq.s32.totalorder %s16, 1
    %p178 = por %p176, %p177
    %p179 = scmp.ne.s32.totalorder %s168, %s169
    %p180 = scmp.eq.s32.totalorder %s16, 0
    %p181 = por %p179, %p180
    %p182 = scmp.ne.s32.totalorder %s168, %s169
    %p183 = scmp.eq.s32.totalorder %s17, 1
    %p184 = por %p182, %p183
    %p186 = scmp.ne.s32.totalorder %s169, %s185
    %p187 = scmp.eq.s32.totalorder %s17, 0
    %p188 = por %p186, %p187
    %p189 = scmp.le.s32.totalorder 1, %s11
    %p190 = scmp.lt.s32.totalorder %s11, 3
    %p191 = pnand %p189, %p190
    %p192 = pneg %p191
    // Predicated region
    $region9: #{bottleneck_forward.5} parent=5 // pred_check
      _
    $region10: #{bottleneck_forward.5} parent=5 // pred_check_branch
      %194 = sbr.rel (%p191) target = $region12
    $region11: #{bottleneck_forward.5} parent=5 // pred_region
      %s195 = ssub.s32 %s11, 1
      // Predicated region
      $region13: #{bottleneck_forward.5} parent=11 // pred_check
        %p196 = pneg %p75
      $region14: #{bottleneck_forward.5} parent=11 // pred_check_branch
        %198 = sbr.rel (%p196) target = $region16
      $region15: #{bottleneck_forward.5} parent=11 // pred_region
        %p199 = scmp.lt.s32.totalorder %s21, 0
        %s200 = scalar_select %p199, %s21, 0
        %s201 = smul.addr %s200, 4
        %s202 = scalar_lea.vmem %s1, %s201
      $region16: #{bottleneck_forward.5} parent=11 // pred_fallthru
        _
      // Predicated region
      $region17: #{bottleneck_forward.5} parent=11 // pred_check
        %p203 = pneg %p127
      $region18: #{bottleneck_forward.5} parent=11 // pred_check_branch
        %205 = sbr.rel (%p203) target = $region20
      $region19: #{bottleneck_forward.5} parent=11 // pred_region
        %p206 = scmp.lt.s32.totalorder %s21, 0
        %s207 = scalar_select %p206, %s21, 0
        %s208 = smul.addr %s207, 4
        %s209 = scalar_lea.vmem %s3, %s208
      $region20: #{bottleneck_forward.5} parent=11 // pred_fallthru
        _
      // Predicated region
      $region21: #{bottleneck_forward.5} parent=11 // pred_check
        %p210 = pneg %p153
      $region22: #{bottleneck_forward.5} parent=11 // pred_check_branch
        %212 = sbr.rel (%p210) target = $region24
      $region23: #{bottleneck_forward.5} parent=11 // pred_region
        %p213 = scmp.lt.s32.totalorder %s21, 0
        %s214 = scalar_select %p213, %s21, 0
        %s215 = scalar_lea.vmem %s4, %s214
      $region24: #{bottleneck_forward.5} parent=11 // pred_fallthru
        _
    $region12: #{bottleneck_forward.5} parent=5 // pred_fallthru
      _
    %p216 = scmp.lt.s32.totalorder %s11, 2
    // Predicated region
    $region25: #{bottleneck_forward.5} parent=5 // pred_check
      %p217 = pneg %p216
    $region26: #{bottleneck_forward.5} parent=5 // pred_check_branch
      %219 = sbr.rel (%p217) target = $region28
    $region27: #{bottleneck_forward.5} parent=5 // pred_region
      // Predicated region
      $region29: #{bottleneck_forward.5} parent=27 // pred_check
        %p220 = pneg %p43
      $region30: #{bottleneck_forward.5} parent=27 // pred_check_branch
        %222 = sbr.rel (%p220) target = $region32
      $region31: #{bottleneck_forward.5} parent=27 // pred_region
        %s223 = smul.u32 32, %s18
        %p224 = scmp.lt.s32.totalorder %s223, 63
        %s225 = scalar_select %p224, %s223, 63
        %s226 = smul.addr %s225, 4
        %s227 = scalar_lea.vmem %s0, %s226
        %s228 = smul.u32 32, %s18
      $region32: #{bottleneck_forward.5} parent=27 // pred_fallthru
        _
      // Predicated region
      $region33: #{bottleneck_forward.5} parent=27 // pred_check
        %p229 = pneg %p95
      $region34: #{bottleneck_forward.5} parent=27 // pred_check_branch
        %231 = sbr.rel (%p229) target = $region36
      $region35: #{bottleneck_forward.5} parent=27 // pred_region
        %s232 = smul.u32 32, %s18
        %p233 = scmp.lt.s32.totalorder %s232, 63
        %s234 = scalar_select %p233, %s232, 63
        %s235 = smul.addr %s234, 8
        %s236 = scalar_lea.vmem %s2, %s235
        %s237 = smul.u32 32, %s18
      $region36: #{bottleneck_forward.5} parent=27 // pred_fallthru
        _
    $region28: #{bottleneck_forward.5} parent=5 // pred_fallthru
      _
    %p238 = scmp.le.s32.totalorder 1, %s11
    %p239 = scmp.lt.s32.totalorder %s11, 3
    %p240 = pnand %p238, %p239
    %p241 = pneg %p240
    // Predicated region
    $region37: #{bottleneck_forward.5} parent=5 // pred_check
      _
    $region38: #{bottleneck_forward.5} parent=5 // pred_check_branch
      %243 = sbr.rel (%p240) target = $region40
    $region39: #{bottleneck_forward.5} parent=5 // pred_region
      %s244 = ssub.s32 %s11, 1
      %s245 = smul.u32 32, %s20
      %p246 = scmp.lt.s32.totalorder %s245, 63
      %s247 = scalar_select %p246, %s245, 63
      %s248 = smul.addr %s247, 4
      %s249 = scalar_lea.vmem %s0, %s248
      %p250 = pneg %p49
      %p251 = pneg %p46
      %p252 = scmp.lt.s32.totalorder %s21, 0
      %s253 = scalar_select %p252, %s21, 0
      %s254 = smul.addr %s253, 4
      %s255 = scalar_lea.vmem %s1, %s254
      %p256 = pneg %p75
      %p257 = pneg %p72
      %s258 = smul.u32 32, %s20
      %p259 = scmp.lt.s32.totalorder %s258, 63
      %s260 = scalar_select %p259, %s258, 63
      %s261 = smul.addr %s260, 8
      %s262 = scalar_lea.vmem %s2, %s261
      %p263 = pneg %p101
      %p264 = pneg %p98
      %p265 = scmp.lt.s32.totalorder %s21, 0
      %s266 = scalar_select %p265, %s21, 0
      %s267 = smul.addr %s266, 4
      %s268 = scalar_lea.vmem %s3, %s267
      %p269 = pneg %p127
      %p270 = pneg %p124
      %p271 = scmp.lt.s32.totalorder %s21, 0
      %s272 = scalar_select %p271, %s21, 0
      %s273 = scalar_lea.vmem %s4, %s272
      %p274 = pneg %p153
      %p275 = pneg %p150
      %p276 = pneg %p181
      %p277 = pneg %p178
      %s278 = smul.u32 32, %s20
      %p279 = scmp.lt.s32.totalorder %s278, 63
      %s280 = scalar_select %p279, %s278, 63
      %p281 = scmp.lt.s32.totalorder %s21, 0
      %s282 = scalar_select %p281, %s21, 0
      %s283 = sadd.s32 %s282, %s280
      %s284 = smul.addr %s283, 8
      %s285 = scalar_lea.vmem %s5, %s284
      %s286 = smul.u32 32, %s20
      %p287 = scmp.lt.s32.totalorder %s286, 63
      %s288 = scalar_select %p287, %s286, 63
      %s289 = smul.addr %s288, 4
      %s290 = scalar_lea.vmem %s0, %s289
      %s291 = smul.u32 32, %s20
      %p292 = scmp.lt.s32.totalorder %s21, 0
      %s293 = scalar_select %p292, %s21, 0
      %s294 = smul.addr %s293, 4
      %s295 = scalar_lea.vmem %s1, %s294
      %s296 = smul.u32 32, %s20
      %p297 = scmp.lt.s32.totalorder %s296, 63
      %s298 = scalar_select %p297, %s296, 63
      %s299 = smul.addr %s298, 8
      %s300 = scalar_lea.vmem %s2, %s299
      %s301 = smul.u32 32, %s20
      %p302 = scmp.lt.s32.totalorder %s21, 0
      %s303 = scalar_select %p302, %s21, 0
      %s304 = smul.addr %s303, 4
      %s305 = scalar_lea.vmem %s3, %s304
      %p306 = scmp.lt.s32.totalorder %s21, 0
      %s307 = scalar_select %p306, %s21, 0
      %s308 = scalar_lea.vmem %s4, %s307
      %s309 = smul.u32 32, %s20
      %p310 = scmp.lt.s32.totalorder %s309, 63
      %s311 = scalar_select %p310, %s309, 63
      %p312 = scmp.lt.s32.totalorder %s21, 0
      %s313 = scalar_select %p312, %s21, 0
      %s314 = sadd.s32 %s313, %s311
      %s315 = smul.addr %s314, 8
      %s316 = scalar_lea.vmem %s5, %s315
      %s317 = smul.u32 32, %s20
      %v318 = vld [vmem:[%s290] sm:$0xf]
      %v319 = vld [vmem:[%s290 + $0x4] sm:$0xf]
      %v320 = vld [vmem:[%s290 + $0x8] sm:$0xf]
      %v321 = vld [vmem:[%s290 + $0xc] sm:$0xf]
      %v322 = vld [vmem:[%s290 + $0x10] sm:$0xf]
      %v323 = vld [vmem:[%s290 + $0x14] sm:$0xf]
      %v324 = vld [vmem:[%s290 + $0x18] sm:$0xf]
      %v325 = vld [vmem:[%s290 + $0x1c] sm:$0xf]
      %v326 = vld [vmem:[%s290 + $0x20] sm:$0xf]
      %v327 = vld [vmem:[%s290 + $0x24] sm:$0xf]
      %v328 = vld [vmem:[%s290 + $0x28] sm:$0xf]
      %v329 = vld [vmem:[%s290 + $0x2c] sm:$0xf]
      %v330 = vld [vmem:[%s290 + $0x30] sm:$0xf]
      %v331 = vld [vmem:[%s290 + $0x34] sm:$0xf]
      %v332 = vld [vmem:[%s290 + $0x38] sm:$0xf]
      %v333 = vld [vmem:[%s290 + $0x3c] sm:$0xf]
      %v334 = vld [vmem:[%s290 + $0x40] sm:$0xf]
      %v335 = vld [vmem:[%s290 + $0x44] sm:$0xf]
      %v336 = vld [vmem:[%s290 + $0x48] sm:$0xf]
      %v337 = vld [vmem:[%s290 + $0x4c] sm:$0xf]
      %v338 = vld [vmem:[%s290 + $0x50] sm:$0xf]
      %v339 = vld [vmem:[%s290 + $0x54] sm:$0xf]
      %v340 = vld [vmem:[%s290 + $0x58] sm:$0xf]
      %v341 = vld [vmem:[%s290 + $0x5c] sm:$0xf]
      %v342 = vld [vmem:[%s290 + $0x60] sm:$0xf]
      %v343 = vld [vmem:[%s290 + $0x64] sm:$0xf]
      %v344 = vld [vmem:[%s290 + $0x68] sm:$0xf]
      %v345 = vld [vmem:[%s290 + $0x6c] sm:$0xf]
      %v346 = vld [vmem:[%s290 + $0x70] sm:$0xf]
      %v347 = vld [vmem:[%s290 + $0x74] sm:$0xf]
      %v348 = vld [vmem:[%s290 + $0x78] sm:$0xf]
      %v349 = vld [vmem:[%s290 + $0x7c] sm:$0xf]
      %v350 = vld [vmem:[%s295] sm:$0xf]
      %v351 = vld [vmem:[%s295 + $0x4] sm:$0xf]
      %v352 = vld [vmem:[%s295 + $0x8] sm:$0xf]
      %v353 = vld [vmem:[%s295 + $0xc] sm:$0xf]
      %v354 = vld [vmem:[%s295 + $0x10] sm:$0xf]
      %v355 = vld [vmem:[%s295 + $0x14] sm:$0xf]
      %v356 = vld [vmem:[%s295 + $0x18] sm:$0xf]
      %v357 = vld [vmem:[%s295 + $0x1c] sm:$0xf]
      %v358 = vld [vmem:[%s295 + $0x20] sm:$0xf]
      %v359 = vld [vmem:[%s295 + $0x24] sm:$0xf]
      %v360 = vld [vmem:[%s295 + $0x28] sm:$0xf]
      %v361 = vld [vmem:[%s295 + $0x2c] sm:$0xf]
      %v362 = vld [vmem:[%s295 + $0x30] sm:$0xf]
      %v363 = vld [vmem:[%s295 + $0x34] sm:$0xf]
      %v364 = vld [vmem:[%s295 + $0x38] sm:$0xf]
      %v365 = vld [vmem:[%s295 + $0x3c] sm:$0xf]
      %v366 = vld [vmem:[%s300] sm:$0xff]
      %v367 = vld [vmem:[%s300 + $0x8] sm:$0xff]
      %v368 = vld [vmem:[%s300 + $0x10] sm:$0xff]
      %v369 = vld [vmem:[%s300 + $0x18] sm:$0xff]
      %v370 = vld [vmem:[%s300 + $0x20] sm:$0xff]
      %v371 = vld [vmem:[%s300 + $0x28] sm:$0xff]
      %v372 = vld [vmem:[%s300 + $0x30] sm:$0xff]
      %v373 = vld [vmem:[%s300 + $0x38] sm:$0xff]
      %v374 = vld [vmem:[%s300 + $0x40] sm:$0xff]
      %v375 = vld [vmem:[%s300 + $0x48] sm:$0xff]
      %v376 = vld [vmem:[%s300 + $0x50] sm:$0xff]
      %v377 = vld [vmem:[%s300 + $0x58] sm:$0xff]
      %v378 = vld [vmem:[%s300 + $0x60] sm:$0xff]
      %v379 = vld [vmem:[%s300 + $0x68] sm:$0xff]
      %v380 = vld [vmem:[%s300 + $0x70] sm:$0xff]
      %v381 = vld [vmem:[%s300 + $0x78] sm:$0xff]
      %v382 = vld [vmem:[%s300 + $0x80] sm:$0xff]
      %v383 = vld [vmem:[%s300 + $0x88] sm:$0xff]
      %v384 = vld [vmem:[%s300 + $0x90] sm:$0xff]
      %v385 = vld [vmem:[%s300 + $0x98] sm:$0xff]
      %v386 = vld [vmem:[%s300 + $0xa0] sm:$0xff]
      %v387 = vld [vmem:[%s300 + $0xa8] sm:$0xff]
      %v388 = vld [vmem:[%s300 + $0xb0] sm:$0xff]
      %v389 = vld [vmem:[%s300 + $0xb8] sm:$0xff]
      %v390 = vld [vmem:[%s300 + $0xc0] sm:$0xff]
      %v391 = vld [vmem:[%s300 + $0xc8] sm:$0xff]
      %v392 = vld [vmem:[%s300 + $0xd0] sm:$0xff]
      %v393 = vld [vmem:[%s300 + $0xd8] sm:$0xff]
      %v394 = vld [vmem:[%s300 + $0xe0] sm:$0xff]
      %v395 = vld [vmem:[%s300 + $0xe8] sm:$0xff]
      %v396 = vld [vmem:[%s300 + $0xf0] sm:$0xff]
      %v397 = vld [vmem:[%s300 + $0xf8] sm:$0xff]
      %v398 = vpack.c.bf16 %v367, %v366
      %v399 = vpack.c.bf16 %v369, %v368
      %v400 = vpack.c.bf16 %v371, %v370
      %v401 = vpack.c.bf16 %v373, %v372
      %v402 = vpack.c.bf16 %v375, %v374
      %v403 = vpack.c.bf16 %v377, %v376
      %v404 = vpack.c.bf16 %v379, %v378
      %v405 = vpack.c.bf16 %v381, %v380
      %v406 = vpack.c.bf16 %v383, %v382
      %v407 = vpack.c.bf16 %v385, %v384
      %v408 = vpack.c.bf16 %v387, %v386
      %v409 = vpack.c.bf16 %v389, %v388
      %v410 = vpack.c.bf16 %v391, %v390
      %v411 = vpack.c.bf16 %v393, %v392
      %v412 = vpack.c.bf16 %v395, %v394
      %v413 = vpack.c.bf16 %v397, %v396
      %v414 = vld [vmem:[%s305] sm:$0xf]
      %v415 = vld [vmem:[%s305 + $0x4] sm:$0xf]
      %v416 = vld [vmem:[%s305 + $0x8] sm:$0xf]
      %v417 = vld [vmem:[%s305 + $0xc] sm:$0xf]
      %v418 = vld [vmem:[%s305 + $0x10] sm:$0xf]
      %v419 = vld [vmem:[%s305 + $0x14] sm:$0xf]
      %v420 = vld [vmem:[%s305 + $0x18] sm:$0xf]
      %v421 = vld [vmem:[%s305 + $0x1c] sm:$0xf]
      %v422 = vld [vmem:[%s305 + $0x20] sm:$0xf]
      %v423 = vld [vmem:[%s305 + $0x24] sm:$0xf]
      %v424 = vld [vmem:[%s305 + $0x28] sm:$0xf]
      %v425 = vld [vmem:[%s305 + $0x2c] sm:$0xf]
      %v426 = vld [vmem:[%s305 + $0x30] sm:$0xf]
      %v427 = vld [vmem:[%s305 + $0x34] sm:$0xf]
      %v428 = vld [vmem:[%s305 + $0x38] sm:$0xf]
      %v429 = vld [vmem:[%s305 + $0x3c] sm:$0xf]
      %v446 = vunpack.c.l.b16 %v414
      %v447 = vunpack.c.l.b16 %v415
      %v448 = vunpack.c.l.b16 %v416
      %v449 = vunpack.c.l.b16 %v417
      %v450 = vunpack.c.l.b16 %v418
      %v451 = vunpack.c.l.b16 %v419
      %v452 = vunpack.c.l.b16 %v420
      %v453 = vunpack.c.l.b16 %v421
      %v454 = vunpack.c.l.b16 %v422
      %v455 = vunpack.c.l.b16 %v423
      %v456 = vunpack.c.l.b16 %v424
      %v457 = vunpack.c.l.b16 %v425
      %v458 = vunpack.c.l.b16 %v426
      %v459 = vunpack.c.l.b16 %v427
      %v460 = vunpack.c.l.b16 %v428
      %v461 = vunpack.c.l.b16 %v429
      %v462 = vpack.c.b16 %v447, %v446
      %v463 = vpack.c.b16 %v449, %v448
      %v464 = vpack.c.b16 %v451, %v450
      %v465 = vpack.c.b16 %v453, %v452
      %v466 = vpack.c.b16 %v455, %v454
      %v467 = vpack.c.b16 %v457, %v456
      %v468 = vpack.c.b16 %v459, %v458
      %v469 = vpack.c.b16 %v461, %v460
      %478 = vmatpush.bf16.msra.mxu0 %v469
      %479 = vmatpush.bf16.msra.mxu0 %v468
      %480 = vmatpush.bf16.msra.mxu0 %v467
      %481 = vmatpush.bf16.msra.mxu0 %v466
      %482 = vmatpush.bf16.msra.mxu0 %v465
      %483 = vmatpush.bf16.msra.mxu0 %v464
      %484 = vmatpush.bf16.msra.mxu0 %v463
      %485 = vmatpush.bf16.msra.mxu0 %v462
      %486 = vmatmul.bf16.gmra.mxu0 %v398
      %v487 = vpop.f32.mrf.mxu0
      %v488 = vadd.f32 0.0, %v487
      %v489 = vpop.f32.mrf.mxu0
      %v490 = vadd.f32 0.0, %v489
      %491 = vmatmul.bf16.gmra.mxu0 %v399
      %v492 = vpop.f32.mrf.mxu0
      %v493 = vadd.f32 0.0, %v492
      %v494 = vpop.f32.mrf.mxu0
      %v495 = vadd.f32 0.0, %v494
      %496 = vmatmul.bf16.gmra.mxu0 %v400
      %v497 = vpop.f32.mrf.mxu0
      %v498 = vadd.f32 0.0, %v497
      %v499 = vpop.f32.mrf.mxu0
      %v500 = vadd.f32 0.0, %v499
      %501 = vmatmul.bf16.gmra.mxu0 %v401
      %v502 = vpop.f32.mrf.mxu0
      %v503 = vadd.f32 0.0, %v502
      %v504 = vpop.f32.mrf.mxu0
      %v505 = vadd.f32 0.0, %v504
      %506 = vmatmul.bf16.gmra.mxu0 %v402
      %v507 = vpop.f32.mrf.mxu0
      %v508 = vadd.f32 0.0, %v507
      %v509 = vpop.f32.mrf.mxu0
      %v510 = vadd.f32 0.0, %v509
      %511 = vmatmul.bf16.gmra.mxu0 %v403
      %v512 = vpop.f32.mrf.mxu0
      %v513 = vadd.f32 0.0, %v512
      %v514 = vpop.f32.mrf.mxu0
      %v515 = vadd.f32 0.0, %v514
      %516 = vmatmul.bf16.gmra.mxu0 %v404
      %v517 = vpop.f32.mrf.mxu0
      %v518 = vadd.f32 0.0, %v517
      %v519 = vpop.f32.mrf.mxu0
      %v520 = vadd.f32 0.0, %v519
      %521 = vmatmul.bf16.gmra.mxu0 %v405
      %v522 = vpop.f32.mrf.mxu0
      %v523 = vadd.f32 0.0, %v522
      %v524 = vpop.f32.mrf.mxu0
      %v525 = vadd.f32 0.0, %v524
      %526 = vmatmul.bf16.gmra.mxu0 %v406
      %v527 = vpop.f32.mrf.mxu0
      %v528 = vadd.f32 0.0, %v527
      %v529 = vpop.f32.mrf.mxu0
      %v530 = vadd.f32 0.0, %v529
      %531 = vmatmul.bf16.gmra.mxu0 %v407
      %v532 = vpop.f32.mrf.mxu0
      %v533 = vadd.f32 0.0, %v532
      %v534 = vpop.f32.mrf.mxu0
      %v535 = vadd.f32 0.0, %v534
      %536 = vmatmul.bf16.gmra.mxu0 %v408
      %v537 = vpop.f32.mrf.mxu0
      %v538 = vadd.f32 0.0, %v537
      %v539 = vpop.f32.mrf.mxu0
      %v540 = vadd.f32 0.0, %v539
      %541 = vmatmul.bf16.gmra.mxu0 %v409
      %v542 = vpop.f32.mrf.mxu0
      %v543 = vadd.f32 0.0, %v542
      %v544 = vpop.f32.mrf.mxu0
      %v545 = vadd.f32 0.0, %v544
      %546 = vmatmul.bf16.gmra.mxu0 %v410
      %v547 = vpop.f32.mrf.mxu0
      %v548 = vadd.f32 0.0, %v547
      %v549 = vpop.f32.mrf.mxu0
      %v550 = vadd.f32 0.0, %v549
      %551 = vmatmul.bf16.gmra.mxu0 %v411
      %v552 = vpop.f32.mrf.mxu0
      %v553 = vadd.f32 0.0, %v552
      %v554 = vpop.f32.mrf.mxu0
      %v555 = vadd.f32 0.0, %v554
      %556 = vmatmul.bf16.gmra.mxu0 %v412
      %v557 = vpop.f32.mrf.mxu0
      %v558 = vadd.f32 0.0, %v557
      %v559 = vpop.f32.mrf.mxu0
      %v560 = vadd.f32 0.0, %v559
      %561 = vmatmul.bf16.gmra.mxu0 %v413
      %v562 = vpop.f32.mrf.mxu0
      %v563 = vadd.f32 0.0, %v562
      %v564 = vpop.f32.mrf.mxu0
      %v565 = vadd.f32 0.0, %v564
      %566 = vdwg.mxu0
      %v599 = vunpack.c.l.b16 %v318
      %v600 = vunpack.c.l.b16 %v319
      %v601 = vunpack.c.l.b16 %v320
      %v602 = vunpack.c.l.b16 %v321
      %v603 = vunpack.c.l.b16 %v322
      %v604 = vunpack.c.l.b16 %v323
      %v605 = vunpack.c.l.b16 %v324
      %v606 = vunpack.c.l.b16 %v325
      %v607 = vunpack.c.l.b16 %v326
      %v608 = vunpack.c.l.b16 %v327
      %v609 = vunpack.c.l.b16 %v328
      %v610 = vunpack.c.l.b16 %v329
      %v611 = vunpack.c.l.b16 %v330
      %v612 = vunpack.c.l.b16 %v331
      %v613 = vunpack.c.l.b16 %v332
      %v614 = vunpack.c.l.b16 %v333
      %v615 = vunpack.c.l.b16 %v334
      %v616 = vunpack.c.l.b16 %v335
      %v617 = vunpack.c.l.b16 %v336
      %v618 = vunpack.c.l.b16 %v337
      %v619 = vunpack.c.l.b16 %v338
      %v620 = vunpack.c.l.b16 %v339
      %v621 = vunpack.c.l.b16 %v340
      %v622 = vunpack.c.l.b16 %v341
      %v623 = vunpack.c.l.b16 %v342
      %v624 = vunpack.c.l.b16 %v343
      %v625 = vunpack.c.l.b16 %v344
      %v626 = vunpack.c.l.b16 %v345
      %v627 = vunpack.c.l.b16 %v346
      %v628 = vunpack.c.l.b16 %v347
      %v629 = vunpack.c.l.b16 %v348
      %v630 = vunpack.c.l.b16 %v349
      %v631 = vpack.c.b16 %v600, %v599
      %v632 = vpack.c.b16 %v602, %v601
      %v633 = vpack.c.b16 %v604, %v603
      %v634 = vpack.c.b16 %v606, %v605
      %v635 = vpack.c.b16 %v608, %v607
      %v636 = vpack.c.b16 %v610, %v609
      %v637 = vpack.c.b16 %v612, %v611
      %v638 = vpack.c.b16 %v614, %v613
      %v639 = vpack.c.b16 %v616, %v615
      %v640 = vpack.c.b16 %v618, %v617
      %v641 = vpack.c.b16 %v620, %v619
      %v642 = vpack.c.b16 %v622, %v621
      %v643 = vpack.c.b16 %v624, %v623
      %v644 = vpack.c.b16 %v626, %v625
      %v645 = vpack.c.b16 %v628, %v627
      %v646 = vpack.c.b16 %v630, %v629
      %v679 = vunpack.c.l.b16 %v350
      %v680 = vunpack.c.l.b16 %v351
      %v681 = vunpack.c.l.b16 %v352
      %v682 = vunpack.c.l.b16 %v353
      %v683 = vunpack.c.l.b16 %v354
      %v684 = vunpack.c.l.b16 %v355
      %v685 = vunpack.c.l.b16 %v356
      %v686 = vunpack.c.l.b16 %v357
      %v687 = vunpack.c.l.b16 %v358
      %v688 = vunpack.c.l.b16 %v359
      %v689 = vunpack.c.l.b16 %v360
      %v690 = vunpack.c.l.b16 %v361
      %v691 = vunpack.c.l.b16 %v362
      %v692 = vunpack.c.l.b16 %v363
      %v693 = vunpack.c.l.b16 %v364
      %v694 = vunpack.c.l.b16 %v365
      %v695 = vpack.c.b16 %v680, %v679
      %v696 = vpack.c.b16 %v682, %v681
      %v697 = vpack.c.b16 %v684, %v683
      %v698 = vpack.c.b16 %v686, %v685
      %v699 = vpack.c.b16 %v688, %v687
      %v700 = vpack.c.b16 %v690, %v689
      %v701 = vpack.c.b16 %v692, %v691
      %v702 = vpack.c.b16 %v694, %v693
      %711 = vmatpush.bf16.msra.mxu0 %v702
      %712 = vmatpush.bf16.msra.mxu0 %v701
      %713 = vmatpush.bf16.msra.mxu0 %v700
      %714 = vmatpush.bf16.msra.mxu0 %v699
      %715 = vmatpush.bf16.msra.mxu0 %v698
      %716 = vmatpush.bf16.msra.mxu0 %v697
      %717 = vmatpush.bf16.msra.mxu0 %v696
      %718 = vmatpush.bf16.msra.mxu0 %v695
      %719 = vmatmul.bf16.gmra.mxu0 %v631
      %v720 = vpop.f32.mrf.mxu0
      %v721 = vadd.f32 %v488, %v720
      %v722 = vpop.f32.mrf.mxu0
      %v723 = vadd.f32 %v490, %v722
      %724 = vmatmul.bf16.gmra.mxu0 %v632
      %v725 = vpop.f32.mrf.mxu0
      %v726 = vadd.f32 %v493, %v725
      %v727 = vpop.f32.mrf.mxu0
      %v728 = vadd.f32 %v495, %v727
      %729 = vmatmul.bf16.gmra.mxu0 %v633
      %v730 = vpop.f32.mrf.mxu0
      %v731 = vadd.f32 %v498, %v730
      %v732 = vpop.f32.mrf.mxu0
      %v733 = vadd.f32 %v500, %v732
      %734 = vmatmul.bf16.gmra.mxu0 %v634
      %v735 = vpop.f32.mrf.mxu0
      %v736 = vadd.f32 %v503, %v735
      %v737 = vpop.f32.mrf.mxu0
      %v738 = vadd.f32 %v505, %v737
      %739 = vmatmul.bf16.gmra.mxu0 %v635
      %v740 = vpop.f32.mrf.mxu0
      %v741 = vadd.f32 %v508, %v740
      %v742 = vpop.f32.mrf.mxu0
      %v743 = vadd.f32 %v510, %v742
      %744 = vmatmul.bf16.gmra.mxu0 %v636
      %v745 = vpop.f32.mrf.mxu0
      %v746 = vadd.f32 %v513, %v745
      %v747 = vpop.f32.mrf.mxu0
      %v748 = vadd.f32 %v515, %v747
      %749 = vmatmul.bf16.gmra.mxu0 %v637
      %v750 = vpop.f32.mrf.mxu0
      %v751 = vadd.f32 %v518, %v750
      %v752 = vpop.f32.mrf.mxu0
      %v753 = vadd.f32 %v520, %v752
      %754 = vmatmul.bf16.gmra.mxu0 %v638
      %v755 = vpop.f32.mrf.mxu0
      %v756 = vadd.f32 %v523, %v755
      %v757 = vpop.f32.mrf.mxu0
      %v758 = vadd.f32 %v525, %v757
      %759 = vmatmul.bf16.gmra.mxu0 %v639
      %v760 = vpop.f32.mrf.mxu0
      %v761 = vadd.f32 %v528, %v760
      %v762 = vpop.f32.mrf.mxu0
      %v763 = vadd.f32 %v530, %v762
      %764 = vmatmul.bf16.gmra.mxu0 %v640
      %v765 = vpop.f32.mrf.mxu0
      %v766 = vadd.f32 %v533, %v765
      %v767 = vpop.f32.mrf.mxu0
      %v768 = vadd.f32 %v535, %v767
      %769 = vmatmul.bf16.gmra.mxu0 %v641
      %v770 = vpop.f32.mrf.mxu0
      %v771 = vadd.f32 %v538, %v770
      %v772 = vpop.f32.mrf.mxu0
      %v773 = vadd.f32 %v540, %v772
      %774 = vmatmul.bf16.gmra.mxu0 %v642
      %v775 = vpop.f32.mrf.mxu0
      %v776 = vadd.f32 %v543, %v775
      %v777 = vpop.f32.mrf.mxu0
      %v778 = vadd.f32 %v545, %v777
      %779 = vmatmul.bf16.gmra.mxu0 %v643
      %v780 = vpop.f32.mrf.mxu0
      %v781 = vadd.f32 %v548, %v780
      %v782 = vpop.f32.mrf.mxu0
      %v783 = vadd.f32 %v550, %v782
      %784 = vmatmul.bf16.gmra.mxu0 %v644
      %v785 = vpop.f32.mrf.mxu0
      %v786 = vadd.f32 %v553, %v785
      %v787 = vpop.f32.mrf.mxu0
      %v788 = vadd.f32 %v555, %v787
      %789 = vmatmul.bf16.gmra.mxu0 %v645
      %v790 = vpop.f32.mrf.mxu0
      %v791 = vadd.f32 %v558, %v790
      %v792 = vpop.f32.mrf.mxu0
      %v793 = vadd.f32 %v560, %v792
      %794 = vmatmul.bf16.gmra.mxu0 %v646
      %v795 = vpop.f32.mrf.mxu0
      %v796 = vadd.f32 %v563, %v795
      %v797 = vpop.f32.mrf.mxu0
      %v798 = vadd.f32 %v565, %v797
      %799 = vdwg.mxu0
      %v800 = vld [vmem:[%s308] sm:$0x1]
      %v802 = vperm.slane %v800, 0
      %v804 = vadd.f32 %v721, %v802
      %v805 = vadd.f32 %v723, %v802
      %v806 = vadd.f32 %v726, %v802
      %v807 = vadd.f32 %v728, %v802
      %v808 = vadd.f32 %v731, %v802
      %v809 = vadd.f32 %v733, %v802
      %v810 = vadd.f32 %v736, %v802
      %v811 = vadd.f32 %v738, %v802
      %v812 = vadd.f32 %v741, %v802
      %v813 = vadd.f32 %v743, %v802
      %v814 = vadd.f32 %v746, %v802
      %v815 = vadd.f32 %v748, %v802
      %v816 = vadd.f32 %v751, %v802
      %v817 = vadd.f32 %v753, %v802
      %v818 = vadd.f32 %v756, %v802
      %v819 = vadd.f32 %v758, %v802
      %v820 = vadd.f32 %v761, %v802
      %v821 = vadd.f32 %v763, %v802
      %v822 = vadd.f32 %v766, %v802
      %v823 = vadd.f32 %v768, %v802
      %v824 = vadd.f32 %v771, %v802
      %v825 = vadd.f32 %v773, %v802
      %v826 = vadd.f32 %v776, %v802
      %v827 = vadd.f32 %v778, %v802
      %v828 = vadd.f32 %v781, %v802
      %v829 = vadd.f32 %v783, %v802
      %v830 = vadd.f32 %v786, %v802
      %v831 = vadd.f32 %v788, %v802
      %v832 = vadd.f32 %v791, %v802
      %v833 = vadd.f32 %v793, %v802
      %v834 = vadd.f32 %v796, %v802
      %v835 = vadd.f32 %v798, %v802
      %v836 = vmax.f32 %v804, 0.0
      %v837 = vmax.f32 %v805, 0.0
      %v838 = vmax.f32 %v806, 0.0
      %v839 = vmax.f32 %v807, 0.0
      %v840 = vmax.f32 %v808, 0.0
      %v841 = vmax.f32 %v809, 0.0
      %v842 = vmax.f32 %v810, 0.0
      %v843 = vmax.f32 %v811, 0.0
      %v844 = vmax.f32 %v812, 0.0
      %v845 = vmax.f32 %v813, 0.0
      %v846 = vmax.f32 %v814, 0.0
      %v847 = vmax.f32 %v815, 0.0
      %v848 = vmax.f32 %v816, 0.0
      %v849 = vmax.f32 %v817, 0.0
      %v850 = vmax.f32 %v818, 0.0
      %v851 = vmax.f32 %v819, 0.0
      %v852 = vmax.f32 %v820, 0.0
      %v853 = vmax.f32 %v821, 0.0
      %v854 = vmax.f32 %v822, 0.0
      %v855 = vmax.f32 %v823, 0.0
      %v856 = vmax.f32 %v824, 0.0
      %v857 = vmax.f32 %v825, 0.0
      %v858 = vmax.f32 %v826, 0.0
      %v859 = vmax.f32 %v827, 0.0
      %v860 = vmax.f32 %v828, 0.0
      %v861 = vmax.f32 %v829, 0.0
      %v862 = vmax.f32 %v830, 0.0
      %v863 = vmax.f32 %v831, 0.0
      %v864 = vmax.f32 %v832, 0.0
      %v865 = vmax.f32 %v833, 0.0
      %v866 = vmax.f32 %v834, 0.0
      %v867 = vmax.f32 %v835, 0.0
      %868 = vst [vmem:[%s316] sm:$0xff] %v836
      %869 = vst [vmem:[%s316 + $0x8] sm:$0xff] %v837
      %870 = vst [vmem:[%s316 + $0x10] sm:$0xff] %v838
      %871 = vst [vmem:[%s316 + $0x18] sm:$0xff] %v839
      %872 = vst [vmem:[%s316 + $0x20] sm:$0xff] %v840
      %873 = vst [vmem:[%s316 + $0x28] sm:$0xff] %v841
      %874 = vst [vmem:[%s316 + $0x30] sm:$0xff] %v842
      %875 = vst [vmem:[%s316 + $0x38] sm:$0xff] %v843
      %876 = vst [vmem:[%s316 + $0x40] sm:$0xff] %v844
      %877 = vst [vmem:[%s316 + $0x48] sm:$0xff] %v845
      %878 = vst [vmem:[%s316 + $0x50] sm:$0xff] %v846
      %879 = vst [vmem:[%s316 + $0x58] sm:$0xff] %v847
      %880 = vst [vmem:[%s316 + $0x60] sm:$0xff] %v848
      %881 = vst [vmem:[%s316 + $0x68] sm:$0xff] %v849
      %882 = vst [vmem:[%s316 + $0x70] sm:$0xff] %v850
      %883 = vst [vmem:[%s316 + $0x78] sm:$0xff] %v851
      %884 = vst [vmem:[%s316 + $0x80] sm:$0xff] %v852
      %885 = vst [vmem:[%s316 + $0x88] sm:$0xff] %v853
      %886 = vst [vmem:[%s316 + $0x90] sm:$0xff] %v854
      %887 = vst [vmem:[%s316 + $0x98] sm:$0xff] %v855
      %888 = vst [vmem:[%s316 + $0xa0] sm:$0xff] %v856
      %889 = vst [vmem:[%s316 + $0xa8] sm:$0xff] %v857
      %890 = vst [vmem:[%s316 + $0xb0] sm:$0xff] %v858
      %891 = vst [vmem:[%s316 + $0xb8] sm:$0xff] %v859
      %892 = vst [vmem:[%s316 + $0xc0] sm:$0xff] %v860
      %893 = vst [vmem:[%s316 + $0xc8] sm:$0xff] %v861
      %894 = vst [vmem:[%s316 + $0xd0] sm:$0xff] %v862
      %895 = vst [vmem:[%s316 + $0xd8] sm:$0xff] %v863
      %896 = vst [vmem:[%s316 + $0xe0] sm:$0xff] %v864
      %897 = vst [vmem:[%s316 + $0xe8] sm:$0xff] %v865
      %898 = vst [vmem:[%s316 + $0xf0] sm:$0xff] %v866
      %899 = vst [vmem:[%s316 + $0xf8] sm:$0xff] %v867
      %s900 = smul.u32 32, %s20
      %p901 = scmp.lt.s32.totalorder %s900, 63
      %s902 = scalar_select %p901, %s900, 63
      %p903 = scmp.lt.s32.totalorder %s21, 0
      %s904 = scalar_select %p903, %s21, 0
      %s905 = sadd.s32 %s904, %s902
      %s906 = smul.addr %s905, 8
      %s907 = scalar_lea.vmem %s5, %s906
      // Predicated region
      $region41: #{bottleneck_forward.5} parent=39 // pred_check
        %p908 = pneg %p178
      $region42: #{bottleneck_forward.5} parent=39 // pred_check_branch
        %910 = sbr.rel (%p908) target = $region44
      $region43: #{bottleneck_forward.5} parent=39 // pred_region
        %s911 = smul.u32 32, %s20
      $region44: #{bottleneck_forward.5} parent=39 // pred_fallthru
        _
    $region40: #{bottleneck_forward.5} parent=5 // pred_fallthru
      _
    %p912 = scmp.le.s32.totalorder 2, %s11
    // Predicated region
    $region45: #{bottleneck_forward.5} parent=5 // pred_check
      %p913 = pneg %p912
    $region46: #{bottleneck_forward.5} parent=5 // pred_check_branch
      %915 = sbr.rel (%p913) target = $region48
    $region47: #{bottleneck_forward.5} parent=5 // pred_region
      %s916 = ssub.s32 %s11, 2
      // Predicated region
      $region49: #{bottleneck_forward.5} parent=47 // pred_check
        %p917 = pneg %p184
      $region50: #{bottleneck_forward.5} parent=47 // pred_check_branch
        %919 = sbr.rel (%p917) target = $region52
      $region51: #{bottleneck_forward.5} parent=47 // pred_region
        %s920 = smul.u32 32, %s22
        %p921 = scmp.lt.s32.totalorder %s920, 63
        %s922 = scalar_select %p921, %s920, 63
        %p923 = scmp.lt.s32.totalorder %s23, 0
        %s924 = scalar_select %p923, %s23, 0
        %s925 = sadd.s32 %s924, %s922
        %s926 = smul.addr %s925, 8
        %s927 = scalar_lea.vmem %s5, %s926
      $region52: #{bottleneck_forward.5} parent=47 // pred_fallthru
        _
    $region48: #{bottleneck_forward.5} parent=5 // pred_fallthru
      _
  $region6: #{bottleneck_forward.5} parent=0 // loop_footer
    %s15 = sadd.s32 1, %s11
  $region7: #{bottleneck_forward.5} parent=0 // loop_footer_branch
    %10 = sbr.rel target = $region3
  $region8: #{bottleneck_forward.5} parent=0 // loop_exit
    _

// kernel: bottleneck_forward.4
$region0: #{bottleneck_forward.4}
  #allocation0 [shape = 'u32[]', space=smem, size = 0x4, offset = 0x4, fixed_abs, tag = 'smem constant byte address 0x4 - core index']
  #allocation1 [shape = 'u32[72,128]{1,0:T(1,128)}', space=vmem, size = 0x9000, scoped, tag = 'internal scratch']
  #allocation2 [shape = 'f32[3,192,128]{2,1,0:T(8,128)}', space=vmem, size = 0x48000, scoped, tag = 'scratch operand']
  %s0 = inlined_call_operand.vmem [shape: bf16[2,1,18,24,128], index: 0, kind: input, shape index: {}]
  %s1 = inlined_call_operand.vmem [shape: bf16[9,128,128], index: 1, kind: input, shape index: {}]
  %s2 = inlined_call_operand.vmem [shape: f32[1,128], index: 2, kind: input, shape index: {}]
  %s3 = inlined_call_operand.vmem [shape: bf16[2,16,16,128], index: 3, kind: output, shape index: {}]
  %s4 = sld [smem:[#allocation0]]
  $region45: #{bottleneck_forward.4} parent=0
    _
  %s6 = ssub.s32 1, %s4
  %s7 = scalar_select 0, %s6, %s4
  loop: start=0, step=1, limit=6
  $region2: #{bottleneck_forward.4} parent=0 // loop_pre_header
    _
  $region3: #{bottleneck_forward.4} parent=0 // loop_header
    %s9 = sphi 0, %s13
    %p10 = scmp.ge.s32.totalorder %s9, 6
    %s16 = sphi 0, %s35
    %s17 = sphi 0, %s31
    %s18 = sphi 0, %s27
    %s19 = sphi 0, %s16
    %s20 = sphi 0, %s17
    %s21 = sphi 0, %s18
    %s22 = sphi 0, %s19
    %s23 = sphi 0, %s20
    %s24 = sphi 0, %s21
    %s38 = sphi 0, %s40
    %s41 = sphi 0, %s38
    %s42 = sphi 0, %s41
    %s58 = sphi 0, %s42
    %s64 = sphi 0, %s66
    %s67 = sphi 0, %s64
    %s68 = sphi 0, %s67
    %s84 = sphi 0, %s68
    %s90 = sphi 0, %s92
    %s93 = sphi 0, %s90
    %s94 = sphi 0, %s93
    %s110 = sphi 0, %s94
    %s120 = sphi 0, %s122
    %s123 = sphi 0, %s120
    %s124 = sphi 0, %s123
    %s140 = sphi 0, %s124
  $region4: #{bottleneck_forward.4} parent=0 // loop_header_branch
    %12 = sbr.rel (%p10) target = $region8
  $region5: #{bottleneck_forward.4} parent=0 // loop_body
    %s14 = ssub.s32 %s9, 1
    %s15 = ssub.s32 %s9, 2
    %s25 = sadd.s32 1, %s18
    %p26 = scmp.ge.s32.totalorder %s25, 1
    %s27 = scalar_select %p26, 0, %s25
    %s28 = sadd.s32 1, %s17
    %s29 = scalar_select %p26, %s28, %s17
    %p30 = scmp.ge.s32.totalorder %s29, 2
    %s31 = scalar_select %p30, 0, %s29
    %s32 = sadd.s32 1, %s16
    %s33 = scalar_select %p30, %s32, %s16
    %p34 = scmp.ge.s32.totalorder %s33, 2
    %s35 = scalar_select %p34, 0, %s33
    %s36 = ssub.s32 %s16, %s35
    %p37 = scmp.eq.s32.totalorder %s36, 0
    %s39 = sadd.s32 %s38, 1
    %s40 = scalar_select %p37, %s38, %s39
    %p43 = pneg %p37
    %p44 = scmp.eq.s32.totalorder %s9, 3
    %p45 = por %p43, %p44
    %p46 = scmp.ne.s32.totalorder %s38, %s41
    %p47 = scmp.eq.s32.totalorder %s9, 0
    %p48 = por %p46, %p47
    %p49 = scmp.ne.s32.totalorder %s38, %s41
    %p50 = scmp.eq.s32.totalorder %s14, 3
    %p51 = por %p49, %p50
    %p52 = scmp.ne.s32.totalorder %s41, %s42
    %p53 = scmp.eq.s32.totalorder %s14, 0
    %p54 = por %p52, %p53
    %p55 = scmp.ne.s32.totalorder %s41, %s42
    %p56 = scmp.eq.s32.totalorder %s15, 3
    %p57 = por %p55, %p56
    %p59 = scmp.ne.s32.totalorder %s42, %s58
    %p60 = scmp.eq.s32.totalorder %s15, 0
    %p61 = por %p59, %p60
    %s62 = ssub.s32 %s18, %s27
    %p63 = scmp.eq.s32.totalorder %s62, 0
    %s65 = sadd.s32 %s64, 1
    %s66 = scalar_select %p63, %s64, %s65
    %p69 = pneg %p63
    %p70 = scmp.eq.s32.totalorder %s9, 3
    %p71 = por %p69, %p70
    %p72 = scmp.ne.s32.totalorder %s64, %s67
    %p73 = scmp.eq.s32.totalorder %s9, 0
    %p74 = por %p72, %p73
    %p75 = scmp.ne.s32.totalorder %s64, %s67
    %p76 = scmp.eq.s32.totalorder %s14, 3
    %p77 = por %p75, %p76
    %p78 = scmp.ne.s32.totalorder %s67, %s68
    %p79 = scmp.eq.s32.totalorder %s14, 0
    %p80 = por %p78, %p79
    %p81 = scmp.ne.s32.totalorder %s67, %s68
    %p82 = scmp.eq.s32.totalorder %s15, 3
    %p83 = por %p81, %p82
    %p85 = scmp.ne.s32.totalorder %s68, %s84
    %p86 = scmp.eq.s32.totalorder %s15, 0
    %p87 = por %p85, %p86
    %s88 = ssub.s32 %s18, %s27
    %p89 = scmp.eq.s32.totalorder %s88, 0
    %s91 = sadd.s32 %s90, 1
    %s92 = scalar_select %p89, %s90, %s91
    %p95 = pneg %p89
    %p96 = scmp.eq.s32.totalorder %s9, 3
    %p97 = por %p95, %p96
    %p98 = scmp.ne.s32.totalorder %s90, %s93
    %p99 = scmp.eq.s32.totalorder %s9, 0
    %p100 = por %p98, %p99
    %p101 = scmp.ne.s32.totalorder %s90, %s93
    %p102 = scmp.eq.s32.totalorder %s14, 3
    %p103 = por %p101, %p102
    %p104 = scmp.ne.s32.totalorder %s93, %s94
    %p105 = scmp.eq.s32.totalorder %s14, 0
    %p106 = por %p104, %p105
    %p107 = scmp.ne.s32.totalorder %s93, %s94
    %p108 = scmp.eq.s32.totalorder %s15, 3
    %p109 = por %p107, %p108
    %p111 = scmp.ne.s32.totalorder %s94, %s110
    %p112 = scmp.eq.s32.totalorder %s15, 0
    %p113 = por %p111, %p112
    %s114 = ssub.s32 %s16, %s35
    %s115 = ssub.s32 %s17, %s31
    %s116 = sor.u32 %s114, %s115
    %s117 = ssub.s32 %s18, %s27
    %s118 = sor.u32 %s116, %s117
    %p119 = scmp.eq.s32.totalorder %s118, 0
    %s121 = sadd.s32 %s120, 1
    %s122 = scalar_select %p119, %s120, %s121
    %p125 = pneg %p119
    %p126 = scmp.eq.s32.totalorder %s9, 3
    %p127 = por %p125, %p126
    %p128 = scmp.ne.s32.totalorder %s120, %s123
    %p129 = scmp.eq.s32.totalorder %s9, 0
    %p130 = por %p128, %p129
    %p131 = scmp.ne.s32.totalorder %s120, %s123
    %p132 = scmp.eq.s32.totalorder %s14, 3
    %p133 = por %p131, %p132
    %p134 = scmp.ne.s32.totalorder %s123, %s124
    %p135 = scmp.eq.s32.totalorder %s14, 0
    %p136 = por %p134, %p135
    %p137 = scmp.ne.s32.totalorder %s123, %s124
    %p138 = scmp.eq.s32.totalorder %s15, 3
    %p139 = por %p137, %p138
    %p141 = scmp.ne.s32.totalorder %s124, %s140
    %p142 = scmp.eq.s32.totalorder %s15, 0
    %p143 = por %p141, %p142
    %p144 = scmp.le.s32.totalorder 1, %s9
    %p145 = scmp.lt.s32.totalorder %s9, 5
    %p146 = pnand %p144, %p145
    %p147 = pneg %p146
    // Predicated region
    $region9: #{bottleneck_forward.4} parent=5 // pred_check
      _
    $region10: #{bottleneck_forward.4} parent=5 // pred_check_branch
      %149 = sbr.rel (%p146) target = $region12
    $region11: #{bottleneck_forward.4} parent=5 // pred_region
      %s150 = ssub.s32 %s9, 1
      // Predicated region
      $region13: #{bottleneck_forward.4} parent=11 // pred_check
        %p151 = pneg %p80
      $region14: #{bottleneck_forward.4} parent=11 // pred_check_branch
        %153 = sbr.rel (%p151) target = $region16
      $region15: #{bottleneck_forward.4} parent=11 // pred_region
        %p154 = scmp.lt.s32.totalorder %s21, 0
        %s155 = scalar_select %p154, %s21, 0
        %s156 = smul.addr %s155, 4
        %s157 = scalar_lea.vmem %s1, %s156
      $region16: #{bottleneck_forward.4} parent=11 // pred_fallthru
        _
      // Predicated region
      $region17: #{bottleneck_forward.4} parent=11 // pred_check
        %p158 = pneg %p106
      $region18: #{bottleneck_forward.4} parent=11 // pred_check_branch
        %160 = sbr.rel (%p158) target = $region20
      $region19: #{bottleneck_forward.4} parent=11 // pred_region
        %p161 = scmp.lt.s32.totalorder %s21, 0
        %s162 = scalar_select %p161, %s21, 0
        %s163 = scalar_lea.vmem %s2, %s162
      $region20: #{bottleneck_forward.4} parent=11 // pred_fallthru
        _
    $region12: #{bottleneck_forward.4} parent=5 // pred_fallthru
      _
    %p164 = scmp.lt.s32.totalorder %s9, 4
    // Predicated region
    $region21: #{bottleneck_forward.4} parent=5 // pred_check
      %p165 = pneg %p164
    $region22: #{bottleneck_forward.4} parent=5 // pred_check_branch
      %167 = sbr.rel (%p165) target = $region24
    $region23: #{bottleneck_forward.4} parent=5 // pred_region
      // Predicated region
      $region25: #{bottleneck_forward.4} parent=23 // pred_check
        %p168 = pneg %p48
      $region26: #{bottleneck_forward.4} parent=23 // pred_check_branch
        %170 = sbr.rel (%p168) target = $region28
      $region27: #{bottleneck_forward.4} parent=23 // pred_region
        %p171 = scmp.lt.s32.totalorder %s16, 1
        %s172 = scalar_select %p171, %s16, 1
        %s173 = smul.addr %s172, 54
        %s174 = smul.addr %s173, 4
        %s175 = scalar_lea.vmem %s0, %s174
      $region28: #{bottleneck_forward.4} parent=23 // pred_fallthru
        _
    $region24: #{bottleneck_forward.4} parent=5 // pred_fallthru
      _
    %p176 = scmp.le.s32.totalorder 1, %s9
    %p177 = scmp.lt.s32.totalorder %s9, 5
    %p178 = pnand %p176, %p177
    %p179 = pneg %p178
    // Predicated region
    $region29: #{bottleneck_forward.4} parent=5 // pred_check
      _
    $region30: #{bottleneck_forward.4} parent=5 // pred_check_branch
      %181 = sbr.rel (%p178) target = $region32
    $region31: #{bottleneck_forward.4} parent=5 // pred_region
      %s182 = ssub.s32 %s9, 1
      %p183 = scmp.lt.s32.totalorder %s19, 1
      %s184 = scalar_select %p183, %s19, 1
      %s185 = smul.addr %s184, 54
      %s186 = smul.addr %s185, 4
      %s187 = scalar_lea.vmem %s0, %s186
      %p188 = pneg %p54
      %p189 = pneg %p51
      %p190 = scmp.lt.s32.totalorder %s21, 0
      %s191 = scalar_select %p190, %s21, 0
      %s192 = smul.addr %s191, 4
      %s193 = scalar_lea.vmem %s1, %s192
      %p194 = pneg %p80
      %p195 = pneg %p77
      %p196 = scmp.lt.s32.totalorder %s21, 0
      %s197 = scalar_select %p196, %s21, 0
      %s198 = scalar_lea.vmem %s2, %s197
      %p199 = pneg %p106
      %p200 = pneg %p103
      %p201 = pneg %p136
      %p202 = pneg %p133
      %s203 = smul.u32 8, %s20
      %p204 = scmp.lt.s32.totalorder %s19, 1
      %s205 = scalar_select %p204, %s19, 1
      %p206 = scmp.lt.s32.totalorder %s203, 15
      %s207 = scalar_select %p206, %s203, 15
      %p208 = scmp.lt.s32.totalorder %s21, 0
      %s209 = scalar_select %p208, %s21, 0
      %s210 = smul.addr %s207, 2
      %s211 = sadd.s32 %s209, %s210
      %s212 = smul.addr %s205, 32
      %s213 = sadd.s32 %s211, %s212
      %s214 = smul.addr %s213, 4
      %s215 = scalar_lea.vmem %s3, %s214
      %p216 = scmp.lt.s32.totalorder %s19, 1
      %s217 = scalar_select %p216, %s19, 1
      %s218 = smul.addr %s217, 54
      %s219 = smul.addr %s218, 4
      %s220 = scalar_lea.vmem %s0, %s219
      %p221 = scmp.lt.s32.totalorder %s21, 0
      %s222 = scalar_select %p221, %s21, 0
      %s223 = smul.addr %s222, 4
      %s224 = scalar_lea.vmem %s1, %s223
      %p225 = scmp.lt.s32.totalorder %s21, 0
      %s226 = scalar_select %p225, %s21, 0
      %s227 = scalar_lea.vmem %s2, %s226
      %s228 = smul.u32 8, %s20
      %p229 = scmp.lt.s32.totalorder %s19, 1
      %s230 = scalar_select %p229, %s19, 1
      %p231 = scmp.lt.s32.totalorder %s228, 15
      %s232 = scalar_select %p231, %s228, 15
      %p233 = scmp.lt.s32.totalorder %s21, 0
      %s234 = scalar_select %p233, %s21, 0
      %s235 = smul.addr %s232, 2
      %s236 = sadd.s32 %s234, %s235
      %s237 = smul.addr %s230, 32
      %s238 = sadd.s32 %s236, %s237
      %s239 = smul.addr %s238, 4
      %s240 = scalar_lea.vmem %s3, %s239
      %s241 = smul.u32 8, %s20
      %s242 = smul.u32 %s20, 8
      %s243 = smul.u32 %s242, 3
      %s244 = smul.addr %s243, 4
      %s245 = scalar_lea.vmem %s220, %s244
      %v246 = vld [vmem:[%s245] sm:$0xf]
      %v247 = vld [vmem:[%s245 + $0x4] sm:$0xf]
      %v248 = vld [vmem:[%s245 + $0x8] sm:$0xf]
      %v249 = vld [vmem:[%s245 + $0xc] sm:$0xf]
      %v250 = vld [vmem:[%s245 + $0x10] sm:$0xf]
      %v251 = vld [vmem:[%s245 + $0x14] sm:$0xf]
      %v252 = vld [vmem:[%s245 + $0x18] sm:$0xf]
      %v253 = vld [vmem:[%s245 + $0x1c] sm:$0xf]
      %v254 = vld [vmem:[%s245 + $0x20] sm:$0xf]
      %v255 = vld [vmem:[%s245 + $0x24] sm:$0xf]
      %v256 = vld [vmem:[%s245 + $0x28] sm:$0xf]
      %v257 = vld [vmem:[%s245 + $0x2c] sm:$0xf]
      %v258 = vld [vmem:[%s245 + $0x30] sm:$0xf]
      %v259 = vld [vmem:[%s245 + $0x34] sm:$0xf]
      %v260 = vld [vmem:[%s245 + $0x38] sm:$0xf]
      %v261 = vld [vmem:[%s245 + $0x3c] sm:$0xf]
      %v262 = vld [vmem:[%s245 + $0x40] sm:$0xf]
      %v263 = vld [vmem:[%s245 + $0x44] sm:$0xf]
      %v264 = vld [vmem:[%s245 + $0x48] sm:$0xf]
      %v265 = vld [vmem:[%s245 + $0x4c] sm:$0xf]
      %v266 = vld [vmem:[%s245 + $0x50] sm:$0xf]
      %v267 = vld [vmem:[%s245 + $0x54] sm:$0xf]
      %v268 = vld [vmem:[%s245 + $0x58] sm:$0xf]
      %v269 = vld [vmem:[%s245 + $0x5c] sm:$0xf]
      %v270 = vld [vmem:[%s224] sm:$0xf]
      %v271 = vld [vmem:[%s224 + $0x4] sm:$0xf]
      %v272 = vld [vmem:[%s224 + $0x8] sm:$0xf]
      %v273 = vld [vmem:[%s224 + $0xc] sm:$0xf]
      %v274 = vld [vmem:[%s224 + $0x10] sm:$0xf]
      %v275 = vld [vmem:[%s224 + $0x14] sm:$0xf]
      %v276 = vld [vmem:[%s224 + $0x18] sm:$0xf]
      %v277 = vld [vmem:[%s224 + $0x1c] sm:$0xf]
      %v278 = vld [vmem:[%s224 + $0x20] sm:$0xf]
      %v279 = vld [vmem:[%s224 + $0x24] sm:$0xf]
      %v280 = vld [vmem:[%s224 + $0x28] sm:$0xf]
      %v281 = vld [vmem:[%s224 + $0x2c] sm:$0xf]
      %v282 = vld [vmem:[%s224 + $0x30] sm:$0xf]
      %v283 = vld [vmem:[%s224 + $0x34] sm:$0xf]
      %v284 = vld [vmem:[%s224 + $0x38] sm:$0xf]
      %v285 = vld [vmem:[%s224 + $0x3c] sm:$0xf]
      %v310 = vunpack.c.l.b16 %v246
      %v311 = vunpack.c.l.b16 %v247
      %v312 = vunpack.c.l.b16 %v248
      %v313 = vunpack.c.l.b16 %v249
      %v314 = vunpack.c.l.b16 %v250
      %v315 = vunpack.c.l.b16 %v251
      %v316 = vunpack.c.l.b16 %v252
      %v317 = vunpack.c.l.b16 %v253
      %v318 = vunpack.c.l.b16 %v254
      %v319 = vunpack.c.l.b16 %v255
      %v320 = vunpack.c.l.b16 %v256
      %v321 = vunpack.c.l.b16 %v257
      %v322 = vunpack.c.l.b16 %v258
      %v323 = vunpack.c.l.b16 %v259
      %v324 = vunpack.c.l.b16 %v260
      %v325 = vunpack.c.l.b16 %v261
      %v326 = vunpack.c.l.b16 %v262
      %v327 = vunpack.c.l.b16 %v263
      %v328 = vunpack.c.l.b16 %v264
      %v329 = vunpack.c.l.b16 %v265
      %v330 = vunpack.c.l.b16 %v266
      %v331 = vunpack.c.l.b16 %v267
      %v332 = vunpack.c.l.b16 %v268
      %v333 = vunpack.c.l.b16 %v269
      %v334 = vpack.c.b16 %v311, %v310
      %v335 = vpack.c.b16 %v313, %v312
      %v336 = vpack.c.b16 %v315, %v314
      %v337 = vpack.c.b16 %v317, %v316
      %v338 = vpack.c.b16 %v319, %v318
      %v339 = vpack.c.b16 %v321, %v320
      %v340 = vpack.c.b16 %v323, %v322
      %v341 = vpack.c.b16 %v325, %v324
      %v342 = vpack.c.b16 %v327, %v326
      %v343 = vpack.c.b16 %v329, %v328
      %v344 = vpack.c.b16 %v331, %v330
      %v345 = vpack.c.b16 %v333, %v332
      %v374 = vunpack.c.l.b16 %v270
      %v375 = vunpack.c.l.b16 %v271
      %v376 = vunpack.c.l.b16 %v272
      %v377 = vunpack.c.l.b16 %v273
      %v378 = vunpack.c.l.b16 %v274
      %v379 = vunpack.c.l.b16 %v275
      %v380 = vunpack.c.l.b16 %v276
      %v381 = vunpack.c.l.b16 %v277
      %v382 = vunpack.c.l.b16 %v278
      %v383 = vunpack.c.l.b16 %v279
      %v384 = vunpack.c.l.b16 %v280
      %v385 = vunpack.c.l.b16 %v281
      %v386 = vunpack.c.l.b16 %v282
      %v387 = vunpack.c.l.b16 %v283
      %v388 = vunpack.c.l.b16 %v284
      %v389 = vunpack.c.l.b16 %v285
      %v390 = vpack.c.b16 %v375, %v374
      %v391 = vpack.c.b16 %v377, %v376
      %v392 = vpack.c.b16 %v379, %v378
      %v393 = vpack.c.b16 %v381, %v380
      %v394 = vpack.c.b16 %v383, %v382
      %v395 = vpack.c.b16 %v385, %v384
      %v396 = vpack.c.b16 %v387, %v386
      %v397 = vpack.c.b16 %v389, %v388
      %406 = vmatpush.bf16.msra.mxu0 %v397
      %407 = vmatpush.bf16.msra.mxu0 %v396
      %408 = vmatpush.bf16.msra.mxu0 %v395
      %409 = vmatpush.bf16.msra.mxu0 %v394
      %410 = vmatpush.bf16.msra.mxu0 %v393
      %411 = vmatpush.bf16.msra.mxu0 %v392
      %412 = vmatpush.bf16.msra.mxu0 %v391
      %413 = vmatpush.bf16.msra.mxu0 %v390
      %414 = vmatmul.bf16.gmra.mxu0 %v334
      %v415 = vpop.f32.mrf.mxu0
      %v416 = vadd.f32 0.0, %v415
      %v417 = vpop.f32.mrf.mxu0
      %v418 = vadd.f32 0.0, %v417
      %419 = vmatmul.bf16.gmra.mxu0 %v335
      %v420 = vpop.f32.mrf.mxu0
      %v421 = vadd.f32 0.0, %v420
      %v422 = vpop.f32.mrf.mxu0
      %v423 = vadd.f32 0.0, %v422
      %424 = vmatmul.bf16.gmra.mxu0 %v336
      %v425 = vpop.f32.mrf.mxu0
      %v426 = vadd.f32 0.0, %v425
      %v427 = vpop.f32.mrf.mxu0
      %v428 = vadd.f32 0.0, %v427
      %429 = vmatmul.bf16.gmra.mxu0 %v337
      %v430 = vpop.f32.mrf.mxu0
      %v431 = vadd.f32 0.0, %v430
      %v432 = vpop.f32.mrf.mxu0
      %v433 = vadd.f32 0.0, %v432
      %434 = vmatmul.bf16.gmra.mxu0 %v338
      %v435 = vpop.f32.mrf.mxu0
      %v436 = vadd.f32 0.0, %v435
      %v437 = vpop.f32.mrf.mxu0
      %v438 = vadd.f32 0.0, %v437
      %439 = vmatmul.bf16.gmra.mxu0 %v339
      %v440 = vpop.f32.mrf.mxu0
      %v441 = vadd.f32 0.0, %v440
      %v442 = vpop.f32.mrf.mxu0
      %v443 = vadd.f32 0.0, %v442
      %444 = vmatmul.bf16.gmra.mxu0 %v340
      %v445 = vpop.f32.mrf.mxu0
      %v446 = vadd.f32 0.0, %v445
      %v447 = vpop.f32.mrf.mxu0
      %v448 = vadd.f32 0.0, %v447
      %449 = vmatmul.bf16.gmra.mxu0 %v341
      %v450 = vpop.f32.mrf.mxu0
      %v451 = vadd.f32 0.0, %v450
      %v452 = vpop.f32.mrf.mxu0
      %v453 = vadd.f32 0.0, %v452
      %454 = vmatmul.bf16.gmra.mxu0 %v342
      %v455 = vpop.f32.mrf.mxu0
      %v456 = vadd.f32 0.0, %v455
      %v457 = vpop.f32.mrf.mxu0
      %v458 = vadd.f32 0.0, %v457
      %459 = vmatmul.bf16.gmra.mxu0 %v343
      %v460 = vpop.f32.mrf.mxu0
      %v461 = vadd.f32 0.0, %v460
      %v462 = vpop.f32.mrf.mxu0
      %v463 = vadd.f32 0.0, %v462
      %464 = vmatmul.bf16.gmra.mxu0 %v344
      %v465 = vpop.f32.mrf.mxu0
      %v466 = vadd.f32 0.0, %v465
      %v467 = vpop.f32.mrf.mxu0
      %v468 = vadd.f32 0.0, %v467
      %469 = vmatmul.bf16.gmra.mxu0 %v345
      %v470 = vpop.f32.mrf.mxu0
      %v471 = vadd.f32 0.0, %v470
      %v472 = vpop.f32.mrf.mxu0
      %v473 = vadd.f32 0.0, %v472
      %474 = vdwg.mxu0
      %475 = vst [vmem:[#allocation2] sm:$0xff] %v416
      %476 = vst [vmem:[#allocation2 + $0x8] sm:$0xff] %v418
      %477 = vst [vmem:[#allocation2 + $0x10] sm:$0xff] %v421
      %478 = vst [vmem:[#allocation2 + $0x18] sm:$0xff] %v423
      %479 = vst [vmem:[#allocation2 + $0x20] sm:$0xff] %v426
      %480 = vst [vmem:[#allocation2 + $0x28] sm:$0xff] %v428
      %481 = vst [vmem:[#allocation2 + $0x30] sm:$0xff] %v431
      %482 = vst [vmem:[#allocation2 + $0x38] sm:$0xff] %v433
      %483 = vst [vmem:[#allocation2 + $0x40] sm:$0xff] %v436
      %484 = vst [vmem:[#allocation2 + $0x48] sm:$0xff] %v438
      %485 = vst [vmem:[#allocation2 + $0x50] sm:$0xff] %v441
      %486 = vst [vmem:[#allocation2 + $0x58] sm:$0xff] %v443
      %487 = vst [vmem:[#allocation2 + $0x60] sm:$0xff] %v446
      %488 = vst [vmem:[#allocation2 + $0x68] sm:$0xff] %v448
      %489 = vst [vmem:[#allocation2 + $0x70] sm:$0xff] %v451
      %490 = vst [vmem:[#allocation2 + $0x78] sm:$0xff] %v453
      %491 = vst [vmem:[#allocation2 + $0x80] sm:$0xff] %v456
      %492 = vst [vmem:[#allocation2 + $0x88] sm:$0xff] %v458
      %493 = vst [vmem:[#allocation2 + $0x90] sm:$0xff] %v461
      %494 = vst [vmem:[#allocation2 + $0x98] sm:$0xff] %v463
      %495 = vst [vmem:[#allocation2 + $0xa0] sm:$0xff] %v466
      %496 = vst [vmem:[#allocation2 + $0xa8] sm:$0xff] %v468
      %497 = vst [vmem:[#allocation2 + $0xb0] sm:$0xff] %v471
      %498 = vst [vmem:[#allocation2 + $0xb8] sm:$0xff] %v473
      %v499 = vld [vmem:[%s245] sm:$0xf]
      %v500 = vld [vmem:[%s245 + $0x4] sm:$0xf]
      %v501 = vld [vmem:[%s245 + $0x8] sm:$0xf]
      %v502 = vld [vmem:[%s245 + $0xc] sm:$0xf]
      %v503 = vld [vmem:[%s245 + $0x10] sm:$0xf]
      %v504 = vld [vmem:[%s245 + $0x14] sm:$0xf]
      %v505 = vld [vmem:[%s245 + $0x18] sm:$0xf]
      %v506 = vld [vmem:[%s245 + $0x1c] sm:$0xf]
      %v507 = vld [vmem:[%s245 + $0x20] sm:$0xf]
      %v508 = vld [vmem:[%s245 + $0x24] sm:$0xf]
      %v509 = vld [vmem:[%s245 + $0x28] sm:$0xf]
      %v510 = vld [vmem:[%s245 + $0x2c] sm:$0xf]
      %v511 = vld [vmem:[%s245 + $0x30] sm:$0xf]
      %v512 = vld [vmem:[%s245 + $0x34] sm:$0xf]
      %v513 = vld [vmem:[%s245 + $0x38] sm:$0xf]
      %v514 = vld [vmem:[%s245 + $0x3c] sm:$0xf]
      %v515 = vld [vmem:[%s245 + $0x40] sm:$0xf]
      %v516 = vld [vmem:[%s245 + $0x44] sm:$0xf]
      %v517 = vld [vmem:[%s245 + $0x48] sm:$0xf]
      %v518 = vld [vmem:[%s245 + $0x4c] sm:$0xf]
      %v519 = vld [vmem:[%s245 + $0x50] sm:$0xf]
      %v520 = vld [vmem:[%s245 + $0x54] sm:$0xf]
      %v521 = vld [vmem:[%s245 + $0x58] sm:$0xf]
      %v522 = vld [vmem:[%s245 + $0x5c] sm:$0xf]
      %s523 = scalar_lea.vmem %s224, 64
      %v524 = vld [vmem:[%s523] sm:$0xf]
      %v525 = vld [vmem:[%s523 + $0x4] sm:$0xf]
      %v526 = vld [vmem:[%s523 + $0x8] sm:$0xf]
      %v527 = vld [vmem:[%s523 + $0xc] sm:$0xf]
      %v528 = vld [vmem:[%s523 + $0x10] sm:$0xf]
      %v529 = vld [vmem:[%s523 + $0x14] sm:$0xf]
      %v530 = vld [vmem:[%s523 + $0x18] sm:$0xf]
      %v531 = vld [vmem:[%s523 + $0x1c] sm:$0xf]
      %v532 = vld [vmem:[%s523 + $0x20] sm:$0xf]
      %v533 = vld [vmem:[%s523 + $0x24] sm:$0xf]
      %v534 = vld [vmem:[%s523 + $0x28] sm:$0xf]
      %v535 = vld [vmem:[%s523 + $0x2c] sm:$0xf]
      %v536 = vld [vmem:[%s523 + $0x30] sm:$0xf]
      %v537 = vld [vmem:[%s523 + $0x34] sm:$0xf]
      %v538 = vld [vmem:[%s523 + $0x38] sm:$0xf]
      %v539 = vld [vmem:[%s523 + $0x3c] sm:$0xf]
      %v564 = vunpack.c.l.b16 %v499
      %v565 = vunpack.c.l.b16 %v500
      %v566 = vunpack.c.l.b16 %v501
      %v567 = vunpack.c.l.b16 %v502
      %v568 = vunpack.c.l.b16 %v503
      %v569 = vunpack.c.l.b16 %v504
      %v570 = vunpack.c.l.b16 %v505
      %v571 = vunpack.c.l.b16 %v506
      %v572 = vunpack.c.l.b16 %v507
      %v573 = vunpack.c.l.b16 %v508
      %v574 = vunpack.c.l.b16 %v509
      %v575 = vunpack.c.l.b16 %v510
      %v576 = vunpack.c.l.b16 %v511
      %v577 = vunpack.c.l.b16 %v512
      %v578 = vunpack.c.l.b16 %v513
      %v579 = vunpack.c.l.b16 %v514
      %v580 = vunpack.c.l.b16 %v515
      %v581 = vunpack.c.l.b16 %v516
      %v582 = vunpack.c.l.b16 %v517
      %v583 = vunpack.c.l.b16 %v518
      %v584 = vunpack.c.l.b16 %v519
      %v585 = vunpack.c.l.b16 %v520
      %v586 = vunpack.c.l.b16 %v521
      %v587 = vunpack.c.l.b16 %v522
      %v588 = vpack.c.b16 %v565, %v564
      %v589 = vpack.c.b16 %v567, %v566
      %v590 = vpack.c.b16 %v569, %v568
      %v591 = vpack.c.b16 %v571, %v570
      %v592 = vpack.c.b16 %v573, %v572
      %v593 = vpack.c.b16 %v575, %v574
      %v594 = vpack.c.b16 %v577, %v576
      %v595 = vpack.c.b16 %v579, %v578
      %v596 = vpack.c.b16 %v581, %v580
      %v597 = vpack.c.b16 %v583, %v582
      %v598 = vpack.c.b16 %v585, %v584
      %v599 = vpack.c.b16 %v587, %v586
      %v628 = vunpack.c.l.b16 %v524
      %v629 = vunpack.c.l.b16 %v525
      %v630 = vunpack.c.l.b16 %v526
      %v631 = vunpack.c.l.b16 %v527
      %v632 = vunpack.c.l.b16 %v528
      %v633 = vunpack.c.l.b16 %v529
      %v634 = vunpack.c.l.b16 %v530
      %v635 = vunpack.c.l.b16 %v531
      %v636 = vunpack.c.l.b16 %v532
      %v637 = vunpack.c.l.b16 %v533
      %v638 = vunpack.c.l.b16 %v534
      %v639 = vunpack.c.l.b16 %v535
      %v640 = vunpack.c.l.b16 %v536
      %v641 = vunpack.c.l.b16 %v537
      %v642 = vunpack.c.l.b16 %v538
      %v643 = vunpack.c.l.b16 %v539
      %v644 = vpack.c.b16 %v629, %v628
      %v645 = vpack.c.b16 %v631, %v630
      %v646 = vpack.c.b16 %v633, %v632
      %v647 = vpack.c.b16 %v635, %v634
      %v648 = vpack.c.b16 %v637, %v636
      %v649 = vpack.c.b16 %v639, %v638
      %v650 = vpack.c.b16 %v641, %v640
      %v651 = vpack.c.b16 %v643, %v642
      %660 = vmatpush.bf16.msra.mxu0 %v651
      %661 = vmatpush.bf16.msra.mxu0 %v650
      %662 = vmatpush.bf16.msra.mxu0 %v649
      %663 = vmatpush.bf16.msra.mxu0 %v648
      %664 = vmatpush.bf16.msra.mxu0 %v647
      %665 = vmatpush.bf16.msra.mxu0 %v646
      %666 = vmatpush.bf16.msra.mxu0 %v645
      %667 = vmatpush.bf16.msra.mxu0 %v644
      %668 = vmatmul.bf16.gmra.mxu0 %v588
      %v669 = vpop.f32.mrf.mxu0
      %v670 = vadd.f32 0.0, %v669
      %v671 = vpop.f32.mrf.mxu0
      %v672 = vadd.f32 0.0, %v671
      %673 = vmatmul.bf16.gmra.mxu0 %v589
      %v674 = vpop.f32.mrf.mxu0
      %v675 = vadd.f32 0.0, %v674
      %v676 = vpop.f32.mrf.mxu0
      %v677 = vadd.f32 0.0, %v676
      %678 = vmatmul.bf16.gmra.mxu0 %v590
      %v679 = vpop.f32.mrf.mxu0
      %v680 = vadd.f32 0.0, %v679
      %v681 = vpop.f32.mrf.mxu0
      %v682 = vadd.f32 0.0, %v681
      %683 = vmatmul.bf16.gmra.mxu0 %v591
      %v684 = vpop.f32.mrf.mxu0
      %v685 = vadd.f32 0.0, %v684
      %v686 = vpop.f32.mrf.mxu0
      %v687 = vadd.f32 0.0, %v686
      %688 = vmatmul.bf16.gmra.mxu0 %v592
      %v689 = vpop.f32.mrf.mxu0
      %v690 = vadd.f32 0.0, %v689
      %v691 = vpop.f32.mrf.mxu0
      %v692 = vadd.f32 0.0, %v691
      %693 = vmatmul.bf16.gmra.mxu0 %v593
      %v694 = vpop.f32.mrf.mxu0
      %v695 = vadd.f32 0.0, %v694
      %v696 = vpop.f32.mrf.mxu0
      %v697 = vadd.f32 0.0, %v696
      %698 = vmatmul.bf16.gmra.mxu0 %v594
      %v699 = vpop.f32.mrf.mxu0
      %v700 = vadd.f32 0.0, %v699
      %v701 = vpop.f32.mrf.mxu0
      %v702 = vadd.f32 0.0, %v701
      %703 = vmatmul.bf16.gmra.mxu0 %v595
      %v704 = vpop.f32.mrf.mxu0
      %v705 = vadd.f32 0.0, %v704
      %v706 = vpop.f32.mrf.mxu0
      %v707 = vadd.f32 0.0, %v706
      %708 = vmatmul.bf16.gmra.mxu0 %v596
      %v709 = vpop.f32.mrf.mxu0
      %v710 = vadd.f32 0.0, %v709
      %v711 = vpop.f32.mrf.mxu0
      %v712 = vadd.f32 0.0, %v711
      %713 = vmatmul.bf16.gmra.mxu0 %v597
      %v714 = vpop.f32.mrf.mxu0
      %v715 = vadd.f32 0.0, %v714
      %v716 = vpop.f32.mrf.mxu0
      %v717 = vadd.f32 0.0, %v716
      %718 = vmatmul.bf16.gmra.mxu0 %v598
      %v719 = vpop.f32.mrf.mxu0
      %v720 = vadd.f32 0.0, %v719
      %v721 = vpop.f32.mrf.mxu0
      %v722 = vadd.f32 0.0, %v721
      %723 = vmatmul.bf16.gmra.mxu0 %v599
      %v724 = vpop.f32.mrf.mxu0
      %v725 = vadd.f32 0.0, %v724
      %v726 = vpop.f32.mrf.mxu0
      %v727 = vadd.f32 0.0, %v726
      %728 = vdwg.mxu0
      %s729 = scalar_lea.vmem [#allocation2], 192
      %730 = vst [vmem:[%s729] sm:$0xff] %v670
      %731 = vst [vmem:[%s729 + $0x8] sm:$0xff] %v672
      %732 = vst [vmem:[%s729 + $0x10] sm:$0xff] %v675
      %733 = vst [vmem:[%s729 + $0x18] sm:$0xff] %v677
      %734 = vst [vmem:[%s729 + $0x20] sm:$0xff] %v680
      %735 = vst [vmem:[%s729 + $0x28] sm:$0xff] %v682
      %736 = vst [vmem:[%s729 + $0x30] sm:$0xff] %v685
      %737 = vst [vmem:[%s729 + $0x38] sm:$0xff] %v687
      %738 = vst [vmem:[%s729 + $0x40] sm:$0xff] %v690
      %739 = vst [vmem:[%s729 + $0x48] sm:$0xff] %v692
      %740 = vst [vmem:[%s729 + $0x50] sm:$0xff] %v695
      %741 = vst [vmem:[%s729 + $0x58] sm:$0xff] %v697
      %742 = vst [vmem:[%s729 + $0x60] sm:$0xff] %v700
      %743 = vst [vmem:[%s729 + $0x68] sm:$0xff] %v702
      %744 = vst [vmem:[%s729 + $0x70] sm:$0xff] %v705
      %745 = vst [vmem:[%s729 + $0x78] sm:$0xff] %v707
      %746 = vst [vmem:[%s729 + $0x80] sm:$0xff] %v710
      %747 = vst [vmem:[%s729 + $0x88] sm:$0xff] %v712
      %748 = vst [vmem:[%s729 + $0x90] sm:$0xff] %v715
      %749 = vst [vmem:[%s729 + $0x98] sm:$0xff] %v717
      %750 = vst [vmem:[%s729 + $0xa0] sm:$0xff] %v720
      %751 = vst [vmem:[%s729 + $0xa8] sm:$0xff] %v722
      %752 = vst [vmem:[%s729 + $0xb0] sm:$0xff] %v725
      %753 = vst [vmem:[%s729 + $0xb8] sm:$0xff] %v727
      %v754 = vld [vmem:[%s245] sm:$0xf]
      %v755 = vld [vmem:[%s245 + $0x4] sm:$0xf]
      %v756 = vld [vmem:[%s245 + $0x8] sm:$0xf]
      %v757 = vld [vmem:[%s245 + $0xc] sm:$0xf]
      %v758 = vld [vmem:[%s245 + $0x10] sm:$0xf]
      %v759 = vld [vmem:[%s245 + $0x14] sm:$0xf]
      %v760 = vld [vmem:[%s245 + $0x18] sm:$0xf]
      %v761 = vld [vmem:[%s245 + $0x1c] sm:$0xf]
      %v762 = vld [vmem:[%s245 + $0x20] sm:$0xf]
      %v763 = vld [vmem:[%s245 + $0x24] sm:$0xf]
      %v764 = vld [vmem:[%s245 + $0x28] sm:$0xf]
      %v765 = vld [vmem:[%s245 + $0x2c] sm:$0xf]
      %v766 = vld [vmem:[%s245 + $0x30] sm:$0xf]
      %v767 = vld [vmem:[%s245 + $0x34] sm:$0xf]
      %v768 = vld [vmem:[%s245 + $0x38] sm:$0xf]
      %v769 = vld [vmem:[%s245 + $0x3c] sm:$0xf]
      %v770 = vld [vmem:[%s245 + $0x40] sm:$0xf]
      %v771 = vld [vmem:[%s245 + $0x44] sm:$0xf]
      %v772 = vld [vmem:[%s245 + $0x48] sm:$0xf]
      %v773 = vld [vmem:[%s245 + $0x4c] sm:$0xf]
      %v774 = vld [vmem:[%s245 + $0x50] sm:$0xf]
      %v775 = vld [vmem:[%s245 + $0x54] sm:$0xf]
      %v776 = vld [vmem:[%s245 + $0x58] sm:$0xf]
      %v777 = vld [vmem:[%s245 + $0x5c] sm:$0xf]
      %s778 = scalar_lea.vmem %s224, 128
      %v779 = vld [vmem:[%s778] sm:$0xf]
      %v780 = vld [vmem:[%s778 + $0x4] sm:$0xf]
      %v781 = vld [vmem:[%s778 + $0x8] sm:$0xf]
      %v782 = vld [vmem:[%s778 + $0xc] sm:$0xf]
      %v783 = vld [vmem:[%s778 + $0x10] sm:$0xf]
      %v784 = vld [vmem:[%s778 + $0x14] sm:$0xf]
      %v785 = vld [vmem:[%s778 + $0x18] sm:$0xf]
      %v786 = vld [vmem:[%s778 + $0x1c] sm:$0xf]
      %v787 = vld [vmem:[%s778 + $0x20] sm:$0xf]
      %v788 = vld [vmem:[%s778 + $0x24] sm:$0xf]
      %v789 = vld [vmem:[%s778 + $0x28] sm:$0xf]
      %v790 = vld [vmem:[%s778 + $0x2c] sm:$0xf]
      %v791 = vld [vmem:[%s778 + $0x30] sm:$0xf]
      %v792 = vld [vmem:[%s778 + $0x34] sm:$0xf]
      %v793 = vld [vmem:[%s778 + $0x38] sm:$0xf]
      %v794 = vld [vmem:[%s778 + $0x3c] sm:$0xf]
      %v819 = vunpack.c.l.b16 %v754
      %v820 = vunpack.c.l.b16 %v755
      %v821 = vunpack.c.l.b16 %v756
      %v822 = vunpack.c.l.b16 %v757
      %v823 = vunpack.c.l.b16 %v758
      %v824 = vunpack.c.l.b16 %v759
      %v825 = vunpack.c.l.b16 %v760
      %v826 = vunpack.c.l.b16 %v761
      %v827 = vunpack.c.l.b16 %v762
      %v828 = vunpack.c.l.b16 %v763
      %v829 = vunpack.c.l.b16 %v764
      %v830 = vunpack.c.l.b16 %v765
      %v831 = vunpack.c.l.b16 %v766
      %v832 = vunpack.c.l.b16 %v767
      %v833 = vunpack.c.l.b16 %v768
      %v834 = vunpack.c.l.b16 %v769
      %v835 = vunpack.c.l.b16 %v770
      %v836 = vunpack.c.l.b16 %v771
      %v837 = vunpack.c.l.b16 %v772
      %v838 = vunpack.c.l.b16 %v773
      %v839 = vunpack.c.l.b16 %v774
      %v840 = vunpack.c.l.b16 %v775
      %v841 = vunpack.c.l.b16 %v776
      %v842 = vunpack.c.l.b16 %v777
      %v843 = vpack.c.b16 %v820, %v819
      %v844 = vpack.c.b16 %v822, %v821
      %v845 = vpack.c.b16 %v824, %v823
      %v846 = vpack.c.b16 %v826, %v825
      %v847 = vpack.c.b16 %v828, %v827
      %v848 = vpack.c.b16 %v830, %v829
      %v849 = vpack.c.b16 %v832, %v831
      %v850 = vpack.c.b16 %v834, %v833
      %v851 = vpack.c.b16 %v836, %v835
      %v852 = vpack.c.b16 %v838, %v837
      %v853 = vpack.c.b16 %v840, %v839
      %v854 = vpack.c.b16 %v842, %v841
      %v883 = vunpack.c.l.b16 %v779
      %v884 = vunpack.c.l.b16 %v780
      %v885 = vunpack.c.l.b16 %v781
      %v886 = vunpack.c.l.b16 %v782
      %v887 = vunpack.c.l.b16 %v783
      %v888 = vunpack.c.l.b16 %v784
      %v889 = vunpack.c.l.b16 %v785
      %v890 = vunpack.c.l.b16 %v786
      %v891 = vunpack.c.l.b16 %v787
      %v892 = vunpack.c.l.b16 %v788
      %v893 = vunpack.c.l.b16 %v789
      %v894 = vunpack.c.l.b16 %v790
      %v895 = vunpack.c.l.b16 %v791
      %v896 = vunpack.c.l.b16 %v792
      %v897 = vunpack.c.l.b16 %v793
      %v898 = vunpack.c.l.b16 %v794
      %v899 = vpack.c.b16 %v884, %v883
      %v900 = vpack.c.b16 %v886, %v885
      %v901 = vpack.c.b16 %v888, %v887
      %v902 = vpack.c.b16 %v890, %v889
      %v903 = vpack.c.b16 %v892, %v891
      %v904 = vpack.c.b16 %v894, %v893
      %v905 = vpack.c.b16 %v896, %v895
      %v906 = vpack.c.b16 %v898, %v897
      %915 = vmatpush.bf16.msra.mxu0 %v906
      %916 = vmatpush.bf16.msra.mxu0 %v905
      %917 = vmatpush.bf16.msra.mxu0 %v904
      %918 = vmatpush.bf16.msra.mxu0 %v903
      %919 = vmatpush.bf16.msra.mxu0 %v902
      %920 = vmatpush.bf16.msra.mxu0 %v901
      %921 = vmatpush.bf16.msra.mxu0 %v900
      %922 = vmatpush.bf16.msra.mxu0 %v899
      %923 = vmatmul.bf16.gmra.mxu0 %v843
      %v924 = vpop.f32.mrf.mxu0
      %v925 = vadd.f32 0.0, %v924
      %v926 = vpop.f32.mrf.mxu0
      %v927 = vadd.f32 0.0, %v926
      %928 = vmatmul.bf16.gmra.mxu0 %v844
      %v929 = vpop.f32.mrf.mxu0
      %v930 = vadd.f32 0.0, %v929
      %v931 = vpop.f32.mrf.mxu0
      %v932 = vadd.f32 0.0, %v931
      %933 = vmatmul.bf16.gmra.mxu0 %v845
      %v934 = vpop.f32.mrf.mxu0
      %v935 = vadd.f32 0.0, %v934
      %v936 = vpop.f32.mrf.mxu0
      %v937 = vadd.f32 0.0, %v936
      %938 = vmatmul.bf16.gmra.mxu0 %v846
      %v939 = vpop.f32.mrf.mxu0
      %v940 = vadd.f32 0.0, %v939
      %v941 = vpop.f32.mrf.mxu0
      %v942 = vadd.f32 0.0, %v941
      %943 = vmatmul.bf16.gmra.mxu0 %v847
      %v944 = vpop.f32.mrf.mxu0
      %v945 = vadd.f32 0.0, %v944
      %v946 = vpop.f32.mrf.mxu0
      %v947 = vadd.f32 0.0, %v946
      %948 = vmatmul.bf16.gmra.mxu0 %v848
      %v949 = vpop.f32.mrf.mxu0
      %v950 = vadd.f32 0.0, %v949
      %v951 = vpop.f32.mrf.mxu0
      %v952 = vadd.f32 0.0, %v951
      %953 = vmatmul.bf16.gmra.mxu0 %v849
      %v954 = vpop.f32.mrf.mxu0
      %v955 = vadd.f32 0.0, %v954
      %v956 = vpop.f32.mrf.mxu0
      %v957 = vadd.f32 0.0, %v956
      %958 = vmatmul.bf16.gmra.mxu0 %v850
      %v959 = vpop.f32.mrf.mxu0
      %v960 = vadd.f32 0.0, %v959
      %v961 = vpop.f32.mrf.mxu0
      %v962 = vadd.f32 0.0, %v961
      %963 = vmatmul.bf16.gmra.mxu0 %v851
      %v964 = vpop.f32.mrf.mxu0
      %v965 = vadd.f32 0.0, %v964
      %v966 = vpop.f32.mrf.mxu0
      %v967 = vadd.f32 0.0, %v966
      %968 = vmatmul.bf16.gmra.mxu0 %v852
      %v969 = vpop.f32.mrf.mxu0
      %v970 = vadd.f32 0.0, %v969
      %v971 = vpop.f32.mrf.mxu0
      %v972 = vadd.f32 0.0, %v971
      %973 = vmatmul.bf16.gmra.mxu0 %v853
      %v974 = vpop.f32.mrf.mxu0
      %v975 = vadd.f32 0.0, %v974
      %v976 = vpop.f32.mrf.mxu0
      %v977 = vadd.f32 0.0, %v976
      %978 = vmatmul.bf16.gmra.mxu0 %v854
      %v979 = vpop.f32.mrf.mxu0
      %v980 = vadd.f32 0.0, %v979
      %v981 = vpop.f32.mrf.mxu0
      %v982 = vadd.f32 0.0, %v981
      %983 = vdwg.mxu0
      %s984 = scalar_lea.vmem [#allocation2], 384
      %985 = vst [vmem:[%s984] sm:$0xff] %v925
      %986 = vst [vmem:[%s984 + $0x8] sm:$0xff] %v927
      %987 = vst [vmem:[%s984 + $0x10] sm:$0xff] %v930
      %988 = vst [vmem:[%s984 + $0x18] sm:$0xff] %v932
      %989 = vst [vmem:[%s984 + $0x20] sm:$0xff] %v935
      %990 = vst [vmem:[%s984 + $0x28] sm:$0xff] %v937
      %991 = vst [vmem:[%s984 + $0x30] sm:$0xff] %v940
      %992 = vst [vmem:[%s984 + $0x38] sm:$0xff] %v942
      %993 = vst [vmem:[%s984 + $0x40] sm:$0xff] %v945
      %994 = vst [vmem:[%s984 + $0x48] sm:$0xff] %v947
      %995 = vst [vmem:[%s984 + $0x50] sm:$0xff] %v950
      %996 = vst [vmem:[%s984 + $0x58] sm:$0xff] %v952
      %997 = vst [vmem:[%s984 + $0x60] sm:$0xff] %v955
      %998 = vst [vmem:[%s984 + $0x68] sm:$0xff] %v957
      %999 = vst [vmem:[%s984 + $0x70] sm:$0xff] %v960
      %1000 = vst [vmem:[%s984 + $0x78] sm:$0xff] %v962
      %1001 = vst [vmem:[%s984 + $0x80] sm:$0xff] %v965
      %1002 = vst [vmem:[%s984 + $0x88] sm:$0xff] %v967
      %1003 = vst [vmem:[%s984 + $0x90] sm:$0xff] %v970
      %1004 = vst [vmem:[%s984 + $0x98] sm:$0xff] %v972
      %1005 = vst [vmem:[%s984 + $0xa0] sm:$0xff] %v975
      %1006 = vst [vmem:[%s984 + $0xa8] sm:$0xff] %v977
      %1007 = vst [vmem:[%s984 + $0xb0] sm:$0xff] %v980
      %1008 = vst [vmem:[%s984 + $0xb8] sm:$0xff] %v982
      %s1009 = sadd.s32 %s242, 1
      %s1010 = smul.u32 %s1009, 3
      %s1011 = smul.addr %s1010, 4
      %s1012 = scalar_lea.vmem %s220, %s1011
      %v1013 = vld [vmem:[%s1012] sm:$0xf]
      %v1014 = vld [vmem:[%s1012 + $0x4] sm:$0xf]
      %v1015 = vld [vmem:[%s1012 + $0x8] sm:$0xf]
      %v1016 = vld [vmem:[%s1012 + $0xc] sm:$0xf]
      %v1017 = vld [vmem:[%s1012 + $0x10] sm:$0xf]
      %v1018 = vld [vmem:[%s1012 + $0x14] sm:$0xf]
      %v1019 = vld [vmem:[%s1012 + $0x18] sm:$0xf]
      %v1020 = vld [vmem:[%s1012 + $0x1c] sm:$0xf]
      %v1021 = vld [vmem:[%s1012 + $0x20] sm:$0xf]
      %v1022 = vld [vmem:[%s1012 + $0x24] sm:$0xf]
      %v1023 = vld [vmem:[%s1012 + $0x28] sm:$0xf]
      %v1024 = vld [vmem:[%s1012 + $0x2c] sm:$0xf]
      %v1025 = vld [vmem:[%s1012 + $0x30] sm:$0xf]
      %v1026 = vld [vmem:[%s1012 + $0x34] sm:$0xf]
      %v1027 = vld [vmem:[%s1012 + $0x38] sm:$0xf]
      %v1028 = vld [vmem:[%s1012 + $0x3c] sm:$0xf]
      %v1029 = vld [vmem:[%s1012 + $0x40] sm:$0xf]
      %v1030 = vld [vmem:[%s1012 + $0x44] sm:$0xf]
      %v1031 = vld [vmem:[%s1012 + $0x48] sm:$0xf]
      %v1032 = vld [vmem:[%s1012 + $0x4c] sm:$0xf]
      %v1033 = vld [vmem:[%s1012 + $0x50] sm:$0xf]
      %v1034 = vld [vmem:[%s1012 + $0x54] sm:$0xf]
      %v1035 = vld [vmem:[%s1012 + $0x58] sm:$0xf]
      %v1036 = vld [vmem:[%s1012 + $0x5c] sm:$0xf]
      %s1037 = scalar_lea.vmem %s224, 192
      %v1038 = vld [vmem:[%s1037] sm:$0xf]
      %v1039 = vld [vmem:[%s1037 + $0x4] sm:$0xf]
      %v1040 = vld [vmem:[%s1037 + $0x8] sm:$0xf]
      %v1041 = vld [vmem:[%s1037 + $0xc] sm:$0xf]
      %v1042 = vld [vmem:[%s1037 + $0x10] sm:$0xf]
      %v1043 = vld [vmem:[%s1037 + $0x14] sm:$0xf]
      %v1044 = vld [vmem:[%s1037 + $0x18] sm:$0xf]
      %v1045 = vld [vmem:[%s1037 + $0x1c] sm:$0xf]
      %v1046 = vld [vmem:[%s1037 + $0x20] sm:$0xf]
      %v1047 = vld [vmem:[%s1037 + $0x24] sm:$0xf]
      %v1048 = vld [vmem:[%s1037 + $0x28] sm:$0xf]
      %v1049 = vld [vmem:[%s1037 + $0x2c] sm:$0xf]
      %v1050 = vld [vmem:[%s1037 + $0x30] sm:$0xf]
      %v1051 = vld [vmem:[%s1037 + $0x34] sm:$0xf]
      %v1052 = vld [vmem:[%s1037 + $0x38] sm:$0xf]
      %v1053 = vld [vmem:[%s1037 + $0x3c] sm:$0xf]
      %v1078 = vunpack.c.l.b16 %v1013
      %v1079 = vunpack.c.l.b16 %v1014
      %v1080 = vunpack.c.l.b16 %v1015
      %v1081 = vunpack.c.l.b16 %v1016
      %v1082 = vunpack.c.l.b16 %v1017
      %v1083 = vunpack.c.l.b16 %v1018
      %v1084 = vunpack.c.l.b16 %v1019
      %v1085 = vunpack.c.l.b16 %v1020
      %v1086 = vunpack.c.l.b16 %v1021
      %v1087 = vunpack.c.l.b16 %v1022
      %v1088 = vunpack.c.l.b16 %v1023
      %v1089 = vunpack.c.l.b16 %v1024
      %v1090 = vunpack.c.l.b16 %v1025
      %v1091 = vunpack.c.l.b16 %v1026
      %v1092 = vunpack.c.l.b16 %v1027
      %v1093 = vunpack.c.l.b16 %v1028
      %v1094 = vunpack.c.l.b16 %v1029
      %v1095 = vunpack.c.l.b16 %v1030
      %v1096 = vunpack.c.l.b16 %v1031
      %v1097 = vunpack.c.l.b16 %v1032
      %v1098 = vunpack.c.l.b16 %v1033
      %v1099 = vunpack.c.l.b16 %v1034
      %v1100 = vunpack.c.l.b16 %v1035
      %v1101 = vunpack.c.l.b16 %v1036
      %v1102 = vpack.c.b16 %v1079, %v1078
      %v1103 = vpack.c.b16 %v1081, %v1080
      %v1104 = vpack.c.b16 %v1083, %v1082
      %v1105 = vpack.c.b16 %v1085, %v1084
      %v1106 = vpack.c.b16 %v1087, %v1086
      %v1107 = vpack.c.b16 %v1089, %v1088
      %v1108 = vpack.c.b16 %v1091, %v1090
      %v1109 = vpack.c.b16 %v1093, %v1092
      %v1110 = vpack.c.b16 %v1095, %v1094
      %v1111 = vpack.c.b16 %v1097, %v1096
      %v1112 = vpack.c.b16 %v1099, %v1098
      %v1113 = vpack.c.b16 %v1101, %v1100
      %v1142 = vunpack.c.l.b16 %v1038
      %v1143 = vunpack.c.l.b16 %v1039
      %v1144 = vunpack.c.l.b16 %v1040
      %v1145 = vunpack.c.l.b16 %v1041
      %v1146 = vunpack.c.l.b16 %v1042
      %v1147 = vunpack.c.l.b16 %v1043
      %v1148 = vunpack.c.l.b16 %v1044
      %v1149 = vunpack.c.l.b16 %v1045
      %v1150 = vunpack.c.l.b16 %v1046
      %v1151 = vunpack.c.l.b16 %v1047
      %v1152 = vunpack.c.l.b16 %v1048
      %v1153 = vunpack.c.l.b16 %v1049
      %v1154 = vunpack.c.l.b16 %v1050
      %v1155 = vunpack.c.l.b16 %v1051
      %v1156 = vunpack.c.l.b16 %v1052
      %v1157 = vunpack.c.l.b16 %v1053
      %v1158 = vpack.c.b16 %v1143, %v1142
      %v1159 = vpack.c.b16 %v1145, %v1144
      %v1160 = vpack.c.b16 %v1147, %v1146
      %v1161 = vpack.c.b16 %v1149, %v1148
      %v1162 = vpack.c.b16 %v1151, %v1150
      %v1163 = vpack.c.b16 %v1153, %v1152
      %v1164 = vpack.c.b16 %v1155, %v1154
      %v1165 = vpack.c.b16 %v1157, %v1156
      %1174 = vmatpush.bf16.msra.mxu0 %v1165
      %1175 = vmatpush.bf16.msra.mxu0 %v1164
      %1176 = vmatpush.bf16.msra.mxu0 %v1163
      %1177 = vmatpush.bf16.msra.mxu0 %v1162
      %1178 = vmatpush.bf16.msra.mxu0 %v1161
      %1179 = vmatpush.bf16.msra.mxu0 %v1160
      %1180 = vmatpush.bf16.msra.mxu0 %v1159
      %1181 = vmatpush.bf16.msra.mxu0 %v1158
      %1182 = vmatmul.bf16.gmra.mxu0 %v1102
      %v1183 = vpop.f32.mrf.mxu0
      %v1184 = vadd.f32 0.0, %v1183
      %v1185 = vpop.f32.mrf.mxu0
      %v1186 = vadd.f32 0.0, %v1185
      %1187 = vmatmul.bf16.gmra.mxu0 %v1103
      %v1188 = vpop.f32.mrf.mxu0
      %v1189 = vadd.f32 0.0, %v1188
      %v1190 = vpop.f32.mrf.mxu0
      %v1191 = vadd.f32 0.0, %v1190
      %1192 = vmatmul.bf16.gmra.mxu0 %v1104
      %v1193 = vpop.f32.mrf.mxu0
      %v1194 = vadd.f32 0.0, %v1193
      %v1195 = vpop.f32.mrf.mxu0
      %v1196 = vadd.f32 0.0, %v1195
      %1197 = vmatmul.bf16.gmra.mxu0 %v1105
      %v1198 = vpop.f32.mrf.mxu0
      %v1199 = vadd.f32 0.0, %v1198
      %v1200 = vpop.f32.mrf.mxu0
      %v1201 = vadd.f32 0.0, %v1200
      %1202 = vmatmul.bf16.gmra.mxu0 %v1106
      %v1203 = vpop.f32.mrf.mxu0
      %v1204 = vadd.f32 0.0, %v1203
      %v1205 = vpop.f32.mrf.mxu0
      %v1206 = vadd.f32 0.0, %v1205
      %1207 = vmatmul.bf16.gmra.mxu0 %v1107
      %v1208 = vpop.f32.mrf.mxu0
      %v1209 = vadd.f32 0.0, %v1208
      %v1210 = vpop.f32.mrf.mxu0
      %v1211 = vadd.f32 0.0, %v1210
      %1212 = vmatmul.bf16.gmra.mxu0 %v1108
      %v1213 = vpop.f32.mrf.mxu0
      %v1214 = vadd.f32 0.0, %v1213
      %v1215 = vpop.f32.mrf.mxu0
      %v1216 = vadd.f32 0.0, %v1215
      %1217 = vmatmul.bf16.gmra.mxu0 %v1109
      %v1218 = vpop.f32.mrf.mxu0
      %v1219 = vadd.f32 0.0, %v1218
      %v1220 = vpop.f32.mrf.mxu0
      %v1221 = vadd.f32 0.0, %v1220
      %1222 = vmatmul.bf16.gmra.mxu0 %v1110
      %v1223 = vpop.f32.mrf.mxu0
      %v1224 = vadd.f32 0.0, %v1223
      %v1225 = vpop.f32.mrf.mxu0
      %v1226 = vadd.f32 0.0, %v1225
      %1227 = vmatmul.bf16.gmra.mxu0 %v1111
      %v1228 = vpop.f32.mrf.mxu0
      %v1229 = vadd.f32 0.0, %v1228
      %v1230 = vpop.f32.mrf.mxu0
      %v1231 = vadd.f32 0.0, %v1230
      %1232 = vmatmul.bf16.gmra.mxu0 %v1112
      %v1233 = vpop.f32.mrf.mxu0
      %v1234 = vadd.f32 0.0, %v1233
      %v1235 = vpop.f32.mrf.mxu0
      %v1236 = vadd.f32 0.0, %v1235
      %1237 = vmatmul.bf16.gmra.mxu0 %v1113
      %v1238 = vpop.f32.mrf.mxu0
      %v1239 = vadd.f32 0.0, %v1238
      %v1240 = vpop.f32.mrf.mxu0
      %v1241 = vadd.f32 0.0, %v1240
      %1242 = vdwg.mxu0
      %v1243 = vld [vmem:[#allocation2] sm:$0xff]
      %v1244 = vld [vmem:[#allocation2 + $0x8] sm:$0xff]
      %v1245 = vld [vmem:[#allocation2 + $0x10] sm:$0xff]
      %v1246 = vld [vmem:[#allocation2 + $0x18] sm:$0xff]
      %v1247 = vld [vmem:[#allocation2 + $0x20] sm:$0xff]
      %v1248 = vld [vmem:[#allocation2 + $0x28] sm:$0xff]
      %v1249 = vld [vmem:[#allocation2 + $0x30] sm:$0xff]
      %v1250 = vld [vmem:[#allocation2 + $0x38] sm:$0xff]
      %v1251 = vld [vmem:[#allocation2 + $0x40] sm:$0xff]
      %v1252 = vld [vmem:[#allocation2 + $0x48] sm:$0xff]
      %v1253 = vld [vmem:[#allocation2 + $0x50] sm:$0xff]
      %v1254 = vld [vmem:[#allocation2 + $0x58] sm:$0xff]
      %v1255 = vld [vmem:[#allocation2 + $0x60] sm:$0xff]
      %v1256 = vld [vmem:[#allocation2 + $0x68] sm:$0xff]
      %v1257 = vld [vmem:[#allocation2 + $0x70] sm:$0xff]
      %v1258 = vld [vmem:[#allocation2 + $0x78] sm:$0xff]
      %v1259 = vld [vmem:[#allocation2 + $0x80] sm:$0xff]
      %v1260 = vld [vmem:[#allocation2 + $0x88] sm:$0xff]
      %v1261 = vld [vmem:[#allocation2 + $0x90] sm:$0xff]
      %v1262 = vld [vmem:[#allocation2 + $0x98] sm:$0xff]
      %v1263 = vld [vmem:[#allocation2 + $0xa0] sm:$0xff]
      %v1264 = vld [vmem:[#allocation2 + $0xa8] sm:$0xff]
      %v1265 = vld [vmem:[#allocation2 + $0xb0] sm:$0xff]
      %v1266 = vld [vmem:[#allocation2 + $0xb8] sm:$0xff]
      %v1267 = vadd.f32 %v1243, %v1184
      %v1268 = vadd.f32 %v1244, %v1186
      %v1269 = vadd.f32 %v1245, %v1189
      %v1270 = vadd.f32 %v1246, %v1191
      %v1271 = vadd.f32 %v1247, %v1194
      %v1272 = vadd.f32 %v1248, %v1196
      %v1273 = vadd.f32 %v1249, %v1199
      %v1274 = vadd.f32 %v1250, %v1201
      %v1275 = vadd.f32 %v1251, %v1204
      %v1276 = vadd.f32 %v1252, %v1206
      %v1277 = vadd.f32 %v1253, %v1209
      %v1278 = vadd.f32 %v1254, %v1211
      %v1279 = vadd.f32 %v1255, %v1214
      %v1280 = vadd.f32 %v1256, %v1216
      %v1281 = vadd.f32 %v1257, %v1219
      %v1282 = vadd.f32 %v1258, %v1221
      %v1283 = vadd.f32 %v1259, %v1224
      %v1284 = vadd.f32 %v1260, %v1226
      %v1285 = vadd.f32 %v1261, %v1229
      %v1286 = vadd.f32 %v1262, %v1231
      %v1287 = vadd.f32 %v1263, %v1234
      %v1288 = vadd.f32 %v1264, %v1236
      %v1289 = vadd.f32 %v1265, %v1239
      %v1290 = vadd.f32 %v1266, %v1241
      %1291 = vst [vmem:[#allocation2] sm:$0xff] %v1267
      %1292 = vst [vmem:[#allocation2 + $0x8] sm:$0xff] %v1268
      %1293 = vst [vmem:[#allocation2 + $0x10] sm:$0xff] %v1269
      %1294 = vst [vmem:[#allocation2 + $0x18] sm:$0xff] %v1270
      %1295 = vst [vmem:[#allocation2 + $0x20] sm:$0xff] %v1271
      %1296 = vst [vmem:[#allocation2 + $0x28] sm:$0xff] %v1272
      %1297 = vst [vmem:[#allocation2 + $0x30] sm:$0xff] %v1273
      %1298 = vst [vmem:[#allocation2 + $0x38] sm:$0xff] %v1274
      %1299 = vst [vmem:[#allocation2 + $0x40] sm:$0xff] %v1275
      %1300 = vst [vmem:[#allocation2 + $0x48] sm:$0xff] %v1276
      %1301 = vst [vmem:[#allocation2 + $0x50] sm:$0xff] %v1277
      %1302 = vst [vmem:[#allocation2 + $0x58] sm:$0xff] %v1278
      %1303 = vst [vmem:[#allocation2 + $0x60] sm:$0xff] %v1279
      %1304 = vst [vmem:[#allocation2 + $0x68] sm:$0xff] %v1280
      %1305 = vst [vmem:[#allocation2 + $0x70] sm:$0xff] %v1281
      %1306 = vst [vmem:[#allocation2 + $0x78] sm:$0xff] %v1282
      %1307 = vst [vmem:[#allocation2 + $0x80] sm:$0xff] %v1283
      %1308 = vst [vmem:[#allocation2 + $0x88] sm:$0xff] %v1284
      %1309 = vst [vmem:[#allocation2 + $0x90] sm:$0xff] %v1285
      %1310 = vst [vmem:[#allocation2 + $0x98] sm:$0xff] %v1286
      %1311 = vst [vmem:[#allocation2 + $0xa0] sm:$0xff] %v1287
      %1312 = vst [vmem:[#allocation2 + $0xa8] sm:$0xff] %v1288
      %1313 = vst [vmem:[#allocation2 + $0xb0] sm:$0xff] %v1289
      %1314 = vst [vmem:[#allocation2 + $0xb8] sm:$0xff] %v1290
      %v1315 = vld [vmem:[%s1012] sm:$0xf]
      %v1316 = vld [vmem:[%s1012 + $0x4] sm:$0xf]
      %v1317 = vld [vmem:[%s1012 + $0x8] sm:$0xf]
      %v1318 = vld [vmem:[%s1012 + $0xc] sm:$0xf]
      %v1319 = vld [vmem:[%s1012 + $0x10] sm:$0xf]
      %v1320 = vld [vmem:[%s1012 + $0x14] sm:$0xf]
      %v1321 = vld [vmem:[%s1012 + $0x18] sm:$0xf]
      %v1322 = vld [vmem:[%s1012 + $0x1c] sm:$0xf]
      %v1323 = vld [vmem:[%s1012 + $0x20] sm:$0xf]
      %v1324 = vld [vmem:[%s1012 + $0x24] sm:$0xf]
      %v1325 = vld [vmem:[%s1012 + $0x28] sm:$0xf]
      %v1326 = vld [vmem:[%s1012 + $0x2c] sm:$0xf]
      %v1327 = vld [vmem:[%s1012 + $0x30] sm:$0xf]
      %v1328 = vld [vmem:[%s1012 + $0x34] sm:$0xf]
      %v1329 = vld [vmem:[%s1012 + $0x38] sm:$0xf]
      %v1330 = vld [vmem:[%s1012 + $0x3c] sm:$0xf]
      %v1331 = vld [vmem:[%s1012 + $0x40] sm:$0xf]
      %v1332 = vld [vmem:[%s1012 + $0x44] sm:$0xf]
      %v1333 = vld [vmem:[%s1012 + $0x48] sm:$0xf]
      %v1334 = vld [vmem:[%s1012 + $0x4c] sm:$0xf]
      %v1335 = vld [vmem:[%s1012 + $0x50] sm:$0xf]
      %v1336 = vld [vmem:[%s1012 + $0x54] sm:$0xf]
      %v1337 = vld [vmem:[%s1012 + $0x58] sm:$0xf]
      %v1338 = vld [vmem:[%s1012 + $0x5c] sm:$0xf]
      %s1339 = scalar_lea.vmem %s224, 256
      %v1340 = vld [vmem:[%s1339] sm:$0xf]
      %v1341 = vld [vmem:[%s1339 + $0x4] sm:$0xf]
      %v1342 = vld [vmem:[%s1339 + $0x8] sm:$0xf]
      %v1343 = vld [vmem:[%s1339 + $0xc] sm:$0xf]
      %v1344 = vld [vmem:[%s1339 + $0x10] sm:$0xf]
      %v1345 = vld [vmem:[%s1339 + $0x14] sm:$0xf]
      %v1346 = vld [vmem:[%s1339 + $0x18] sm:$0xf]
      %v1347 = vld [vmem:[%s1339 + $0x1c] sm:$0xf]
      %v1348 = vld [vmem:[%s1339 + $0x20] sm:$0xf]
      %v1349 = vld [vmem:[%s1339 + $0x24] sm:$0xf]
      %v1350 = vld [vmem:[%s1339 + $0x28] sm:$0xf]
      %v1351 = vld [vmem:[%s1339 + $0x2c] sm:$0xf]
      %v1352 = vld [vmem:[%s1339 + $0x30] sm:$0xf]
      %v1353 = vld [vmem:[%s1339 + $0x34] sm:$0xf]
      %v1354 = vld [vmem:[%s1339 + $0x38] sm:$0xf]
      %v1355 = vld [vmem:[%s1339 + $0x3c] sm:$0xf]
      %v1380 = vunpack.c.l.b16 %v1315
      %v1381 = vunpack.c.l.b16 %v1316
      %v1382 = vunpack.c.l.b16 %v1317
      %v1383 = vunpack.c.l.b16 %v1318
      %v1384 = vunpack.c.l.b16 %v1319
      %v1385 = vunpack.c.l.b16 %v1320
      %v1386 = vunpack.c.l.b16 %v1321
      %v1387 = vunpack.c.l.b16 %v1322
      %v1388 = vunpack.c.l.b16 %v1323
      %v1389 = vunpack.c.l.b16 %v1324
      %v1390 = vunpack.c.l.b16 %v1325
      %v1391 = vunpack.c.l.b16 %v1326
      %v1392 = vunpack.c.l.b16 %v1327
      %v1393 = vunpack.c.l.b16 %v1328
      %v1394 = vunpack.c.l.b16 %v1329
      %v1395 = vunpack.c.l.b16 %v1330
      %v1396 = vunpack.c.l.b16 %v1331
      %v1397 = vunpack.c.l.b16 %v1332
      %v1398 = vunpack.c.l.b16 %v1333
      %v1399 = vunpack.c.l.b16 %v1334
      %v1400 = vunpack.c.l.b16 %v1335
      %v1401 = vunpack.c.l.b16 %v1336
      %v1402 = vunpack.c.l.b16 %v1337
      %v1403 = vunpack.c.l.b16 %v1338
      %v1404 = vpack.c.b16 %v1381, %v1380
      %v1405 = vpack.c.b16 %v1383, %v1382
      %v1406 = vpack.c.b16 %v1385, %v1384
      %v1407 = vpack.c.b16 %v1387, %v1386
      %v1408 = vpack.c.b16 %v1389, %v1388
      %v1409 = vpack.c.b16 %v1391, %v1390
      %v1410 = vpack.c.b16 %v1393, %v1392
      %v1411 = vpack.c.b16 %v1395, %v1394
      %v1412 = vpack.c.b16 %v1397, %v1396
      %v1413 = vpack.c.b16 %v1399, %v1398
      %v1414 = vpack.c.b16 %v1401, %v1400
      %v1415 = vpack.c.b16 %v1403, %v1402
      %v1444 = vunpack.c.l.b16 %v1340
      %v1445 = vunpack.c.l.b16 %v1341
      %v1446 = vunpack.c.l.b16 %v1342
      %v1447 = vunpack.c.l.b16 %v1343
      %v1448 = vunpack.c.l.b16 %v1344
      %v1449 = vunpack.c.l.b16 %v1345
      %v1450 = vunpack.c.l.b16 %v1346
      %v1451 = vunpack.c.l.b16 %v1347
      %v1452 = vunpack.c.l.b16 %v1348
      %v1453 = vunpack.c.l.b16 %v1349
      %v1454 = vunpack.c.l.b16 %v1350
      %v1455 = vunpack.c.l.b16 %v1351
      %v1456 = vunpack.c.l.b16 %v1352
      %v1457 = vunpack.c.l.b16 %v1353
      %v1458 = vunpack.c.l.b16 %v1354
      %v1459 = vunpack.c.l.b16 %v1355
      %v1460 = vpack.c.b16 %v1445, %v1444
      %v1461 = vpack.c.b16 %v1447, %v1446
      %v1462 = vpack.c.b16 %v1449, %v1448
      %v1463 = vpack.c.b16 %v1451, %v1450
      %v1464 = vpack.c.b16 %v1453, %v1452
      %v1465 = vpack.c.b16 %v1455, %v1454
      %v1466 = vpack.c.b16 %v1457, %v1456
      %v1467 = vpack.c.b16 %v1459, %v1458
      %1476 = vmatpush.bf16.msra.mxu0 %v1467
      %1477 = vmatpush.bf16.msra.mxu0 %v1466
      %1478 = vmatpush.bf16.msra.mxu0 %v1465
      %1479 = vmatpush.bf16.msra.mxu0 %v1464
      %1480 = vmatpush.bf16.msra.mxu0 %v1463
      %1481 = vmatpush.bf16.msra.mxu0 %v1462
      %1482 = vmatpush.bf16.msra.mxu0 %v1461
      %1483 = vmatpush.bf16.msra.mxu0 %v1460
      %1484 = vmatmul.bf16.gmra.mxu0 %v1404
      %v1485 = vpop.f32.mrf.mxu0
      %v1486 = vadd.f32 0.0, %v1485
      %v1487 = vpop.f32.mrf.mxu0
      %v1488 = vadd.f32 0.0, %v1487
      %1489 = vmatmul.bf16.gmra.mxu0 %v1405
      %v1490 = vpop.f32.mrf.mxu0
      %v1491 = vadd.f32 0.0, %v1490
      %v1492 = vpop.f32.mrf.mxu0
      %v1493 = vadd.f32 0.0, %v1492
      %1494 = vmatmul.bf16.gmra.mxu0 %v1406
      %v1495 = vpop.f32.mrf.mxu0
      %v1496 = vadd.f32 0.0, %v1495
      %v1497 = vpop.f32.mrf.mxu0
      %v1498 = vadd.f32 0.0, %v1497
      %1499 = vmatmul.bf16.gmra.mxu0 %v1407
      %v1500 = vpop.f32.mrf.mxu0
      %v1501 = vadd.f32 0.0, %v1500
      %v1502 = vpop.f32.mrf.mxu0
      %v1503 = vadd.f32 0.0, %v1502
      %1504 = vmatmul.bf16.gmra.mxu0 %v1408
      %v1505 = vpop.f32.mrf.mxu0
      %v1506 = vadd.f32 0.0, %v1505
      %v1507 = vpop.f32.mrf.mxu0
      %v1508 = vadd.f32 0.0, %v1507
      %1509 = vmatmul.bf16.gmra.mxu0 %v1409
      %v1510 = vpop.f32.mrf.mxu0
      %v1511 = vadd.f32 0.0, %v1510
      %v1512 = vpop.f32.mrf.mxu0
      %v1513 = vadd.f32 0.0, %v1512
      %1514 = vmatmul.bf16.gmra.mxu0 %v1410
      %v1515 = vpop.f32.mrf.mxu0
      %v1516 = vadd.f32 0.0, %v1515
      %v1517 = vpop.f32.mrf.mxu0
      %v1518 = vadd.f32 0.0, %v1517
      %1519 = vmatmul.bf16.gmra.mxu0 %v1411
      %v1520 = vpop.f32.mrf.mxu0
      %v1521 = vadd.f32 0.0, %v1520
      %v1522 = vpop.f32.mrf.mxu0
      %v1523 = vadd.f32 0.0, %v1522
      %1524 = vmatmul.bf16.gmra.mxu0 %v1412
      %v1525 = vpop.f32.mrf.mxu0
      %v1526 = vadd.f32 0.0, %v1525
      %v1527 = vpop.f32.mrf.mxu0
      %v1528 = vadd.f32 0.0, %v1527
      %1529 = vmatmul.bf16.gmra.mxu0 %v1413
      %v1530 = vpop.f32.mrf.mxu0
      %v1531 = vadd.f32 0.0, %v1530
      %v1532 = vpop.f32.mrf.mxu0
      %v1533 = vadd.f32 0.0, %v1532
      %1534 = vmatmul.bf16.gmra.mxu0 %v1414
      %v1535 = vpop.f32.mrf.mxu0
      %v1536 = vadd.f32 0.0, %v1535
      %v1537 = vpop.f32.mrf.mxu0
      %v1538 = vadd.f32 0.0, %v1537
      %1539 = vmatmul.bf16.gmra.mxu0 %v1415
      %v1540 = vpop.f32.mrf.mxu0
      %v1541 = vadd.f32 0.0, %v1540
      %v1542 = vpop.f32.mrf.mxu0
      %v1543 = vadd.f32 0.0, %v1542
      %1544 = vdwg.mxu0
      %v1545 = vld [vmem:[%s729] sm:$0xff]
      %v1546 = vld [vmem:[%s729 + $0x8] sm:$0xff]
      %v1547 = vld [vmem:[%s729 + $0x10] sm:$0xff]
      %v1548 = vld [vmem:[%s729 + $0x18] sm:$0xff]
      %v1549 = vld [vmem:[%s729 + $0x20] sm:$0xff]
      %v1550 = vld [vmem:[%s729 + $0x28] sm:$0xff]
      %v1551 = vld [vmem:[%s729 + $0x30] sm:$0xff]
      %v1552 = vld [vmem:[%s729 + $0x38] sm:$0xff]
      %v1553 = vld [vmem:[%s729 + $0x40] sm:$0xff]
      %v1554 = vld [vmem:[%s729 + $0x48] sm:$0xff]
      %v1555 = vld [vmem:[%s729 + $0x50] sm:$0xff]
      %v1556 = vld [vmem:[%s729 + $0x58] sm:$0xff]
      %v1557 = vld [vmem:[%s729 + $0x60] sm:$0xff]
      %v1558 = vld [vmem:[%s729 + $0x68] sm:$0xff]
      %v1559 = vld [vmem:[%s729 + $0x70] sm:$0xff]
      %v1560 = vld [vmem:[%s729 + $0x78] sm:$0xff]
      %v1561 = vld [vmem:[%s729 + $0x80] sm:$0xff]
      %v1562 = vld [vmem:[%s729 + $0x88] sm:$0xff]
      %v1563 = vld [vmem:[%s729 + $0x90] sm:$0xff]
      %v1564 = vld [vmem:[%s729 + $0x98] sm:$0xff]
      %v1565 = vld [vmem:[%s729 + $0xa0] sm:$0xff]
      %v1566 = vld [vmem:[%s729 + $0xa8] sm:$0xff]
      %v1567 = vld [vmem:[%s729 + $0xb0] sm:$0xff]
      %v1568 = vld [vmem:[%s729 + $0xb8] sm:$0xff]
      %v1569 = vadd.f32 %v1545, %v1486
      %v1570 = vadd.f32 %v1546, %v1488
      %v1571 = vadd.f32 %v1547, %v1491
      %v1572 = vadd.f32 %v1548, %v1493
      %v1573 = vadd.f32 %v1549, %v1496
      %v1574 = vadd.f32 %v1550, %v1498
      %v1575 = vadd.f32 %v1551, %v1501
      %v1576 = vadd.f32 %v1552, %v1503
      %v1577 = vadd.f32 %v1553, %v1506
      %v1578 = vadd.f32 %v1554, %v1508
      %v1579 = vadd.f32 %v1555, %v1511
      %v1580 = vadd.f32 %v1556, %v1513
      %v1581 = vadd.f32 %v1557, %v1516
      %v1582 = vadd.f32 %v1558, %v1518
      %v1583 = vadd.f32 %v1559, %v1521
      %v1584 = vadd.f32 %v1560, %v1523
      %v1585 = vadd.f32 %v1561, %v1526
      %v1586 = vadd.f32 %v1562, %v1528
      %v1587 = vadd.f32 %v1563, %v1531
      %v1588 = vadd.f32 %v1564, %v1533
      %v1589 = vadd.f32 %v1565, %v1536
      %v1590 = vadd.f32 %v1566, %v1538
      %v1591 = vadd.f32 %v1567, %v1541
      %v1592 = vadd.f32 %v1568, %v1543
      %1593 = vst [vmem:[%s729] sm:$0xff] %v1569
      %1594 = vst [vmem:[%s729 + $0x8] sm:$0xff] %v1570
      %1595 = vst [vmem:[%s729 + $0x10] sm:$0xff] %v1571
      %1596 = vst [vmem:[%s729 + $0x18] sm:$0xff] %v1572
      %1597 = vst [vmem:[%s729 + $0x20] sm:$0xff] %v1573
      %1598 = vst [vmem:[%s729 + $0x28] sm:$0xff] %v1574
      %1599 = vst [vmem:[%s729 + $0x30] sm:$0xff] %v1575
      %1600 = vst [vmem:[%s729 + $0x38] sm:$0xff] %v1576
      %1601 = vst [vmem:[%s729 + $0x40] sm:$0xff] %v1577
      %1602 = vst [vmem:[%s729 + $0x48] sm:$0xff] %v1578
      %1603 = vst [vmem:[%s729 + $0x50] sm:$0xff] %v1579
      %1604 = vst [vmem:[%s729 + $0x58] sm:$0xff] %v1580
      %1605 = vst [vmem:[%s729 + $0x60] sm:$0xff] %v1581
      %1606 = vst [vmem:[%s729 + $0x68] sm:$0xff] %v1582
      %1607 = vst [vmem:[%s729 + $0x70] sm:$0xff] %v1583
      %1608 = vst [vmem:[%s729 + $0x78] sm:$0xff] %v1584
      %1609 = vst [vmem:[%s729 + $0x80] sm:$0xff] %v1585
      %1610 = vst [vmem:[%s729 + $0x88] sm:$0xff] %v1586
      %1611 = vst [vmem:[%s729 + $0x90] sm:$0xff] %v1587
      %1612 = vst [vmem:[%s729 + $0x98] sm:$0xff] %v1588
      %1613 = vst [vmem:[%s729 + $0xa0] sm:$0xff] %v1589
      %1614 = vst [vmem:[%s729 + $0xa8] sm:$0xff] %v1590
      %1615 = vst [vmem:[%s729 + $0xb0] sm:$0xff] %v1591
      %1616 = vst [vmem:[%s729 + $0xb8] sm:$0xff] %v1592
      %v1617 = vld [vmem:[%s1012] sm:$0xf]
      %v1618 = vld [vmem:[%s1012 + $0x4] sm:$0xf]
      %v1619 = vld [vmem:[%s1012 + $0x8] sm:$0xf]
      %v1620 = vld [vmem:[%s1012 + $0xc] sm:$0xf]
      %v1621 = vld [vmem:[%s1012 + $0x10] sm:$0xf]
      %v1622 = vld [vmem:[%s1012 + $0x14] sm:$0xf]
      %v1623 = vld [vmem:[%s1012 + $0x18] sm:$0xf]
      %v1624 = vld [vmem:[%s1012 + $0x1c] sm:$0xf]
      %v1625 = vld [vmem:[%s1012 + $0x20] sm:$0xf]
      %v1626 = vld [vmem:[%s1012 + $0x24] sm:$0xf]
      %v1627 = vld [vmem:[%s1012 + $0x28] sm:$0xf]
      %v1628 = vld [vmem:[%s1012 + $0x2c] sm:$0xf]
      %v1629 = vld [vmem:[%s1012 + $0x30] sm:$0xf]
      %v1630 = vld [vmem:[%s1012 + $0x34] sm:$0xf]
      %v1631 = vld [vmem:[%s1012 + $0x38] sm:$0xf]
      %v1632 = vld [vmem:[%s1012 + $0x3c] sm:$0xf]
      %v1633 = vld [vmem:[%s1012 + $0x40] sm:$0xf]
      %v1634 = vld [vmem:[%s1012 + $0x44] sm:$0xf]
      %v1635 = vld [vmem:[%s1012 + $0x48] sm:$0xf]
      %v1636 = vld [vmem:[%s1012 + $0x4c] sm:$0xf]
      %v1637 = vld [vmem:[%s1012 + $0x50] sm:$0xf]
      %v1638 = vld [vmem:[%s1012 + $0x54] sm:$0xf]
      %v1639 = vld [vmem:[%s1012 + $0x58] sm:$0xf]
      %v1640 = vld [vmem:[%s1012 + $0x5c] sm:$0xf]
      %s1641 = scalar_lea.vmem %s224, 320
      %v1642 = vld [vmem:[%s1641] sm:$0xf]
      %v1643 = vld [vmem:[%s1641 + $0x4] sm:$0xf]
      %v1644 = vld [vmem:[%s1641 + $0x8] sm:$0xf]
      %v1645 = vld [vmem:[%s1641 + $0xc] sm:$0xf]
      %v1646 = vld [vmem:[%s1641 + $0x10] sm:$0xf]
      %v1647 = vld [vmem:[%s1641 + $0x14] sm:$0xf]
      %v1648 = vld [vmem:[%s1641 + $0x18] sm:$0xf]
      %v1649 = vld [vmem:[%s1641 + $0x1c] sm:$0xf]
      %v1650 = vld [vmem:[%s1641 + $0x20] sm:$0xf]
      %v1651 = vld [vmem:[%s1641 + $0x24] sm:$0xf]
      %v1652 = vld [vmem:[%s1641 + $0x28] sm:$0xf]
      %v1653 = vld [vmem:[%s1641 + $0x2c] sm:$0xf]
      %v1654 = vld [vmem:[%s1641 + $0x30] sm:$0xf]
      %v1655 = vld [vmem:[%s1641 + $0x34] sm:$0xf]
      %v1656 = vld [vmem:[%s1641 + $0x38] sm:$0xf]
      %v1657 = vld [vmem:[%s1641 + $0x3c] sm:$0xf]
      %v1682 = vunpack.c.l.b16 %v1617
      %v1683 = vunpack.c.l.b16 %v1618
      %v1684 = vunpack.c.l.b16 %v1619
      %v1685 = vunpack.c.l.b16 %v1620
      %v1686 = vunpack.c.l.b16 %v1621
      %v1687 = vunpack.c.l.b16 %v1622
      %v1688 = vunpack.c.l.b16 %v1623
      %v1689 = vunpack.c.l.b16 %v1624
      %v1690 = vunpack.c.l.b16 %v1625
      %v1691 = vunpack.c.l.b16 %v1626
      %v1692 = vunpack.c.l.b16 %v1627
      %v1693 = vunpack.c.l.b16 %v1628
      %v1694 = vunpack.c.l.b16 %v1629
      %v1695 = vunpack.c.l.b16 %v1630
      %v1696 = vunpack.c.l.b16 %v1631
      %v1697 = vunpack.c.l.b16 %v1632
      %v1698 = vunpack.c.l.b16 %v1633
      %v1699 = vunpack.c.l.b16 %v1634
      %v1700 = vunpack.c.l.b16 %v1635
      %v1701 = vunpack.c.l.b16 %v1636
      %v1702 = vunpack.c.l.b16 %v1637
      %v1703 = vunpack.c.l.b16 %v1638
      %v1704 = vunpack.c.l.b16 %v1639
      %v1705 = vunpack.c.l.b16 %v1640
      %v1706 = vpack.c.b16 %v1683, %v1682
      %v1707 = vpack.c.b16 %v1685, %v1684
      %v1708 = vpack.c.b16 %v1687, %v1686
      %v1709 = vpack.c.b16 %v1689, %v1688
      %v1710 = vpack.c.b16 %v1691, %v1690
      %v1711 = vpack.c.b16 %v1693, %v1692
      %v1712 = vpack.c.b16 %v1695, %v1694
      %v1713 = vpack.c.b16 %v1697, %v1696
      %v1714 = vpack.c.b16 %v1699, %v1698
      %v1715 = vpack.c.b16 %v1701, %v1700
      %v1716 = vpack.c.b16 %v1703, %v1702
      %v1717 = vpack.c.b16 %v1705, %v1704
      %v1746 = vunpack.c.l.b16 %v1642
      %v1747 = vunpack.c.l.b16 %v1643
      %v1748 = vunpack.c.l.b16 %v1644
      %v1749 = vunpack.c.l.b16 %v1645
      %v1750 = vunpack.c.l.b16 %v1646
      %v1751 = vunpack.c.l.b16 %v1647
      %v1752 = vunpack.c.l.b16 %v1648
      %v1753 = vunpack.c.l.b16 %v1649
      %v1754 = vunpack.c.l.b16 %v1650
      %v1755 = vunpack.c.l.b16 %v1651
      %v1756 = vunpack.c.l.b16 %v1652
      %v1757 = vunpack.c.l.b16 %v1653
      %v1758 = vunpack.c.l.b16 %v1654
      %v1759 = vunpack.c.l.b16 %v1655
      %v1760 = vunpack.c.l.b16 %v1656
      %v1761 = vunpack.c.l.b16 %v1657
      %v1762 = vpack.c.b16 %v1747, %v1746
      %v1763 = vpack.c.b16 %v1749, %v1748
      %v1764 = vpack.c.b16 %v1751, %v1750
      %v1765 = vpack.c.b16 %v1753, %v1752
      %v1766 = vpack.c.b16 %v1755, %v1754
      %v1767 = vpack.c.b16 %v1757, %v1756
      %v1768 = vpack.c.b16 %v1759, %v1758
      %v1769 = vpack.c.b16 %v1761, %v1760
      %1778 = vmatpush.bf16.msra.mxu0 %v1769
      %1779 = vmatpush.bf16.msra.mxu0 %v1768
      %1780 = vmatpush.bf16.msra.mxu0 %v1767
      %1781 = vmatpush.bf16.msra.mxu0 %v1766
      %1782 = vmatpush.bf16.msra.mxu0 %v1765
      %1783 = vmatpush.bf16.msra.mxu0 %v1764
      %1784 = vmatpush.bf16.msra.mxu0 %v1763
      %1785 = vmatpush.bf16.msra.mxu0 %v1762
      %1786 = vmatmul.bf16.gmra.mxu0 %v1706
      %v1787 = vpop.f32.mrf.mxu0
      %v1788 = vadd.f32 0.0, %v1787
      %v1789 = vpop.f32.mrf.mxu0
      %v1790 = vadd.f32 0.0, %v1789
      %1791 = vmatmul.bf16.gmra.mxu0 %v1707
      %v1792 = vpop.f32.mrf.mxu0
      %v1793 = vadd.f32 0.0, %v1792
      %v1794 = vpop.f32.mrf.mxu0
      %v1795 = vadd.f32 0.0, %v1794
      %1796 = vmatmul.bf16.gmra.mxu0 %v1708
      %v1797 = vpop.f32.mrf.mxu0
      %v1798 = vadd.f32 0.0, %v1797
      %v1799 = vpop.f32.mrf.mxu0
      %v1800 = vadd.f32 0.0, %v1799
      %1801 = vmatmul.bf16.gmra.mxu0 %v1709
      %v1802 = vpop.f32.mrf.mxu0
      %v1803 = vadd.f32 0.0, %v1802
      %v1804 = vpop.f32.mrf.mxu0
      %v1805 = vadd.f32 0.0, %v1804
      %1806 = vmatmul.bf16.gmra.mxu0 %v1710
      %v1807 = vpop.f32.mrf.mxu0
      %v1808 = vadd.f32 0.0, %v1807
      %v1809 = vpop.f32.mrf.mxu0
      %v1810 = vadd.f32 0.0, %v1809
      %1811 = vmatmul.bf16.gmra.mxu0 %v1711
      %v1812 = vpop.f32.mrf.mxu0
      %v1813 = vadd.f32 0.0, %v1812
      %v1814 = vpop.f32.mrf.mxu0
      %v1815 = vadd.f32 0.0, %v1814
      %1816 = vmatmul.bf16.gmra.mxu0 %v1712
      %v1817 = vpop.f32.mrf.mxu0
      %v1818 = vadd.f32 0.0, %v1817
      %v1819 = vpop.f32.mrf.mxu0
      %v1820 = vadd.f32 0.0, %v1819
      %1821 = vmatmul.bf16.gmra.mxu0 %v1713
      %v1822 = vpop.f32.mrf.mxu0
      %v1823 = vadd.f32 0.0, %v1822
      %v1824 = vpop.f32.mrf.mxu0
      %v1825 = vadd.f32 0.0, %v1824
      %1826 = vmatmul.bf16.gmra.mxu0 %v1714
      %v1827 = vpop.f32.mrf.mxu0
      %v1828 = vadd.f32 0.0, %v1827
      %v1829 = vpop.f32.mrf.mxu0
      %v1830 = vadd.f32 0.0, %v1829
      %1831 = vmatmul.bf16.gmra.mxu0 %v1715
      %v1832 = vpop.f32.mrf.mxu0
      %v1833 = vadd.f32 0.0, %v1832
      %v1834 = vpop.f32.mrf.mxu0
      %v1835 = vadd.f32 0.0, %v1834
      %1836 = vmatmul.bf16.gmra.mxu0 %v1716
      %v1837 = vpop.f32.mrf.mxu0
      %v1838 = vadd.f32 0.0, %v1837
      %v1839 = vpop.f32.mrf.mxu0
      %v1840 = vadd.f32 0.0, %v1839
      %1841 = vmatmul.bf16.gmra.mxu0 %v1717
      %v1842 = vpop.f32.mrf.mxu0
      %v1843 = vadd.f32 0.0, %v1842
      %v1844 = vpop.f32.mrf.mxu0
      %v1845 = vadd.f32 0.0, %v1844
      %1846 = vdwg.mxu0
      %v1847 = vld [vmem:[%s984] sm:$0xff]
      %v1848 = vld [vmem:[%s984 + $0x8] sm:$0xff]
      %v1849 = vld [vmem:[%s984 + $0x10] sm:$0xff]
      %v1850 = vld [vmem:[%s984 + $0x18] sm:$0xff]
      %v1851 = vld [vmem:[%s984 + $0x20] sm:$0xff]
      %v1852 = vld [vmem:[%s984 + $0x28] sm:$0xff]
      %v1853 = vld [vmem:[%s984 + $0x30] sm:$0xff]
      %v1854 = vld [vmem:[%s984 + $0x38] sm:$0xff]
      %v1855 = vld [vmem:[%s984 + $0x40] sm:$0xff]
      %v1856 = vld [vmem:[%s984 + $0x48] sm:$0xff]
      %v1857 = vld [vmem:[%s984 + $0x50] sm:$0xff]
      %v1858 = vld [vmem:[%s984 + $0x58] sm:$0xff]
      %v1859 = vld [vmem:[%s984 + $0x60] sm:$0xff]
      %v1860 = vld [vmem:[%s984 + $0x68] sm:$0xff]
      %v1861 = vld [vmem:[%s984 + $0x70] sm:$0xff]
      %v1862 = vld [vmem:[%s984 + $0x78] sm:$0xff]
      %v1863 = vld [vmem:[%s984 + $0x80] sm:$0xff]
      %v1864 = vld [vmem:[%s984 + $0x88] sm:$0xff]
      %v1865 = vld [vmem:[%s984 + $0x90] sm:$0xff]
      %v1866 = vld [vmem:[%s984 + $0x98] sm:$0xff]
      %v1867 = vld [vmem:[%s984 + $0xa0] sm:$0xff]
      %v1868 = vld [vmem:[%s984 + $0xa8] sm:$0xff]
      %v1869 = vld [vmem:[%s984 + $0xb0] sm:$0xff]
      %v1870 = vld [vmem:[%s984 + $0xb8] sm:$0xff]
      %v1871 = vadd.f32 %v1847, %v1788
      %v1872 = vadd.f32 %v1848, %v1790
      %v1873 = vadd.f32 %v1849, %v1793
      %v1874 = vadd.f32 %v1850, %v1795
      %v1875 = vadd.f32 %v1851, %v1798
      %v1876 = vadd.f32 %v1852, %v1800
      %v1877 = vadd.f32 %v1853, %v1803
      %v1878 = vadd.f32 %v1854, %v1805
      %v1879 = vadd.f32 %v1855, %v1808
      %v1880 = vadd.f32 %v1856, %v1810
      %v1881 = vadd.f32 %v1857, %v1813
      %v1882 = vadd.f32 %v1858, %v1815
      %v1883 = vadd.f32 %v1859, %v1818
      %v1884 = vadd.f32 %v1860, %v1820
      %v1885 = vadd.f32 %v1861, %v1823
      %v1886 = vadd.f32 %v1862, %v1825
      %v1887 = vadd.f32 %v1863, %v1828
      %v1888 = vadd.f32 %v1864, %v1830
      %v1889 = vadd.f32 %v1865, %v1833
      %v1890 = vadd.f32 %v1866, %v1835
      %v1891 = vadd.f32 %v1867, %v1838
      %v1892 = vadd.f32 %v1868, %v1840
      %v1893 = vadd.f32 %v1869, %v1843
      %v1894 = vadd.f32 %v1870, %v1845
      %1895 = vst [vmem:[%s984] sm:$0xff] %v1871
      %1896 = vst [vmem:[%s984 + $0x8] sm:$0xff] %v1872
      %1897 = vst [vmem:[%s984 + $0x10] sm:$0xff] %v1873
      %1898 = vst [vmem:[%s984 + $0x18] sm:$0xff] %v1874
      %1899 = vst [vmem:[%s984 + $0x20] sm:$0xff] %v1875
      %1900 = vst [vmem:[%s984 + $0x28] sm:$0xff] %v1876
      %1901 = vst [vmem:[%s984 + $0x30] sm:$0xff] %v1877
      %1902 = vst [vmem:[%s984 + $0x38] sm:$0xff] %v1878
      %1903 = vst [vmem:[%s984 + $0x40] sm:$0xff] %v1879
      %1904 = vst [vmem:[%s984 + $0x48] sm:$0xff] %v1880
      %1905 = vst [vmem:[%s984 + $0x50] sm:$0xff] %v1881
      %1906 = vst [vmem:[%s984 + $0x58] sm:$0xff] %v1882
      %1907 = vst [vmem:[%s984 + $0x60] sm:$0xff] %v1883
      %1908 = vst [vmem:[%s984 + $0x68] sm:$0xff] %v1884
      %1909 = vst [vmem:[%s984 + $0x70] sm:$0xff] %v1885
      %1910 = vst [vmem:[%s984 + $0x78] sm:$0xff] %v1886
      %1911 = vst [vmem:[%s984 + $0x80] sm:$0xff] %v1887
      %1912 = vst [vmem:[%s984 + $0x88] sm:$0xff] %v1888
      %1913 = vst [vmem:[%s984 + $0x90] sm:$0xff] %v1889
      %1914 = vst [vmem:[%s984 + $0x98] sm:$0xff] %v1890
      %1915 = vst [vmem:[%s984 + $0xa0] sm:$0xff] %v1891
      %1916 = vst [vmem:[%s984 + $0xa8] sm:$0xff] %v1892
      %1917 = vst [vmem:[%s984 + $0xb0] sm:$0xff] %v1893
      %1918 = vst [vmem:[%s984 + $0xb8] sm:$0xff] %v1894
      %s1919 = sadd.s32 %s242, 2
      %s1920 = smul.u32 %s1919, 3
      %s1921 = smul.addr %s1920, 4
      %s1922 = scalar_lea.vmem %s220, %s1921
      %v1923 = vld [vmem:[%s1922] sm:$0xf]
      %v1924 = vld [vmem:[%s1922 + $0x4] sm:$0xf]
      %v1925 = vld [vmem:[%s1922 + $0x8] sm:$0xf]
      %v1926 = vld [vmem:[%s1922 + $0xc] sm:$0xf]
      %v1927 = vld [vmem:[%s1922 + $0x10] sm:$0xf]
      %v1928 = vld [vmem:[%s1922 + $0x14] sm:$0xf]
      %v1929 = vld [vmem:[%s1922 + $0x18] sm:$0xf]
      %v1930 = vld [vmem:[%s1922 + $0x1c] sm:$0xf]
      %v1931 = vld [vmem:[%s1922 + $0x20] sm:$0xf]
      %v1932 = vld [vmem:[%s1922 + $0x24] sm:$0xf]
      %v1933 = vld [vmem:[%s1922 + $0x28] sm:$0xf]
      %v1934 = vld [vmem:[%s1922 + $0x2c] sm:$0xf]
      %v1935 = vld [vmem:[%s1922 + $0x30] sm:$0xf]
      %v1936 = vld [vmem:[%s1922 + $0x34] sm:$0xf]
      %v1937 = vld [vmem:[%s1922 + $0x38] sm:$0xf]
      %v1938 = vld [vmem:[%s1922 + $0x3c] sm:$0xf]
      %v1939 = vld [vmem:[%s1922 + $0x40] sm:$0xf]
      %v1940 = vld [vmem:[%s1922 + $0x44] sm:$0xf]
      %v1941 = vld [vmem:[%s1922 + $0x48] sm:$0xf]
      %v1942 = vld [vmem:[%s1922 + $0x4c] sm:$0xf]
      %v1943 = vld [vmem:[%s1922 + $0x50] sm:$0xf]
      %v1944 = vld [vmem:[%s1922 + $0x54] sm:$0xf]
      %v1945 = vld [vmem:[%s1922 + $0x58] sm:$0xf]
      %v1946 = vld [vmem:[%s1922 + $0x5c] sm:$0xf]
      %s1947 = scalar_lea.vmem %s224, 384
      %v1948 = vld [vmem:[%s1947] sm:$0xf]
      %v1949 = vld [vmem:[%s1947 + $0x4] sm:$0xf]
      %v1950 = vld [vmem:[%s1947 + $0x8] sm:$0xf]
      %v1951 = vld [vmem:[%s1947 + $0xc] sm:$0xf]
      %v1952 = vld [vmem:[%s1947 + $0x10] sm:$0xf]
      %v1953 = vld [vmem:[%s1947 + $0x14] sm:$0xf]
      %v1954 = vld [vmem:[%s1947 + $0x18] sm:$0xf]
      %v1955 = vld [vmem:[%s1947 + $0x1c] sm:$0xf]
      %v1956 = vld [vmem:[%s1947 + $0x20] sm:$0xf]
      %v1957 = vld [vmem:[%s1947 + $0x24] sm:$0xf]
      %v1958 = vld [vmem:[%s1947 + $0x28] sm:$0xf]
      %v1959 = vld [vmem:[%s1947 + $0x2c] sm:$0xf]
      %v1960 = vld [vmem:[%s1947 + $0x30] sm:$0xf]
      %v1961 = vld [vmem:[%s1947 + $0x34] sm:$0xf]
      %v1962 = vld [vmem:[%s1947 + $0x38] sm:$0xf]
      %v1963 = vld [vmem:[%s1947 + $0x3c] sm:$0xf]
      %v1988 = vunpack.c.l.b16 %v1923
      %v1989 = vunpack.c.l.b16 %v1924
      %v1990 = vunpack.c.l.b16 %v1925
      %v1991 = vunpack.c.l.b16 %v1926
      %v1992 = vunpack.c.l.b16 %v1927
      %v1993 = vunpack.c.l.b16 %v1928
      %v1994 = vunpack.c.l.b16 %v1929
      %v1995 = vunpack.c.l.b16 %v1930
      %v1996 = vunpack.c.l.b16 %v1931
      %v1997 = vunpack.c.l.b16 %v1932
      %v1998 = vunpack.c.l.b16 %v1933
      %v1999 = vunpack.c.l.b16 %v1934
      %v2000 = vunpack.c.l.b16 %v1935
      %v2001 = vunpack.c.l.b16 %v1936
      %v2002 = vunpack.c.l.b16 %v1937
      %v2003 = vunpack.c.l.b16 %v1938
      %v2004 = vunpack.c.l.b16 %v1939
      %v2005 = vunpack.c.l.b16 %v1940
      %v2006 = vunpack.c.l.b16 %v1941
      %v2007 = vunpack.c.l.b16 %v1942
      %v2008 = vunpack.c.l.b16 %v1943
      %v2009 = vunpack.c.l.b16 %v1944
      %v2010 = vunpack.c.l.b16 %v1945
      %v2011 = vunpack.c.l.b16 %v1946
      %v2012 = vpack.c.b16 %v1989, %v1988
      %v2013 = vpack.c.b16 %v1991, %v1990
      %v2014 = vpack.c.b16 %v1993, %v1992
      %v2015 = vpack.c.b16 %v1995, %v1994
      %v2016 = vpack.c.b16 %v1997, %v1996
      %v2017 = vpack.c.b16 %v1999, %v1998
      %v2018 = vpack.c.b16 %v2001, %v2000
      %v2019 = vpack.c.b16 %v2003, %v2002
      %v2020 = vpack.c.b16 %v2005, %v2004
      %v2021 = vpack.c.b16 %v2007, %v2006
      %v2022 = vpack.c.b16 %v2009, %v2008
      %v2023 = vpack.c.b16 %v2011, %v2010
      %v2052 = vunpack.c.l.b16 %v1948
      %v2053 = vunpack.c.l.b16 %v1949
      %v2054 = vunpack.c.l.b16 %v1950
      %v2055 = vunpack.c.l.b16 %v1951
      %v2056 = vunpack.c.l.b16 %v1952
      %v2057 = vunpack.c.l.b16 %v1953
      %v2058 = vunpack.c.l.b16 %v1954
      %v2059 = vunpack.c.l.b16 %v1955
      %v2060 = vunpack.c.l.b16 %v1956
      %v2061 = vunpack.c.l.b16 %v1957
      %v2062 = vunpack.c.l.b16 %v1958
      %v2063 = vunpack.c.l.b16 %v1959
      %v2064 = vunpack.c.l.b16 %v1960
      %v2065 = vunpack.c.l.b16 %v1961
      %v2066 = vunpack.c.l.b16 %v1962
      %v2067 = vunpack.c.l.b16 %v1963
      %v2068 = vpack.c.b16 %v2053, %v2052
      %v2069 = vpack.c.b16 %v2055, %v2054
      %v2070 = vpack.c.b16 %v2057, %v2056
      %v2071 = vpack.c.b16 %v2059, %v2058
      %v2072 = vpack.c.b16 %v2061, %v2060
      %v2073 = vpack.c.b16 %v2063, %v2062
      %v2074 = vpack.c.b16 %v2065, %v2064
      %v2075 = vpack.c.b16 %v2067, %v2066
      %2084 = vmatpush.bf16.msra.mxu0 %v2075
      %2085 = vmatpush.bf16.msra.mxu0 %v2074
      %2086 = vmatpush.bf16.msra.mxu0 %v2073
      %2087 = vmatpush.bf16.msra.mxu0 %v2072
      %2088 = vmatpush.bf16.msra.mxu0 %v2071
      %2089 = vmatpush.bf16.msra.mxu0 %v2070
      %2090 = vmatpush.bf16.msra.mxu0 %v2069
      %2091 = vmatpush.bf16.msra.mxu0 %v2068
      %2092 = vmatmul.bf16.gmra.mxu0 %v2012
      %v2093 = vpop.f32.mrf.mxu0
      %v2094 = vadd.f32 0.0, %v2093
      %v2095 = vpop.f32.mrf.mxu0
      %v2096 = vadd.f32 0.0, %v2095
      %2097 = vmatmul.bf16.gmra.mxu0 %v2013
      %v2098 = vpop.f32.mrf.mxu0
      %v2099 = vadd.f32 0.0, %v2098
      %v2100 = vpop.f32.mrf.mxu0
      %v2101 = vadd.f32 0.0, %v2100
      %2102 = vmatmul.bf16.gmra.mxu0 %v2014
      %v2103 = vpop.f32.mrf.mxu0
      %v2104 = vadd.f32 0.0, %v2103
      %v2105 = vpop.f32.mrf.mxu0
      %v2106 = vadd.f32 0.0, %v2105
      %2107 = vmatmul.bf16.gmra.mxu0 %v2015
      %v2108 = vpop.f32.mrf.mxu0
      %v2109 = vadd.f32 0.0, %v2108
      %v2110 = vpop.f32.mrf.mxu0
      %v2111 = vadd.f32 0.0, %v2110
      %2112 = vmatmul.bf16.gmra.mxu0 %v2016
      %v2113 = vpop.f32.mrf.mxu0
      %v2114 = vadd.f32 0.0, %v2113
      %v2115 = vpop.f32.mrf.mxu0
      %v2116 = vadd.f32 0.0, %v2115
      %2117 = vmatmul.bf16.gmra.mxu0 %v2017
      %v2118 = vpop.f32.mrf.mxu0
      %v2119 = vadd.f32 0.0, %v2118
      %v2120 = vpop.f32.mrf.mxu0
      %v2121 = vadd.f32 0.0, %v2120
      %2122 = vmatmul.bf16.gmra.mxu0 %v2018
      %v2123 = vpop.f32.mrf.mxu0
      %v2124 = vadd.f32 0.0, %v2123
      %v2125 = vpop.f32.mrf.mxu0
      %v2126 = vadd.f32 0.0, %v2125
      %2127 = vmatmul.bf16.gmra.mxu0 %v2019
      %v2128 = vpop.f32.mrf.mxu0
      %v2129 = vadd.f32 0.0, %v2128
      %v2130 = vpop.f32.mrf.mxu0
      %v2131 = vadd.f32 0.0, %v2130
      %2132 = vmatmul.bf16.gmra.mxu0 %v2020
      %v2133 = vpop.f32.mrf.mxu0
      %v2134 = vadd.f32 0.0, %v2133
      %v2135 = vpop.f32.mrf.mxu0
      %v2136 = vadd.f32 0.0, %v2135
      %2137 = vmatmul.bf16.gmra.mxu0 %v2021
      %v2138 = vpop.f32.mrf.mxu0
      %v2139 = vadd.f32 0.0, %v2138
      %v2140 = vpop.f32.mrf.mxu0
      %v2141 = vadd.f32 0.0, %v2140
      %2142 = vmatmul.bf16.gmra.mxu0 %v2022
      %v2143 = vpop.f32.mrf.mxu0
      %v2144 = vadd.f32 0.0, %v2143
      %v2145 = vpop.f32.mrf.mxu0
      %v2146 = vadd.f32 0.0, %v2145
      %2147 = vmatmul.bf16.gmra.mxu0 %v2023
      %v2148 = vpop.f32.mrf.mxu0
      %v2149 = vadd.f32 0.0, %v2148
      %v2150 = vpop.f32.mrf.mxu0
      %v2151 = vadd.f32 0.0, %v2150
      %2152 = vdwg.mxu0
      %v2153 = vld [vmem:[#allocation2] sm:$0xff]
      %v2154 = vld [vmem:[#allocation2 + $0x8] sm:$0xff]
      %v2155 = vld [vmem:[#allocation2 + $0x10] sm:$0xff]
      %v2156 = vld [vmem:[#allocation2 + $0x18] sm:$0xff]
      %v2157 = vld [vmem:[#allocation2 + $0x20] sm:$0xff]
      %v2158 = vld [vmem:[#allocation2 + $0x28] sm:$0xff]
      %v2159 = vld [vmem:[#allocation2 + $0x30] sm:$0xff]
      %v2160 = vld [vmem:[#allocation2 + $0x38] sm:$0xff]
      %v2161 = vld [vmem:[#allocation2 + $0x40] sm:$0xff]
      %v2162 = vld [vmem:[#allocation2 + $0x48] sm:$0xff]
      %v2163 = vld [vmem:[#allocation2 + $0x50] sm:$0xff]
      %v2164 = vld [vmem:[#allocation2 + $0x58] sm:$0xff]
      %v2165 = vld [vmem:[#allocation2 + $0x60] sm:$0xff]
      %v2166 = vld [vmem:[#allocation2 + $0x68] sm:$0xff]
      %v2167 = vld [vmem:[#allocation2 + $0x70] sm:$0xff]
      %v2168 = vld [vmem:[#allocation2 + $0x78] sm:$0xff]
      %v2169 = vld [vmem:[#allocation2 + $0x80] sm:$0xff]
      %v2170 = vld [vmem:[#allocation2 + $0x88] sm:$0xff]
      %v2171 = vld [vmem:[#allocation2 + $0x90] sm:$0xff]
      %v2172 = vld [vmem:[#allocation2 + $0x98] sm:$0xff]
      %v2173 = vld [vmem:[#allocation2 + $0xa0] sm:$0xff]
      %v2174 = vld [vmem:[#allocation2 + $0xa8] sm:$0xff]
      %v2175 = vld [vmem:[#allocation2 + $0xb0] sm:$0xff]
      %v2176 = vld [vmem:[#allocation2 + $0xb8] sm:$0xff]
      %v2177 = vadd.f32 %v2153, %v2094
      %v2178 = vadd.f32 %v2154, %v2096
      %v2179 = vadd.f32 %v2155, %v2099
      %v2180 = vadd.f32 %v2156, %v2101
      %v2181 = vadd.f32 %v2157, %v2104
      %v2182 = vadd.f32 %v2158, %v2106
      %v2183 = vadd.f32 %v2159, %v2109
      %v2184 = vadd.f32 %v2160, %v2111
      %v2185 = vadd.f32 %v2161, %v2114
      %v2186 = vadd.f32 %v2162, %v2116
      %v2187 = vadd.f32 %v2163, %v2119
      %v2188 = vadd.f32 %v2164, %v2121
      %v2189 = vadd.f32 %v2165, %v2124
      %v2190 = vadd.f32 %v2166, %v2126
      %v2191 = vadd.f32 %v2167, %v2129
      %v2192 = vadd.f32 %v2168, %v2131
      %v2193 = vadd.f32 %v2169, %v2134
      %v2194 = vadd.f32 %v2170, %v2136
      %v2195 = vadd.f32 %v2171, %v2139
      %v2196 = vadd.f32 %v2172, %v2141
      %v2197 = vadd.f32 %v2173, %v2144
      %v2198 = vadd.f32 %v2174, %v2146
      %v2199 = vadd.f32 %v2175, %v2149
      %v2200 = vadd.f32 %v2176, %v2151
      %2201 = vst [vmem:[#allocation2] sm:$0xff] %v2177
      %2202 = vst [vmem:[#allocation2 + $0x8] sm:$0xff] %v2178
      %2203 = vst [vmem:[#allocation2 + $0x10] sm:$0xff] %v2179
      %2204 = vst [vmem:[#allocation2 + $0x18] sm:$0xff] %v2180
      %2205 = vst [vmem:[#allocation2 + $0x20] sm:$0xff] %v2181
      %2206 = vst [vmem:[#allocation2 + $0x28] sm:$0xff] %v2182
      %2207 = vst [vmem:[#allocation2 + $0x30] sm:$0xff] %v2183
      %2208 = vst [vmem:[#allocation2 + $0x38] sm:$0xff] %v2184
      %2209 = vst [vmem:[#allocation2 + $0x40] sm:$0xff] %v2185
      %2210 = vst [vmem:[#allocation2 + $0x48] sm:$0xff] %v2186
      %2211 = vst [vmem:[#allocation2 + $0x50] sm:$0xff] %v2187
      %2212 = vst [vmem:[#allocation2 + $0x58] sm:$0xff] %v2188
      %2213 = vst [vmem:[#allocation2 + $0x60] sm:$0xff] %v2189
      %2214 = vst [vmem:[#allocation2 + $0x68] sm:$0xff] %v2190
      %2215 = vst [vmem:[#allocation2 + $0x70] sm:$0xff] %v2191
      %2216 = vst [vmem:[#allocation2 + $0x78] sm:$0xff] %v2192
      %2217 = vst [vmem:[#allocation2 + $0x80] sm:$0xff] %v2193
      %2218 = vst [vmem:[#allocation2 + $0x88] sm:$0xff] %v2194
      %2219 = vst [vmem:[#allocation2 + $0x90] sm:$0xff] %v2195
      %2220 = vst [vmem:[#allocation2 + $0x98] sm:$0xff] %v2196
      %2221 = vst [vmem:[#allocation2 + $0xa0] sm:$0xff] %v2197
      %2222 = vst [vmem:[#allocation2 + $0xa8] sm:$0xff] %v2198
      %2223 = vst [vmem:[#allocation2 + $0xb0] sm:$0xff] %v2199
      %2224 = vst [vmem:[#allocation2 + $0xb8] sm:$0xff] %v2200
      %v2225 = vld [vmem:[%s1922] sm:$0xf]
      %v2226 = vld [vmem:[%s1922 + $0x4] sm:$0xf]
      %v2227 = vld [vmem:[%s1922 + $0x8] sm:$0xf]
      %v2228 = vld [vmem:[%s1922 + $0xc] sm:$0xf]
      %v2229 = vld [vmem:[%s1922 + $0x10] sm:$0xf]
      %v2230 = vld [vmem:[%s1922 + $0x14] sm:$0xf]
      %v2231 = vld [vmem:[%s1922 + $0x18] sm:$0xf]
      %v2232 = vld [vmem:[%s1922 + $0x1c] sm:$0xf]
      %v2233 = vld [vmem:[%s1922 + $0x20] sm:$0xf]
      %v2234 = vld [vmem:[%s1922 + $0x24] sm:$0xf]
      %v2235 = vld [vmem:[%s1922 + $0x28] sm:$0xf]
      %v2236 = vld [vmem:[%s1922 + $0x2c] sm:$0xf]
      %v2237 = vld [vmem:[%s1922 + $0x30] sm:$0xf]
      %v2238 = vld [vmem:[%s1922 + $0x34] sm:$0xf]
      %v2239 = vld [vmem:[%s1922 + $0x38] sm:$0xf]
      %v2240 = vld [vmem:[%s1922 + $0x3c] sm:$0xf]
      %v2241 = vld [vmem:[%s1922 + $0x40] sm:$0xf]
      %v2242 = vld [vmem:[%s1922 + $0x44] sm:$0xf]
      %v2243 = vld [vmem:[%s1922 + $0x48] sm:$0xf]
      %v2244 = vld [vmem:[%s1922 + $0x4c] sm:$0xf]
      %v2245 = vld [vmem:[%s1922 + $0x50] sm:$0xf]
      %v2246 = vld [vmem:[%s1922 + $0x54] sm:$0xf]
      %v2247 = vld [vmem:[%s1922 + $0x58] sm:$0xf]
      %v2248 = vld [vmem:[%s1922 + $0x5c] sm:$0xf]
      %s2249 = scalar_lea.vmem %s224, 448
      %v2250 = vld [vmem:[%s2249] sm:$0xf]
      %v2251 = vld [vmem:[%s2249 + $0x4] sm:$0xf]
      %v2252 = vld [vmem:[%s2249 + $0x8] sm:$0xf]
      %v2253 = vld [vmem:[%s2249 + $0xc] sm:$0xf]
      %v2254 = vld [vmem:[%s2249 + $0x10] sm:$0xf]
      %v2255 = vld [vmem:[%s2249 + $0x14] sm:$0xf]
      %v2256 = vld [vmem:[%s2249 + $0x18] sm:$0xf]
      %v2257 = vld [vmem:[%s2249 + $0x1c] sm:$0xf]
      %v2258 = vld [vmem:[%s2249 + $0x20] sm:$0xf]
      %v2259 = vld [vmem:[%s2249 + $0x24] sm:$0xf]
      %v2260 = vld [vmem:[%s2249 + $0x28] sm:$0xf]
      %v2261 = vld [vmem:[%s2249 + $0x2c] sm:$0xf]
      %v2262 = vld [vmem:[%s2249 + $0x30] sm:$0xf]
      %v2263 = vld [vmem:[%s2249 + $0x34] sm:$0xf]
      %v2264 = vld [vmem:[%s2249 + $0x38] sm:$0xf]
      %v2265 = vld [vmem:[%s2249 + $0x3c] sm:$0xf]
      %v2290 = vunpack.c.l.b16 %v2225
      %v2291 = vunpack.c.l.b16 %v2226
      %v2292 = vunpack.c.l.b16 %v2227
      %v2293 = vunpack.c.l.b16 %v2228
      %v2294 = vunpack.c.l.b16 %v2229
      %v2295 = vunpack.c.l.b16 %v2230
      %v2296 = vunpack.c.l.b16 %v2231
      %v2297 = vunpack.c.l.b16 %v2232
      %v2298 = vunpack.c.l.b16 %v2233
      %v2299 = vunpack.c.l.b16 %v2234
      %v2300 = vunpack.c.l.b16 %v2235
      %v2301 = vunpack.c.l.b16 %v2236
      %v2302 = vunpack.c.l.b16 %v2237
      %v2303 = vunpack.c.l.b16 %v2238
      %v2304 = vunpack.c.l.b16 %v2239
      %v2305 = vunpack.c.l.b16 %v2240
      %v2306 = vunpack.c.l.b16 %v2241
      %v2307 = vunpack.c.l.b16 %v2242
      %v2308 = vunpack.c.l.b16 %v2243
      %v2309 = vunpack.c.l.b16 %v2244
      %v2310 = vunpack.c.l.b16 %v2245
      %v2311 = vunpack.c.l.b16 %v2246
      %v2312 = vunpack.c.l.b16 %v2247
      %v2313 = vunpack.c.l.b16 %v2248
      %v2314 = vpack.c.b16 %v2291, %v2290
      %v2315 = vpack.c.b16 %v2293, %v2292
      %v2316 = vpack.c.b16 %v2295, %v2294
      %v2317 = vpack.c.b16 %v2297, %v2296
      %v2318 = vpack.c.b16 %v2299, %v2298
      %v2319 = vpack.c.b16 %v2301, %v2300
      %v2320 = vpack.c.b16 %v2303, %v2302
      %v2321 = vpack.c.b16 %v2305, %v2304
      %v2322 = vpack.c.b16 %v2307, %v2306
      %v2323 = vpack.c.b16 %v2309, %v2308
      %v2324 = vpack.c.b16 %v2311, %v2310
      %v2325 = vpack.c.b16 %v2313, %v2312
      %v2354 = vunpack.c.l.b16 %v2250
      %v2355 = vunpack.c.l.b16 %v2251
      %v2356 = vunpack.c.l.b16 %v2252
      %v2357 = vunpack.c.l.b16 %v2253
      %v2358 = vunpack.c.l.b16 %v2254
      %v2359 = vunpack.c.l.b16 %v2255
      %v2360 = vunpack.c.l.b16 %v2256
      %v2361 = vunpack.c.l.b16 %v2257
      %v2362 = vunpack.c.l.b16 %v2258
      %v2363 = vunpack.c.l.b16 %v2259
      %v2364 = vunpack.c.l.b16 %v2260
      %v2365 = vunpack.c.l.b16 %v2261
      %v2366 = vunpack.c.l.b16 %v2262
      %v2367 = vunpack.c.l.b16 %v2263
      %v2368 = vunpack.c.l.b16 %v2264
      %v2369 = vunpack.c.l.b16 %v2265
      %v2370 = vpack.c.b16 %v2355, %v2354
      %v2371 = vpack.c.b16 %v2357, %v2356
      %v2372 = vpack.c.b16 %v2359, %v2358
      %v2373 = vpack.c.b16 %v2361, %v2360
      %v2374 = vpack.c.b16 %v2363, %v2362
      %v2375 = vpack.c.b16 %v2365, %v2364
      %v2376 = vpack.c.b16 %v2367, %v2366
      %v2377 = vpack.c.b16 %v2369, %v2368
      %2386 = vmatpush.bf16.msra.mxu0 %v2377
      %2387 = vmatpush.bf16.msra.mxu0 %v2376
      %2388 = vmatpush.bf16.msra.mxu0 %v2375
      %2389 = vmatpush.bf16.msra.mxu0 %v2374
      %2390 = vmatpush.bf16.msra.mxu0 %v2373
      %2391 = vmatpush.bf16.msra.mxu0 %v2372
      %2392 = vmatpush.bf16.msra.mxu0 %v2371
      %2393 = vmatpush.bf16.msra.mxu0 %v2370
      %2394 = vmatmul.bf16.gmra.mxu0 %v2314
      %v2395 = vpop.f32.mrf.mxu0
      %v2396 = vadd.f32 0.0, %v2395
      %v2397 = vpop.f32.mrf.mxu0
      %v2398 = vadd.f32 0.0, %v2397
      %2399 = vmatmul.bf16.gmra.mxu0 %v2315
      %v2400 = vpop.f32.mrf.mxu0
      %v2401 = vadd.f32 0.0, %v2400
      %v2402 = vpop.f32.mrf.mxu0
      %v2403 = vadd.f32 0.0, %v2402
      %2404 = vmatmul.bf16.gmra.mxu0 %v2316
      %v2405 = vpop.f32.mrf.mxu0
      %v2406 = vadd.f32 0.0, %v2405
      %v2407 = vpop.f32.mrf.mxu0
      %v2408 = vadd.f32 0.0, %v2407
      %2409 = vmatmul.bf16.gmra.mxu0 %v2317
      %v2410 = vpop.f32.mrf.mxu0
      %v2411 = vadd.f32 0.0, %v2410
      %v2412 = vpop.f32.mrf.mxu0
      %v2413 = vadd.f32 0.0, %v2412
      %2414 = vmatmul.bf16.gmra.mxu0 %v2318
      %v2415 = vpop.f32.mrf.mxu0
      %v2416 = vadd.f32 0.0, %v2415
      %v2417 = vpop.f32.mrf.mxu0
      %v2418 = vadd.f32 0.0, %v2417
      %2419 = vmatmul.bf16.gmra.mxu0 %v2319
      %v2420 = vpop.f32.mrf.mxu0
      %v2421 = vadd.f32 0.0, %v2420
      %v2422 = vpop.f32.mrf.mxu0
      %v2423 = vadd.f32 0.0, %v2422
      %2424 = vmatmul.bf16.gmra.mxu0 %v2320
      %v2425 = vpop.f32.mrf.mxu0
      %v2426 = vadd.f32 0.0, %v2425
      %v2427 = vpop.f32.mrf.mxu0
      %v2428 = vadd.f32 0.0, %v2427
      %2429 = vmatmul.bf16.gmra.mxu0 %v2321
      %v2430 = vpop.f32.mrf.mxu0
      %v2431 = vadd.f32 0.0, %v2430
      %v2432 = vpop.f32.mrf.mxu0
      %v2433 = vadd.f32 0.0, %v2432
      %2434 = vmatmul.bf16.gmra.mxu0 %v2322
      %v2435 = vpop.f32.mrf.mxu0
      %v2436 = vadd.f32 0.0, %v2435
      %v2437 = vpop.f32.mrf.mxu0
      %v2438 = vadd.f32 0.0, %v2437
      %2439 = vmatmul.bf16.gmra.mxu0 %v2323
      %v2440 = vpop.f32.mrf.mxu0
      %v2441 = vadd.f32 0.0, %v2440
      %v2442 = vpop.f32.mrf.mxu0
      %v2443 = vadd.f32 0.0, %v2442
      %2444 = vmatmul.bf16.gmra.mxu0 %v2324
      %v2445 = vpop.f32.mrf.mxu0
      %v2446 = vadd.f32 0.0, %v2445
      %v2447 = vpop.f32.mrf.mxu0
      %v2448 = vadd.f32 0.0, %v2447
      %2449 = vmatmul.bf16.gmra.mxu0 %v2325
      %v2450 = vpop.f32.mrf.mxu0
      %v2451 = vadd.f32 0.0, %v2450
      %v2452 = vpop.f32.mrf.mxu0
      %v2453 = vadd.f32 0.0, %v2452
      %2454 = vdwg.mxu0
      %v2455 = vld [vmem:[%s729] sm:$0xff]
      %v2456 = vld [vmem:[%s729 + $0x8] sm:$0xff]
      %v2457 = vld [vmem:[%s729 + $0x10] sm:$0xff]
      %v2458 = vld [vmem:[%s729 + $0x18] sm:$0xff]
      %v2459 = vld [vmem:[%s729 + $0x20] sm:$0xff]
      %v2460 = vld [vmem:[%s729 + $0x28] sm:$0xff]
      %v2461 = vld [vmem:[%s729 + $0x30] sm:$0xff]
      %v2462 = vld [vmem:[%s729 + $0x38] sm:$0xff]
      %v2463 = vld [vmem:[%s729 + $0x40] sm:$0xff]
      %v2464 = vld [vmem:[%s729 + $0x48] sm:$0xff]
      %v2465 = vld [vmem:[%s729 + $0x50] sm:$0xff]
      %v2466 = vld [vmem:[%s729 + $0x58] sm:$0xff]
      %v2467 = vld [vmem:[%s729 + $0x60] sm:$0xff]
      %v2468 = vld [vmem:[%s729 + $0x68] sm:$0xff]
      %v2469 = vld [vmem:[%s729 + $0x70] sm:$0xff]
      %v2470 = vld [vmem:[%s729 + $0x78] sm:$0xff]
      %v2471 = vld [vmem:[%s729 + $0x80] sm:$0xff]
      %v2472 = vld [vmem:[%s729 + $0x88] sm:$0xff]
      %v2473 = vld [vmem:[%s729 + $0x90] sm:$0xff]
      %v2474 = vld [vmem:[%s729 + $0x98] sm:$0xff]
      %v2475 = vld [vmem:[%s729 + $0xa0] sm:$0xff]
      %v2476 = vld [vmem:[%s729 + $0xa8] sm:$0xff]
      %v2477 = vld [vmem:[%s729 + $0xb0] sm:$0xff]
      %v2478 = vld [vmem:[%s729 + $0xb8] sm:$0xff]
      %v2479 = vadd.f32 %v2455, %v2396
      %v2480 = vadd.f32 %v2456, %v2398
      %v2481 = vadd.f32 %v2457, %v2401
      %v2482 = vadd.f32 %v2458, %v2403
      %v2483 = vadd.f32 %v2459, %v2406
      %v2484 = vadd.f32 %v2460, %v2408
      %v2485 = vadd.f32 %v2461, %v2411
      %v2486 = vadd.f32 %v2462, %v2413
      %v2487 = vadd.f32 %v2463, %v2416
      %v2488 = vadd.f32 %v2464, %v2418
      %v2489 = vadd.f32 %v2465, %v2421
      %v2490 = vadd.f32 %v2466, %v2423
      %v2491 = vadd.f32 %v2467, %v2426
      %v2492 = vadd.f32 %v2468, %v2428
      %v2493 = vadd.f32 %v2469, %v2431
      %v2494 = vadd.f32 %v2470, %v2433
      %v2495 = vadd.f32 %v2471, %v2436
      %v2496 = vadd.f32 %v2472, %v2438
      %v2497 = vadd.f32 %v2473, %v2441
      %v2498 = vadd.f32 %v2474, %v2443
      %v2499 = vadd.f32 %v2475, %v2446
      %v2500 = vadd.f32 %v2476, %v2448
      %v2501 = vadd.f32 %v2477, %v2451
      %v2502 = vadd.f32 %v2478, %v2453
      %2503 = vst [vmem:[%s729] sm:$0xff] %v2479
      %2504 = vst [vmem:[%s729 + $0x8] sm:$0xff] %v2480
      %2505 = vst [vmem:[%s729 + $0x10] sm:$0xff] %v2481
      %2506 = vst [vmem:[%s729 + $0x18] sm:$0xff] %v2482
      %2507 = vst [vmem:[%s729 + $0x20] sm:$0xff] %v2483
      %2508 = vst [vmem:[%s729 + $0x28] sm:$0xff] %v2484
      %2509 = vst [vmem:[%s729 + $0x30] sm:$0xff] %v2485
      %2510 = vst [vmem:[%s729 + $0x38] sm:$0xff] %v2486
      %2511 = vst [vmem:[%s729 + $0x40] sm:$0xff] %v2487
      %2512 = vst [vmem:[%s729 + $0x48] sm:$0xff] %v2488
      %2513 = vst [vmem:[%s729 + $0x50] sm:$0xff] %v2489
      %2514 = vst [vmem:[%s729 + $0x58] sm:$0xff] %v2490
      %2515 = vst [vmem:[%s729 + $0x60] sm:$0xff] %v2491
      %2516 = vst [vmem:[%s729 + $0x68] sm:$0xff] %v2492
      %2517 = vst [vmem:[%s729 + $0x70] sm:$0xff] %v2493
      %2518 = vst [vmem:[%s729 + $0x78] sm:$0xff] %v2494
      %2519 = vst [vmem:[%s729 + $0x80] sm:$0xff] %v2495
      %2520 = vst [vmem:[%s729 + $0x88] sm:$0xff] %v2496
      %2521 = vst [vmem:[%s729 + $0x90] sm:$0xff] %v2497
      %2522 = vst [vmem:[%s729 + $0x98] sm:$0xff] %v2498
      %2523 = vst [vmem:[%s729 + $0xa0] sm:$0xff] %v2499
      %2524 = vst [vmem:[%s729 + $0xa8] sm:$0xff] %v2500
      %2525 = vst [vmem:[%s729 + $0xb0] sm:$0xff] %v2501
      %2526 = vst [vmem:[%s729 + $0xb8] sm:$0xff] %v2502
      %v2527 = vld [vmem:[%s1922] sm:$0xf]
      %v2528 = vld [vmem:[%s1922 + $0x4] sm:$0xf]
      %v2529 = vld [vmem:[%s1922 + $0x8] sm:$0xf]
      %v2530 = vld [vmem:[%s1922 + $0xc] sm:$0xf]
      %v2531 = vld [vmem:[%s1922 + $0x10] sm:$0xf]
      %v2532 = vld [vmem:[%s1922 + $0x14] sm:$0xf]
      %v2533 = vld [vmem:[%s1922 + $0x18] sm:$0xf]
      %v2534 = vld [vmem:[%s1922 + $0x1c] sm:$0xf]
      %v2535 = vld [vmem:[%s1922 + $0x20] sm:$0xf]
      %v2536 = vld [vmem:[%s1922 + $0x24] sm:$0xf]
      %v2537 = vld [vmem:[%s1922 + $0x28] sm:$0xf]
      %v2538 = vld [vmem:[%s1922 + $0x2c] sm:$0xf]
      %v2539 = vld [vmem:[%s1922 + $0x30] sm:$0xf]
      %v2540 = vld [vmem:[%s1922 + $0x34] sm:$0xf]
      %v2541 = vld [vmem:[%s1922 + $0x38] sm:$0xf]
      %v2542 = vld [vmem:[%s1922 + $0x3c] sm:$0xf]
      %v2543 = vld [vmem:[%s1922 + $0x40] sm:$0xf]
      %v2544 = vld [vmem:[%s1922 + $0x44] sm:$0xf]
      %v2545 = vld [vmem:[%s1922 + $0x48] sm:$0xf]
      %v2546 = vld [vmem:[%s1922 + $0x4c] sm:$0xf]
      %v2547 = vld [vmem:[%s1922 + $0x50] sm:$0xf]
      %v2548 = vld [vmem:[%s1922 + $0x54] sm:$0xf]
      %v2549 = vld [vmem:[%s1922 + $0x58] sm:$0xf]
      %v2550 = vld [vmem:[%s1922 + $0x5c] sm:$0xf]
      %s2551 = scalar_lea.vmem %s224, 512
      %v2552 = vld [vmem:[%s2551] sm:$0xf]
      %v2553 = vld [vmem:[%s2551 + $0x4] sm:$0xf]
      %v2554 = vld [vmem:[%s2551 + $0x8] sm:$0xf]
      %v2555 = vld [vmem:[%s2551 + $0xc] sm:$0xf]
      %v2556 = vld [vmem:[%s2551 + $0x10] sm:$0xf]
      %v2557 = vld [vmem:[%s2551 + $0x14] sm:$0xf]
      %v2558 = vld [vmem:[%s2551 + $0x18] sm:$0xf]
      %v2559 = vld [vmem:[%s2551 + $0x1c] sm:$0xf]
      %v2560 = vld [vmem:[%s2551 + $0x20] sm:$0xf]
      %v2561 = vld [vmem:[%s2551 + $0x24] sm:$0xf]
      %v2562 = vld [vmem:[%s2551 + $0x28] sm:$0xf]
      %v2563 = vld [vmem:[%s2551 + $0x2c] sm:$0xf]
      %v2564 = vld [vmem:[%s2551 + $0x30] sm:$0xf]
      %v2565 = vld [vmem:[%s2551 + $0x34] sm:$0xf]
      %v2566 = vld [vmem:[%s2551 + $0x38] sm:$0xf]
      %v2567 = vld [vmem:[%s2551 + $0x3c] sm:$0xf]
      %v2592 = vunpack.c.l.b16 %v2527
      %v2593 = vunpack.c.l.b16 %v2528
      %v2594 = vunpack.c.l.b16 %v2529
      %v2595 = vunpack.c.l.b16 %v2530
      %v2596 = vunpack.c.l.b16 %v2531
      %v2597 = vunpack.c.l.b16 %v2532
      %v2598 = vunpack.c.l.b16 %v2533
      %v2599 = vunpack.c.l.b16 %v2534
      %v2600 = vunpack.c.l.b16 %v2535
      %v2601 = vunpack.c.l.b16 %v2536
      %v2602 = vunpack.c.l.b16 %v2537
      %v2603 = vunpack.c.l.b16 %v2538
      %v2604 = vunpack.c.l.b16 %v2539
      %v2605 = vunpack.c.l.b16 %v2540
      %v2606 = vunpack.c.l.b16 %v2541
      %v2607 = vunpack.c.l.b16 %v2542
      %v2608 = vunpack.c.l.b16 %v2543
      %v2609 = vunpack.c.l.b16 %v2544
      %v2610 = vunpack.c.l.b16 %v2545
      %v2611 = vunpack.c.l.b16 %v2546
      %v2612 = vunpack.c.l.b16 %v2547
      %v2613 = vunpack.c.l.b16 %v2548
      %v2614 = vunpack.c.l.b16 %v2549
      %v2615 = vunpack.c.l.b16 %v2550
      %v2616 = vpack.c.b16 %v2593, %v2592
      %v2617 = vpack.c.b16 %v2595, %v2594
      %v2618 = vpack.c.b16 %v2597, %v2596
      %v2619 = vpack.c.b16 %v2599, %v2598
      %v2620 = vpack.c.b16 %v2601, %v2600
      %v2621 = vpack.c.b16 %v2603, %v2602
      %v2622 = vpack.c.b16 %v2605, %v2604
      %v2623 = vpack.c.b16 %v2607, %v2606
      %v2624 = vpack.c.b16 %v2609, %v2608
      %v2625 = vpack.c.b16 %v2611, %v2610
      %v2626 = vpack.c.b16 %v2613, %v2612
      %v2627 = vpack.c.b16 %v2615, %v2614
      %v2656 = vunpack.c.l.b16 %v2552
      %v2657 = vunpack.c.l.b16 %v2553
      %v2658 = vunpack.c.l.b16 %v2554
      %v2659 = vunpack.c.l.b16 %v2555
      %v2660 = vunpack.c.l.b16 %v2556
      %v2661 = vunpack.c.l.b16 %v2557
      %v2662 = vunpack.c.l.b16 %v2558
      %v2663 = vunpack.c.l.b16 %v2559
      %v2664 = vunpack.c.l.b16 %v2560
      %v2665 = vunpack.c.l.b16 %v2561
      %v2666 = vunpack.c.l.b16 %v2562
      %v2667 = vunpack.c.l.b16 %v2563
      %v2668 = vunpack.c.l.b16 %v2564
      %v2669 = vunpack.c.l.b16 %v2565
      %v2670 = vunpack.c.l.b16 %v2566
      %v2671 = vunpack.c.l.b16 %v2567
      %v2672 = vpack.c.b16 %v2657, %v2656
      %v2673 = vpack.c.b16 %v2659, %v2658
      %v2674 = vpack.c.b16 %v2661, %v2660
      %v2675 = vpack.c.b16 %v2663, %v2662
      %v2676 = vpack.c.b16 %v2665, %v2664
      %v2677 = vpack.c.b16 %v2667, %v2666
      %v2678 = vpack.c.b16 %v2669, %v2668
      %v2679 = vpack.c.b16 %v2671, %v2670
      %2688 = vmatpush.bf16.msra.mxu0 %v2679
      %2689 = vmatpush.bf16.msra.mxu0 %v2678
      %2690 = vmatpush.bf16.msra.mxu0 %v2677
      %2691 = vmatpush.bf16.msra.mxu0 %v2676
      %2692 = vmatpush.bf16.msra.mxu0 %v2675
      %2693 = vmatpush.bf16.msra.mxu0 %v2674
      %2694 = vmatpush.bf16.msra.mxu0 %v2673
      %2695 = vmatpush.bf16.msra.mxu0 %v2672
      %2696 = vmatmul.bf16.gmra.mxu0 %v2616
      %v2697 = vpop.f32.mrf.mxu0
      %v2698 = vadd.f32 0.0, %v2697
      %v2699 = vpop.f32.mrf.mxu0
      %v2700 = vadd.f32 0.0, %v2699
      %2701 = vmatmul.bf16.gmra.mxu0 %v2617
      %v2702 = vpop.f32.mrf.mxu0
      %v2703 = vadd.f32 0.0, %v2702
      %v2704 = vpop.f32.mrf.mxu0
      %v2705 = vadd.f32 0.0, %v2704
      %2706 = vmatmul.bf16.gmra.mxu0 %v2618
      %v2707 = vpop.f32.mrf.mxu0
      %v2708 = vadd.f32 0.0, %v2707
      %v2709 = vpop.f32.mrf.mxu0
      %v2710 = vadd.f32 0.0, %v2709
      %2711 = vmatmul.bf16.gmra.mxu0 %v2619
      %v2712 = vpop.f32.mrf.mxu0
      %v2713 = vadd.f32 0.0, %v2712
      %v2714 = vpop.f32.mrf.mxu0
      %v2715 = vadd.f32 0.0, %v2714
      %2716 = vmatmul.bf16.gmra.mxu0 %v2620
      %v2717 = vpop.f32.mrf.mxu0
      %v2718 = vadd.f32 0.0, %v2717
      %v2719 = vpop.f32.mrf.mxu0
      %v2720 = vadd.f32 0.0, %v2719
      %2721 = vmatmul.bf16.gmra.mxu0 %v2621
      %v2722 = vpop.f32.mrf.mxu0
      %v2723 = vadd.f32 0.0, %v2722
      %v2724 = vpop.f32.mrf.mxu0
      %v2725 = vadd.f32 0.0, %v2724
      %2726 = vmatmul.bf16.gmra.mxu0 %v2622
      %v2727 = vpop.f32.mrf.mxu0
      %v2728 = vadd.f32 0.0, %v2727
      %v2729 = vpop.f32.mrf.mxu0
      %v2730 = vadd.f32 0.0, %v2729
      %2731 = vmatmul.bf16.gmra.mxu0 %v2623
      %v2732 = vpop.f32.mrf.mxu0
      %v2733 = vadd.f32 0.0, %v2732
      %v2734 = vpop.f32.mrf.mxu0
      %v2735 = vadd.f32 0.0, %v2734
      %2736 = vmatmul.bf16.gmra.mxu0 %v2624
      %v2737 = vpop.f32.mrf.mxu0
      %v2738 = vadd.f32 0.0, %v2737
      %v2739 = vpop.f32.mrf.mxu0
      %v2740 = vadd.f32 0.0, %v2739
      %2741 = vmatmul.bf16.gmra.mxu0 %v2625
      %v2742 = vpop.f32.mrf.mxu0
      %v2743 = vadd.f32 0.0, %v2742
      %v2744 = vpop.f32.mrf.mxu0
      %v2745 = vadd.f32 0.0, %v2744
      %2746 = vmatmul.bf16.gmra.mxu0 %v2626
      %v2747 = vpop.f32.mrf.mxu0
      %v2748 = vadd.f32 0.0, %v2747
      %v2749 = vpop.f32.mrf.mxu0
      %v2750 = vadd.f32 0.0, %v2749
      %2751 = vmatmul.bf16.gmra.mxu0 %v2627
      %v2752 = vpop.f32.mrf.mxu0
      %v2753 = vadd.f32 0.0, %v2752
      %v2754 = vpop.f32.mrf.mxu0
      %v2755 = vadd.f32 0.0, %v2754
      %2756 = vdwg.mxu0
      %v2757 = vld [vmem:[%s984] sm:$0xff]
      %v2758 = vld [vmem:[%s984 + $0x8] sm:$0xff]
      %v2759 = vld [vmem:[%s984 + $0x10] sm:$0xff]
      %v2760 = vld [vmem:[%s984 + $0x18] sm:$0xff]
      %v2761 = vld [vmem:[%s984 + $0x20] sm:$0xff]
      %v2762 = vld [vmem:[%s984 + $0x28] sm:$0xff]
      %v2763 = vld [vmem:[%s984 + $0x30] sm:$0xff]
      %v2764 = vld [vmem:[%s984 + $0x38] sm:$0xff]
      %v2765 = vld [vmem:[%s984 + $0x40] sm:$0xff]
      %v2766 = vld [vmem:[%s984 + $0x48] sm:$0xff]
      %v2767 = vld [vmem:[%s984 + $0x50] sm:$0xff]
      %v2768 = vld [vmem:[%s984 + $0x58] sm:$0xff]
      %v2769 = vld [vmem:[%s984 + $0x60] sm:$0xff]
      %v2770 = vld [vmem:[%s984 + $0x68] sm:$0xff]
      %v2771 = vld [vmem:[%s984 + $0x70] sm:$0xff]
      %v2772 = vld [vmem:[%s984 + $0x78] sm:$0xff]
      %v2773 = vld [vmem:[%s984 + $0x80] sm:$0xff]
      %v2774 = vld [vmem:[%s984 + $0x88] sm:$0xff]
      %v2775 = vld [vmem:[%s984 + $0x90] sm:$0xff]
      %v2776 = vld [vmem:[%s984 + $0x98] sm:$0xff]
      %v2777 = vld [vmem:[%s984 + $0xa0] sm:$0xff]
      %v2778 = vld [vmem:[%s984 + $0xa8] sm:$0xff]
      %v2779 = vld [vmem:[%s984 + $0xb0] sm:$0xff]
      %v2780 = vld [vmem:[%s984 + $0xb8] sm:$0xff]
      %v2781 = vadd.f32 %v2757, %v2698
      %v2782 = vadd.f32 %v2758, %v2700
      %v2783 = vadd.f32 %v2759, %v2703
      %v2784 = vadd.f32 %v2760, %v2705
      %v2785 = vadd.f32 %v2761, %v2708
      %v2786 = vadd.f32 %v2762, %v2710
      %v2787 = vadd.f32 %v2763, %v2713
      %v2788 = vadd.f32 %v2764, %v2715
      %v2789 = vadd.f32 %v2765, %v2718
      %v2790 = vadd.f32 %v2766, %v2720
      %v2791 = vadd.f32 %v2767, %v2723
      %v2792 = vadd.f32 %v2768, %v2725
      %v2793 = vadd.f32 %v2769, %v2728
      %v2794 = vadd.f32 %v2770, %v2730
      %v2795 = vadd.f32 %v2771, %v2733
      %v2796 = vadd.f32 %v2772, %v2735
      %v2797 = vadd.f32 %v2773, %v2738
      %v2798 = vadd.f32 %v2774, %v2740
      %v2799 = vadd.f32 %v2775, %v2743
      %v2800 = vadd.f32 %v2776, %v2745
      %v2801 = vadd.f32 %v2777, %v2748
      %v2802 = vadd.f32 %v2778, %v2750
      %v2803 = vadd.f32 %v2779, %v2753
      %v2804 = vadd.f32 %v2780, %v2755
      %2805 = vst [vmem:[%s984] sm:$0xff] %v2781
      %2806 = vst [vmem:[%s984 + $0x8] sm:$0xff] %v2782
      %2807 = vst [vmem:[%s984 + $0x10] sm:$0xff] %v2783
      %2808 = vst [vmem:[%s984 + $0x18] sm:$0xff] %v2784
      %2809 = vst [vmem:[%s984 + $0x20] sm:$0xff] %v2785
      %2810 = vst [vmem:[%s984 + $0x28] sm:$0xff] %v2786
      %2811 = vst [vmem:[%s984 + $0x30] sm:$0xff] %v2787
      %2812 = vst [vmem:[%s984 + $0x38] sm:$0xff] %v2788
      %2813 = vst [vmem:[%s984 + $0x40] sm:$0xff] %v2789
      %2814 = vst [vmem:[%s984 + $0x48] sm:$0xff] %v2790
      %2815 = vst [vmem:[%s984 + $0x50] sm:$0xff] %v2791
      %2816 = vst [vmem:[%s984 + $0x58] sm:$0xff] %v2792
      %2817 = vst [vmem:[%s984 + $0x60] sm:$0xff] %v2793
      %2818 = vst [vmem:[%s984 + $0x68] sm:$0xff] %v2794
      %2819 = vst [vmem:[%s984 + $0x70] sm:$0xff] %v2795
      %2820 = vst [vmem:[%s984 + $0x78] sm:$0xff] %v2796
      %2821 = vst [vmem:[%s984 + $0x80] sm:$0xff] %v2797
      %2822 = vst [vmem:[%s984 + $0x88] sm:$0xff] %v2798
      %2823 = vst [vmem:[%s984 + $0x90] sm:$0xff] %v2799
      %2824 = vst [vmem:[%s984 + $0x98] sm:$0xff] %v2800
      %2825 = vst [vmem:[%s984 + $0xa0] sm:$0xff] %v2801
      %2826 = vst [vmem:[%s984 + $0xa8] sm:$0xff] %v2802
      %2827 = vst [vmem:[%s984 + $0xb0] sm:$0xff] %v2803
      %2828 = vst [vmem:[%s984 + $0xb8] sm:$0xff] %v2804
      %v2829 = vld [vmem:[#allocation2] sm:$0xff]
      %v2830 = vld [vmem:[#allocation2 + $0x8] sm:$0xff]
      %v2831 = vld [vmem:[#allocation2 + $0x18] sm:$0xff]
      %v2832 = vld [vmem:[#allocation2 + $0x20] sm:$0xff]
      %v2833 = vld [vmem:[#allocation2 + $0x30] sm:$0xff]
      %v2834 = vld [vmem:[#allocation2 + $0x38] sm:$0xff]
      %v2835 = vld [vmem:[#allocation2 + $0x48] sm:$0xff]
      %v2836 = vld [vmem:[#allocation2 + $0x50] sm:$0xff]
      %v2837 = vld [vmem:[#allocation2 + $0x60] sm:$0xff]
      %v2838 = vld [vmem:[#allocation2 + $0x68] sm:$0xff]
      %v2839 = vld [vmem:[#allocation2 + $0x78] sm:$0xff]
      %v2840 = vld [vmem:[#allocation2 + $0x80] sm:$0xff]
      %v2841 = vld [vmem:[#allocation2 + $0x90] sm:$0xff]
      %v2842 = vld [vmem:[#allocation2 + $0x98] sm:$0xff]
      %v2843 = vld [vmem:[#allocation2 + $0xa8] sm:$0xff]
      %v2844 = vld [vmem:[#allocation2 + $0xb0] sm:$0xff]
      %v2845 = vld [vmem:[%s729] sm:$0xff]
      %v2846 = vld [vmem:[%s729 + $0x8] sm:$0xff]
      %v2847 = vld [vmem:[%s729 + $0x10] sm:$0xff]
      %v2848 = vld [vmem:[%s729 + $0x18] sm:$0xff]
      %v2849 = vld [vmem:[%s729 + $0x20] sm:$0xff]
      %v2850 = vld [vmem:[%s729 + $0x28] sm:$0xff]
      %v2851 = vld [vmem:[%s729 + $0x30] sm:$0xff]
      %v2852 = vld [vmem:[%s729 + $0x38] sm:$0xff]
      %v2853 = vld [vmem:[%s729 + $0x40] sm:$0xff]
      %v2854 = vld [vmem:[%s729 + $0x48] sm:$0xff]
      %v2855 = vld [vmem:[%s729 + $0x50] sm:$0xff]
      %v2856 = vld [vmem:[%s729 + $0x58] sm:$0xff]
      %v2857 = vld [vmem:[%s729 + $0x60] sm:$0xff]
      %v2858 = vld [vmem:[%s729 + $0x68] sm:$0xff]
      %v2859 = vld [vmem:[%s729 + $0x70] sm:$0xff]
      %v2860 = vld [vmem:[%s729 + $0x78] sm:$0xff]
      %v2861 = vld [vmem:[%s729 + $0x80] sm:$0xff]
      %v2862 = vld [vmem:[%s729 + $0x88] sm:$0xff]
      %v2863 = vld [vmem:[%s729 + $0x90] sm:$0xff]
      %v2864 = vld [vmem:[%s729 + $0x98] sm:$0xff]
      %v2865 = vld [vmem:[%s729 + $0xa0] sm:$0xff]
      %v2866 = vld [vmem:[%s729 + $0xa8] sm:$0xff]
      %v2867 = vld [vmem:[%s729 + $0xb0] sm:$0xff]
      %v2868 = vld [vmem:[%s729 + $0xb8] sm:$0xff]
      %vm2893 = vcmask 1046528
      %v2894 = vrot.slane %v2845, 1
      %v2895 = vrot.slane %v2846, 1
      %v2896 = vsel %vm2893, %v2894, %v2895
      %v2897 = vrot.slane %v2847, 1
      %v2898 = vsel %vm2893, %v2895, %v2897
      %v2899 = vrot.slane %v2848, 1
      %v2900 = vrot.slane %v2849, 1
      %v2901 = vsel %vm2893, %v2899, %v2900
      %v2902 = vrot.slane %v2850, 1
      %v2903 = vsel %vm2893, %v2900, %v2902
      %v2904 = vrot.slane %v2851, 1
      %v2905 = vrot.slane %v2852, 1
      %v2906 = vsel %vm2893, %v2904, %v2905
      %v2907 = vrot.slane %v2853, 1
      %v2908 = vsel %vm2893, %v2905, %v2907
      %v2909 = vrot.slane %v2854, 1
      %v2910 = vrot.slane %v2855, 1
      %v2911 = vsel %vm2893, %v2909, %v2910
      %v2912 = vrot.slane %v2856, 1
      %v2913 = vsel %vm2893, %v2910, %v2912
      %v2914 = vrot.slane %v2857, 1
      %v2915 = vrot.slane %v2858, 1
      %v2916 = vsel %vm2893, %v2914, %v2915
      %v2917 = vrot.slane %v2859, 1
      %v2918 = vsel %vm2893, %v2915, %v2917
      %v2919 = vrot.slane %v2860, 1
      %v2920 = vrot.slane %v2861, 1
      %v2921 = vsel %vm2893, %v2919, %v2920
      %v2922 = vrot.slane %v2862, 1
      %v2923 = vsel %vm2893, %v2920, %v2922
      %v2924 = vrot.slane %v2863, 1
      %v2925 = vrot.slane %v2864, 1
      %v2926 = vsel %vm2893, %v2924, %v2925
      %v2927 = vrot.slane %v2865, 1
      %v2928 = vsel %vm2893, %v2925, %v2927
      %v2929 = vrot.slane %v2866, 1
      %v2930 = vrot.slane %v2867, 1
      %v2931 = vsel %vm2893, %v2929, %v2930
      %v2932 = vrot.slane %v2868, 1
      %v2933 = vsel %vm2893, %v2930, %v2932
      %v2950 = vadd.f32 %v2829, %v2896
      %v2951 = vadd.f32 %v2830, %v2898
      %v2952 = vadd.f32 %v2831, %v2901
      %v2953 = vadd.f32 %v2832, %v2903
      %v2954 = vadd.f32 %v2833, %v2906
      %v2955 = vadd.f32 %v2834, %v2908
      %v2956 = vadd.f32 %v2835, %v2911
      %v2957 = vadd.f32 %v2836, %v2913
      %v2958 = vadd.f32 %v2837, %v2916
      %v2959 = vadd.f32 %v2838, %v2918
      %v2960 = vadd.f32 %v2839, %v2921
      %v2961 = vadd.f32 %v2840, %v2923
      %v2962 = vadd.f32 %v2841, %v2926
      %v2963 = vadd.f32 %v2842, %v2928
      %v2964 = vadd.f32 %v2843, %v2931
      %v2965 = vadd.f32 %v2844, %v2933
      %v2966 = vld [vmem:[%s984] sm:$0xff]
      %v2967 = vld [vmem:[%s984 + $0x8] sm:$0xff]
      %v2968 = vld [vmem:[%s984 + $0x10] sm:$0xff]
      %v2969 = vld [vmem:[%s984 + $0x18] sm:$0xff]
      %v2970 = vld [vmem:[%s984 + $0x20] sm:$0xff]
      %v2971 = vld [vmem:[%s984 + $0x28] sm:$0xff]
      %v2972 = vld [vmem:[%s984 + $0x30] sm:$0xff]
      %v2973 = vld [vmem:[%s984 + $0x38] sm:$0xff]
      %v2974 = vld [vmem:[%s984 + $0x40] sm:$0xff]
      %v2975 = vld [vmem:[%s984 + $0x48] sm:$0xff]
      %v2976 = vld [vmem:[%s984 + $0x50] sm:$0xff]
      %v2977 = vld [vmem:[%s984 + $0x58] sm:$0xff]
      %v2978 = vld [vmem:[%s984 + $0x60] sm:$0xff]
      %v2979 = vld [vmem:[%s984 + $0x68] sm:$0xff]
      %v2980 = vld [vmem:[%s984 + $0x70] sm:$0xff]
      %v2981 = vld [vmem:[%s984 + $0x78] sm:$0xff]
      %v2982 = vld [vmem:[%s984 + $0x80] sm:$0xff]
      %v2983 = vld [vmem:[%s984 + $0x88] sm:$0xff]
      %v2984 = vld [vmem:[%s984 + $0x90] sm:$0xff]
      %v2985 = vld [vmem:[%s984 + $0x98] sm:$0xff]
      %v2986 = vld [vmem:[%s984 + $0xa0] sm:$0xff]
      %v2987 = vld [vmem:[%s984 + $0xa8] sm:$0xff]
      %v2988 = vld [vmem:[%s984 + $0xb0] sm:$0xff]
      %v2989 = vld [vmem:[%s984 + $0xb8] sm:$0xff]
      %vm3014 = vcmask 1045504
      %v3015 = vrot.slane %v2966, 2
      %v3016 = vrot.slane %v2967, 2
      %v3017 = vsel %vm3014, %v3015, %v3016
      %v3018 = vrot.slane %v2968, 2
      %v3019 = vsel %vm3014, %v3016, %v3018
      %v3020 = vrot.slane %v2969, 2
      %v3021 = vrot.slane %v2970, 2
      %v3022 = vsel %vm3014, %v3020, %v3021
      %v3023 = vrot.slane %v2971, 2
      %v3024 = vsel %vm3014, %v3021, %v3023
      %v3025 = vrot.slane %v2972, 2
      %v3026 = vrot.slane %v2973, 2
      %v3027 = vsel %vm3014, %v3025, %v3026
      %v3028 = vrot.slane %v2974, 2
      %v3029 = vsel %vm3014, %v3026, %v3028
      %v3030 = vrot.slane %v2975, 2
      %v3031 = vrot.slane %v2976, 2
      %v3032 = vsel %vm3014, %v3030, %v3031
      %v3033 = vrot.slane %v2977, 2
      %v3034 = vsel %vm3014, %v3031, %v3033
      %v3035 = vrot.slane %v2978, 2
      %v3036 = vrot.slane %v2979, 2
      %v3037 = vsel %vm3014, %v3035, %v3036
      %v3038 = vrot.slane %v2980, 2
      %v3039 = vsel %vm3014, %v3036, %v3038
      %v3040 = vrot.slane %v2981, 2
      %v3041 = vrot.slane %v2982, 2
      %v3042 = vsel %vm3014, %v3040, %v3041
      %v3043 = vrot.slane %v2983, 2
      %v3044 = vsel %vm3014, %v3041, %v3043
      %v3045 = vrot.slane %v2984, 2
      %v3046 = vrot.slane %v2985, 2
      %v3047 = vsel %vm3014, %v3045, %v3046
      %v3048 = vrot.slane %v2986, 2
      %v3049 = vsel %vm3014, %v3046, %v3048
      %v3050 = vrot.slane %v2987, 2
      %v3051 = vrot.slane %v2988, 2
      %v3052 = vsel %vm3014, %v3050, %v3051
      %v3053 = vrot.slane %v2989, 2
      %v3054 = vsel %vm3014, %v3051, %v3053
      %v3071 = vadd.f32 %v2950, %v3017
      %v3072 = vadd.f32 %v2951, %v3019
      %v3073 = vadd.f32 %v2952, %v3022
      %v3074 = vadd.f32 %v2953, %v3024
      %v3075 = vadd.f32 %v2954, %v3027
      %v3076 = vadd.f32 %v2955, %v3029
      %v3077 = vadd.f32 %v2956, %v3032
      %v3078 = vadd.f32 %v2957, %v3034
      %v3079 = vadd.f32 %v2958, %v3037
      %v3080 = vadd.f32 %v2959, %v3039
      %v3081 = vadd.f32 %v2960, %v3042
      %v3082 = vadd.f32 %v2961, %v3044
      %v3083 = vadd.f32 %v2962, %v3047
      %v3084 = vadd.f32 %v2963, %v3049
      %v3085 = vadd.f32 %v2964, %v3052
      %v3086 = vadd.f32 %v2965, %v3054
      %v3087 = vld [vmem:[%s227] sm:$0x1]
      %v3089 = vperm.slane %v3087, 0
      %v3091 = vadd.f32 %v3071, %v3089
      %v3092 = vadd.f32 %v3072, %v3089
      %v3093 = vadd.f32 %v3073, %v3089
      %v3094 = vadd.f32 %v3074, %v3089
      %v3095 = vadd.f32 %v3075, %v3089
      %v3096 = vadd.f32 %v3076, %v3089
      %v3097 = vadd.f32 %v3077, %v3089
      %v3098 = vadd.f32 %v3078, %v3089
      %v3099 = vadd.f32 %v3079, %v3089
      %v3100 = vadd.f32 %v3080, %v3089
      %v3101 = vadd.f32 %v3081, %v3089
      %v3102 = vadd.f32 %v3082, %v3089
      %v3103 = vadd.f32 %v3083, %v3089
      %v3104 = vadd.f32 %v3084, %v3089
      %v3105 = vadd.f32 %v3085, %v3089
      %v3106 = vadd.f32 %v3086, %v3089
      %v3107 = vmax.f32 %v3091, 0.0
      %v3108 = vmax.f32 %v3092, 0.0
      %v3109 = vmax.f32 %v3093, 0.0
      %v3110 = vmax.f32 %v3094, 0.0
      %v3111 = vmax.f32 %v3095, 0.0
      %v3112 = vmax.f32 %v3096, 0.0
      %v3113 = vmax.f32 %v3097, 0.0
      %v3114 = vmax.f32 %v3098, 0.0
      %v3115 = vmax.f32 %v3099, 0.0
      %v3116 = vmax.f32 %v3100, 0.0
      %v3117 = vmax.f32 %v3101, 0.0
      %v3118 = vmax.f32 %v3102, 0.0
      %v3119 = vmax.f32 %v3103, 0.0
      %v3120 = vmax.f32 %v3104, 0.0
      %v3121 = vmax.f32 %v3105, 0.0
      %v3122 = vmax.f32 %v3106, 0.0
      %v3123 = vpack.c.bf16 %v3107, %v3107
      %v3124 = vpack.c.bf16 %v3108, %v3108
      %v3125 = vpack.c.bf16 %v3109, %v3109
      %v3126 = vpack.c.bf16 %v3110, %v3110
      %v3127 = vpack.c.bf16 %v3111, %v3111
      %v3128 = vpack.c.bf16 %v3112, %v3112
      %v3129 = vpack.c.bf16 %v3113, %v3113
      %v3130 = vpack.c.bf16 %v3114, %v3114
      %v3131 = vpack.c.bf16 %v3115, %v3115
      %v3132 = vpack.c.bf16 %v3116, %v3116
      %v3133 = vpack.c.bf16 %v3117, %v3117
      %v3134 = vpack.c.bf16 %v3118, %v3118
      %v3135 = vpack.c.bf16 %v3119, %v3119
      %v3136 = vpack.c.bf16 %v3120, %v3120
      %v3137 = vpack.c.bf16 %v3121, %v3121
      %v3138 = vpack.c.bf16 %v3122, %v3122
      %3139 = vst [vmem:[%s240] sm:$0xf] %v3123
      %3140 = vst [vmem:[%s240 + $0x4] sm:$0xf] %v3124
      %3141 = vst [vmem:[%s240 + $0x8] sm:$0xf] %v3125
      %3142 = vst [vmem:[%s240 + $0xc] sm:$0xf] %v3126
      %3143 = vst [vmem:[%s240 + $0x10] sm:$0xf] %v3127
      %3144 = vst [vmem:[%s240 + $0x14] sm:$0xf] %v3128
      %3145 = vst [vmem:[%s240 + $0x18] sm:$0xf] %v3129
      %3146 = vst [vmem:[%s240 + $0x1c] sm:$0xf] %v3130
      %3147 = vst [vmem:[%s240 + $0x20] sm:$0xf] %v3131
      %3148 = vst [vmem:[%s240 + $0x24] sm:$0xf] %v3132
      %3149 = vst [vmem:[%s240 + $0x28] sm:$0xf] %v3133
      %3150 = vst [vmem:[%s240 + $0x2c] sm:$0xf] %v3134
      %3151 = vst [vmem:[%s240 + $0x30] sm:$0xf] %v3135
      %3152 = vst [vmem:[%s240 + $0x34] sm:$0xf] %v3136
      %3153 = vst [vmem:[%s240 + $0x38] sm:$0xf] %v3137
      %3154 = vst [vmem:[%s240 + $0x3c] sm:$0xf] %v3138
      %s3155 = smul.u32 8, %s20
      %p3156 = scmp.lt.s32.totalorder %s19, 1
      %s3157 = scalar_select %p3156, %s19, 1
      %p3158 = scmp.lt.s32.totalorder %s3155, 15
      %s3159 = scalar_select %p3158, %s3155, 15
      %p3160 = scmp.lt.s32.totalorder %s21, 0
      %s3161 = scalar_select %p3160, %s21, 0
      %s3162 = smul.addr %s3159, 2
      %s3163 = sadd.s32 %s3161, %s3162
      %s3164 = smul.addr %s3157, 32
      %s3165 = sadd.s32 %s3163, %s3164
      %s3166 = smul.addr %s3165, 4
      %s3167 = scalar_lea.vmem %s3, %s3166
      // Predicated region
      $region33: #{bottleneck_forward.4} parent=31 // pred_check
        %p3168 = pneg %p133
      $region34: #{bottleneck_forward.4} parent=31 // pred_check_branch
        %3170 = sbr.rel (%p3168) target = $region36
      $region35: #{bottleneck_forward.4} parent=31 // pred_region
        %s3171 = smul.u32 8, %s20
      $region36: #{bottleneck_forward.4} parent=31 // pred_fallthru
        _
    $region32: #{bottleneck_forward.4} parent=5 // pred_fallthru
      _
    %p3172 = scmp.le.s32.totalorder 2, %s9
    // Predicated region
    $region37: #{bottleneck_forward.4} parent=5 // pred_check
      %p3173 = pneg %p3172
    $region38: #{bottleneck_forward.4} parent=5 // pred_check_branch
      %3175 = sbr.rel (%p3173) target = $region40
    $region39: #{bottleneck_forward.4} parent=5 // pred_region
      %s3176 = ssub.s32 %s9, 2
      // Predicated region
      $region41: #{bottleneck_forward.4} parent=39 // pred_check
        %p3177 = pneg %p139
      $region42: #{bottleneck_forward.4} parent=39 // pred_check_branch
        %3179 = sbr.rel (%p3177) target = $region44
      $region43: #{bottleneck_forward.4} parent=39 // pred_region
        %s3180 = smul.u32 8, %s23
        %p3181 = scmp.lt.s32.totalorder %s22, 1
        %s3182 = scalar_select %p3181, %s22, 1
        %p3183 = scmp.lt.s32.totalorder %s3180, 15
        %s3184 = scalar_select %p3183, %s3180, 15
        %p3185 = scmp.lt.s32.totalorder %s24, 0
        %s3186 = scalar_select %p3185, %s24, 0
        %s3187 = smul.addr %s3184, 2
        %s3188 = sadd.s32 %s3186, %s3187
        %s3189 = smul.addr %s3182, 32
        %s3190 = sadd.s32 %s3188, %s3189
        %s3191 = smul.addr %s3190, 4
        %s3192 = scalar_lea.vmem %s3, %s3191
      $region44: #{bottleneck_forward.4} parent=39 // pred_fallthru
        _
    $region40: #{bottleneck_forward.4} parent=5 // pred_fallthru
      _
  $region6: #{bottleneck_forward.4} parent=0 // loop_footer
    %s13 = sadd.s32 1, %s9
  $region7: #{bottleneck_forward.4} parent=0 // loop_footer_branch
    %8 = sbr.rel target = $region3
  $region8: #{bottleneck_forward.4} parent=0 // loop_exit
    _

</llo_original>
